<compile_context>
chip_gen: v7x
topology: tpu7x:2x2x1
jax: 0.10.0
libtpu: 0.0.40
codegen_flags: <defaults>
</compile_context>

<pallas_src>
import functools

import jax
import jax.numpy as jnp
import numpy as np
from jax import lax
from jax.experimental import pallas as pl
from jax.experimental.pallas import tpu as pltpu

# ---------------- hyperparameters (small, consistent with the module) -------
B = 8          # batch
T = 8          # maxlen (sequence length)
E = 32         # nembdim
H = 32         # nlatent == nhidden
G4 = 4 * H     # packed gate width (128 lanes)
V = 64         # ntokens
VPAD = 128     # ntokens padded to a full lane width for the logits store
NLAYERS = 2    # nlayers
HIDDEN_NOISE_R = 0.0   # -> noise branch disabled, as in `if hidden_noise_r > 0`

_VMEM = pl.BlockSpec(memory_space=pltpu.MemorySpace.VMEM)

# Gate packing order along the lane axis: (i, f, o, g) so sigmoid lanes are
# contiguous [0, 3H) and tanh lanes are [3H, 4H).  Storage order is (i, f, g, o).
_PACK_ORDER = (0, 1, 3, 2)


# ---------------- fused forward kernel ---------------------------------------
def _fused_forward_kernel(ids_ref, len_ref,
                          tab_enc_ref, tab_dec_ref,
                          e0_whh, e0_b,
                          e1_wih, e1_whh, e1_b,
                          d0_wih_h, d0_whh, d0_b,
                          d1_wih, d1_whh, d1_b,
                          h2t_w_ref, h2t_b_ref,
                          logits_ref, hidden_ref,
                          xg_scr, hseq_scr):
    """Whole LSTM_AAE forward on VMEM-resident data.

    ids_ref    : (T*B, 1) int32   token ids, time-major flattened
    len_ref    : (B, 1)  int32    valid lengths
    tab_*      : (V, 4H)          emb @ W_ih (layer-0 projection tables)
    *_wih      : (F, 4H)          lane-packed input weights (i, f, o, g)
    *_whh      : (H, 4H)          lane-packed recurrent weights
    *_b        : (1, 4H)          lane-packed combined bias (b_ih + b_hh)
    h2t_w_ref  : (H, VPAD)        hidden2token weight, zero-padded to 128 lanes
    h2t_b_ref  : (1, VPAD)        hidden2token bias, zero-padded
    logits_ref : (T*B, VPAD)      output logits (time-major, lane-dense)
    hidden_ref : (B, H)           normalized latent
    xg_scr     : (T*B, 4H)        packed input projections for current layer
    hseq_scr   : (T*B, H)         current layer's output sequence
    """
    TB = T * B
    f32 = jnp.float32
    lens = len_ref[...]                                     # (B,1), read once

    # Hoisted per-timestep validity masks, shared by all four layers.
    lens_bh = jnp.broadcast_to(lens, (B, H))                # one lane broadcast
    valid = [t < lens_bh for t in range(T)]                 # T boolean (B,H)
    zero_bh = jnp.zeros((B, H), f32)

    # One-hot ids (TB, V); the embedding lookup itself is folded into the
    # layer-0 tables (onehot @ (emb @ W_ih)) computed in prepare_params.
    onehot = (ids_ref[...] ==
              lax.broadcasted_iota(jnp.int32, (TB, V), 1)).astype(f32)

    def run_layer(whh_ref, store_seq):
        whh = whh_ref[...]                                  # (H, 4H): 4 vregs
        h = jnp.zeros((B, H), f32)
        c = jnp.zeros((B, H), f32)
        # T is small & static: fully unrolled straight-line recurrence with
        # static sublane-aligned offsets; h/c stay in vregs as carried values.
        for t in range(T):
            row = pl.ds(t * B, B)
            # One lane-dense load + one (8,32)@(32,128) MXU matmul per step.
            z = xg_scr[row, :] + jnp.dot(h, whh, preferred_element_type=f32)
            s = jax.nn.sigmoid(z)                           # full-width EUP pass
            i = s[:, 0:H]                                   # lane slices (XLU)
            f = s[:, H:2 * H]
            o = s[:, 2 * H:3 * H]
            g = jnp.tanh(z[:, 3 * H:4 * H])                 # quarter-width tanh
            c_new = f * c + i * g
            h_new = o * jnp.tanh(c_new)
            v = valid[t]
            if store_seq:
                hseq_scr[row, :] = jnp.where(v, h_new, zero_bh)
            h = jnp.where(v, h_new, h)                      # freeze at padding
            c = jnp.where(v, c_new, c)
        return h

    # ---------------- encoder stack ----------------
    xg_scr[...] = (jnp.dot(onehot, tab_enc_ref[...],
                           preferred_element_type=f32) + e0_b[...])
    run_layer(e0_whh, store_seq=True)
    xg_scr[...] = (jnp.dot(hseq_scr[...], e1_wih[...],
                           preferred_element_type=f32) + e1_b[...])
    h_last = run_layer(e1_whh, store_seq=False)             # only hlast needed

    # ---------------- latent: L2 normalize (EUP rsqrt, with eps) -----------
    ss = jnp.sum(h_last * h_last, axis=-1, keepdims=True)
    hidden = h_last * lax.rsqrt(jnp.maximum(ss, 1e-12))
    hidden_ref[...] = hidden
    # hidden_noise_r == 0.0 -> noise branch skipped (matches PyTorch `if`).

    # ---------------- decoder stack ----------------
    # Layer-0 input is concat([emb_dec, hidden]); the hidden part is constant
    # over time, so its projection is folded into xg BEFORE the time loop.
    hid_term = jnp.dot(hidden, d0_wih_h[...],
                       preferred_element_type=f32)          # (B, 4H)
    xg_scr[...] = (jnp.dot(onehot, tab_dec_ref[...],
                           preferred_element_type=f32)
                   + d0_b[...]
                   + jnp.concatenate([hid_term] * T, axis=0))
    run_layer(d0_whh, store_seq=True)
    xg_scr[...] = (jnp.dot(hseq_scr[...], d1_wih[...],
                           preferred_element_type=f32) + d1_b[...])
    run_layer(d1_whh, store_seq=True)

    # ---------------- hidden2token (lane-dense: V padded to 128) -----------
    logits_ref[...] = (jnp.dot(hseq_scr[...], h2t_w_ref[...],
                               preferred_element_type=f32) + h2t_b_ref[...])


# ---------------- parameter init (deterministic, uniform(-0.1, 0.1)) --------
def init_params(key):
    initrange = 0.1

    def unif(k, shape):
        return jax.random.uniform(k, shape, jnp.float32, -initrange, initrange)

    keys = iter(jax.random.split(key, 64))
    params = {}
    params["emb_enc"] = unif(next(keys), (V, E))
    params["emb_dec"] = unif(next(keys), (V, E))

    def lstm_params(in0):
        layers = []
        for l in range(NLAYERS):
            in_dim = in0 if l == 0 else H
            w_ih = unif(next(keys), (4, in_dim, H))          # gate order i,f,g,o
            w_hh = unif(next(keys), (4, H, H))
            b = unif(next(keys), (4, 1, H)) + unif(next(keys), (4, 1, H))
            layers.append((w_ih, w_hh, b))                   # b = b_ih + b_hh
        return layers

    params["enc"] = lstm_params(E)
    params["dec"] = lstm_params(E + H)
    params["h2t_w"] = unif(next(keys), (H, V))
    params["h2t_b"] = jnp.zeros((V,), jnp.float32)           # bias fill_(0)
    return params


# ---------------- one-time repacking into the kernel layout ------------------
def _pack_w(w4):   # (4, F, H) -> (F, 4H), lane order i, f, o, g
    return jnp.concatenate([w4[g] for g in _PACK_ORDER], axis=-1)


def _pack_b(b4):   # (4, 1, H) -> (1, 4H)
    return jnp.concatenate([b4[g] for g in _PACK_ORDER], axis=-1)


def prepare_params(params):
    """Done ONCE, outside the per-call jit: gate packing, embedding-fold tables,
    d0_wih split, hidden2token lane padding."""
    hp = lax.Precision.HIGHEST
    (e0_wih, e0_whh, e0_b), (e1_wih, e1_whh, e1_b) = params["enc"]
    (d0_wih, d0_whh, d0_b), (d1_wih, d1_whh, d1_b) = params["dec"]

    # Fold embedding lookup into the layer-0 input projection (exact row-pick).
    tab_enc = jnp.dot(params["emb_enc"], _pack_w(e0_wih), precision=hp)      # (V,4H)
    tab_dec = jnp.dot(params["emb_dec"], _pack_w(d0_wih[:, :E, :]),
                      precision=hp)                                          # (V,4H)
    d0_wih_h = _pack_w(d0_wih[:, E:, :])   # acts on the time-invariant latent

    h2t_w = jnp.zeros((H, VPAD), jnp.float32).at[:, :V].set(params["h2t_w"])
    h2t_b = jnp.zeros((1, VPAD), jnp.float32).at[:, :V].set(
        params["h2t_b"].reshape(1, V))

    packed = (tab_enc, tab_dec,
              _pack_w(e0_whh), _pack_b(e0_b),
              _pack_w(e1_wih), _pack_w(e1_whh), _pack_b(e1_b),
              d0_wih_h, _pack_w(d0_whh), _pack_b(d0_b),
              _pack_w(d1_wih), _pack_w(d1_whh), _pack_b(d1_b),
              h2t_w, h2t_b)
    return jax.tree_util.tree_map(jax.device_put, packed)


# ---------------- forward pass (single fused pallas_call) --------------------
@functools.partial(jax.jit, static_argnames=("encode_only",))
def lstm_aae_forward(packed, input_ids, lengths, encode_only=False):
    """input_ids: (B, T) int32; lengths: (B,) int32. Returns (B, T, V) logits
    (or the (B, H) normalized latent if encode_only)."""
    b, t = input_ids.shape
    assert (b, t) == (B, T)
    ids_tm = jnp.transpose(input_ids).reshape(t * b, 1).astype(jnp.int32)
    lens = lengths.astype(jnp.int32).reshape(b, 1)
    args = (ids_tm, lens) + tuple(packed)

    logits_tm, hidden = pl.pallas_call(
        _fused_forward_kernel,
        out_shape=(jax.ShapeDtypeStruct((t * b, VPAD), jnp.float32),
                   jax.ShapeDtypeStruct((b, H), jnp.float32)),
        in_specs=[_VMEM] * len(args),
        out_specs=(_VMEM, _VMEM),
        scratch_shapes=[pltpu.VMEM((t * b, G4), jnp.float32),   # xg_scr
                        pltpu.VMEM((t * b, H), jnp.float32)],   # hseq_scr
    )(*args)

    if encode_only:
        return hidden
    # Consumer-facing (B, T, V) view; if the consumer accepts time-major/VPAD,
    # return logits_tm directly and skip this transpose/slice.
    logits = jnp.transpose(logits_tm.reshape(t, b, VPAD), (1, 0, 2))[:, :, :V]
    return logits


# ---------------- pure-JAX reference (for correctness check) ----------------
_HP = jax.lax.Precision.HIGHEST


def _ref_lstm_layer(x_btf, w_ih, w_hh, bias, lengths):
    b, t, _ = x_btf.shape
    x_tbf = jnp.transpose(x_btf, (1, 0, 2))

    def step(carry, inp):
        h, c = carry
        xt, tt = inp
        gs = [jnp.dot(xt, w_ih[k], precision=_HP) + bias[k]
              + jnp.dot(h, w_hh[k], precision=_HP) for k in range(4)]
        i = jax.nn.sigmoid(gs[0])
        f = jax.nn.sigmoid(gs[1])
        g = jnp.tanh(gs[2])
        o = jax.nn.sigmoid(gs[3])
        c_new = f * c + i * g
        h_new = o * jnp.tanh(c_new)
        valid = (tt < lengths)[:, None]
        return ((jnp.where(valid, h_new, h), jnp.where(valid, c_new, c)),
                jnp.where(valid, h_new, 0.0))

    (h_last, _), hseq = lax.scan(
        step,
        (jnp.zeros((b, H), jnp.float32), jnp.zeros((b, H), jnp.float32)),
        (x_tbf, jnp.arange(t, dtype=jnp.int32)))
    return hseq, h_last


def ref_forward(params, input_ids, lengths):
    b, t = input_ids.shape
    x = jnp.take(params["emb_enc"], input_ids, axis=0)
    for (w_ih, w_hh, bias) in params["enc"]:
        hseq, h_last = _ref_lstm_layer(x, w_ih, w_hh, bias, lengths)
        x = jnp.transpose(hseq, (1, 0, 2))
    hidden = h_last / jnp.linalg.norm(h_last, axis=1, keepdims=True)
    aug = jnp.concatenate(
        [jnp.take(params["emb_dec"], input_ids, axis=0),
         jnp.broadcast_to(hidden[:, None, :], (b, t, H))], axis=2)
    x = aug
    for (w_ih, w_hh, bias) in params["dec"]:
        hseq, _ = _ref_lstm_layer(x, w_ih, w_hh, bias, lengths)
        x = jnp.transpose(hseq, (1, 0, 2))
    logits = (jnp.dot(x.reshape(b * t, H), params["h2t_w"], precision=_HP)
              + params["h2t_b"])
    return logits.reshape(b, t, V)


# ---------------- main -------------------------------------------------------
if __name__ == "__main__":
    key = jax.random.PRNGKey(0)
    kp, kx = jax.random.split(key)
    params = init_params(kp)
    packed = prepare_params(params)        # one-time repack, off the call path

    input_ids = jax.random.randint(kx, (B, T), 0, V, dtype=jnp.int32)
    # pack_padded_sequence requires descending lengths; max length == maxlen.
    lengths = jnp.array([8, 8, 7, 6, 5, 4, 3, 2], dtype=jnp.int32)

    out = lstm_aae_forward(packed, input_ids, lengths)
    out = jax.block_until_ready(out)
    assert out.shape == (B, T, V)

    ref = jax.block_until_ready(ref_forward(params, input_ids, lengths))
    np.testing.assert_allclose(np.asarray(out), np.asarray(ref),
                               rtol=1e-4, atol=1e-4)

    print("KERNEL_OK")
</pallas_src>

<mosaic_0001>
module attributes {stable_mosaic.version = 11 : i64} {
  func.func @_fused_forward_kernel(%arg0: memref<64x1xi32, #tpu.memory_space<vmem>>, %arg1: memref<8x1xi32, #tpu.memory_space<vmem>>, %arg2: memref<64x128xf32, #tpu.memory_space<vmem>>, %arg3: memref<64x128xf32, #tpu.memory_space<vmem>>, %arg4: memref<32x128xf32, #tpu.memory_space<vmem>>, %arg5: memref<1x128xf32, #tpu.memory_space<vmem>>, %arg6: memref<32x128xf32, #tpu.memory_space<vmem>>, %arg7: memref<32x128xf32, #tpu.memory_space<vmem>>, %arg8: memref<1x128xf32, #tpu.memory_space<vmem>>, %arg9: memref<32x128xf32, #tpu.memory_space<vmem>>, %arg10: memref<32x128xf32, #tpu.memory_space<vmem>>, %arg11: memref<1x128xf32, #tpu.memory_space<vmem>>, %arg12: memref<32x128xf32, #tpu.memory_space<vmem>>, %arg13: memref<32x128xf32, #tpu.memory_space<vmem>>, %arg14: memref<1x128xf32, #tpu.memory_space<vmem>>, %arg15: memref<32x128xf32, #tpu.memory_space<vmem>>, %arg16: memref<1x128xf32, #tpu.memory_space<vmem>>, %arg17: memref<64x128xf32, #tpu.memory_space<vmem>>, %arg18: memref<8x32xf32, #tpu.memory_space<vmem>>, %arg19: memref<64x128xf32, #tpu.memory_space<vmem>>, %arg20: memref<64x32xf32, #tpu.memory_space<vmem>>) attributes {dimension_semantics = [], scalar_prefetch = 0 : i64, scratch_operands = 2 : i64, tpu.core_type = #tpu.core_type<tc>} {
    %c0 = arith.constant 0 : index
    %c0_0 = arith.constant 0 : index
    %0 = vector.load %arg1[%c0, %c0_0] : memref<8x1xi32, #tpu.memory_space<vmem>>, vector<8x1xi32>
    %1 = vector.shape_cast %0 : vector<8x1xi32> to vector<8x1xi32>
    %2 = vector.broadcast %1 : vector<8x1xi32> to vector<8x32xi32>
    %c0_i32 = arith.constant 0 : i32
    %3 = vector.broadcast %c0_i32 : i32 to vector<8x32xi32>
    %4 = arith.cmpi sgt, %2, %3 : vector<8x32xi32>
    %c1_i32 = arith.constant 1 : i32
    %5 = vector.broadcast %c1_i32 : i32 to vector<8x32xi32>
    %6 = arith.cmpi sgt, %2, %5 : vector<8x32xi32>
    %c2_i32 = arith.constant 2 : i32
    %7 = vector.broadcast %c2_i32 : i32 to vector<8x32xi32>
    %8 = arith.cmpi sgt, %2, %7 : vector<8x32xi32>
    %c3_i32 = arith.constant 3 : i32
    %9 = vector.broadcast %c3_i32 : i32 to vector<8x32xi32>
    %10 = arith.cmpi sgt, %2, %9 : vector<8x32xi32>
    %c4_i32 = arith.constant 4 : i32
    %11 = vector.broadcast %c4_i32 : i32 to vector<8x32xi32>
    %12 = arith.cmpi sgt, %2, %11 : vector<8x32xi32>
    %c5_i32 = arith.constant 5 : i32
    %13 = vector.broadcast %c5_i32 : i32 to vector<8x32xi32>
    %14 = arith.cmpi sgt, %2, %13 : vector<8x32xi32>
    %c6_i32 = arith.constant 6 : i32
    %15 = vector.broadcast %c6_i32 : i32 to vector<8x32xi32>
    %16 = arith.cmpi sgt, %2, %15 : vector<8x32xi32>
    %c7_i32 = arith.constant 7 : i32
    %17 = vector.broadcast %c7_i32 : i32 to vector<8x32xi32>
    %18 = arith.cmpi sgt, %2, %17 : vector<8x32xi32>
    %cst = arith.constant 0.000000e+00 : f32
    %19 = vector.broadcast %cst : f32 to vector<8x32xf32>
    %c0_1 = arith.constant 0 : index
    %c0_2 = arith.constant 0 : index
    %20 = vector.load %arg0[%c0_1, %c0_2] : memref<64x1xi32, #tpu.memory_space<vmem>>, vector<64x1xi32>
    %21 = tpu.iota {dimensions = array<i32: 1>} : vector<64x64xi32>
    %22 = vector.broadcast %20 : vector<64x1xi32> to vector<64x64xi32>
    %23 = arith.cmpi eq, %22, %21 : vector<64x64xi32>
    %24 = arith.extui %23 : vector<64x64xi1> to vector<64x64xi32>
    %25 = arith.sitofp %24 : vector<64x64xi32> to vector<64x64xf32>
    %c0_3 = arith.constant 0 : index
    %c0_4 = arith.constant 0 : index
    %26 = vector.load %arg2[%c0_3, %c0_4] : memref<64x128xf32, #tpu.memory_space<vmem>>, vector<64x128xf32>
    %cst_5 = arith.constant dense<0.000000e+00> : vector<64x128xf32>
    %27 = tpu.matmul %25, %26, %cst_5 {dimension_numbers = #tpu.dot_dimension_numbers<[1], [0], [0], [1], [0, 0, 1, 1], [], []>} : vector<64x64xf32>, vector<64x128xf32>, vector<64x128xf32> -> vector<64x128xf32>
    %c0_6 = arith.constant 0 : index
    %c0_7 = arith.constant 0 : index
    %28 = vector.load %arg5[%c0_6, %c0_7] : memref<1x128xf32, #tpu.memory_space<vmem>>, vector<1x128xf32>
    %29 = vector.broadcast %28 : vector<1x128xf32> to vector<64x128xf32>
    %30 = arith.addf %27, %29 : vector<64x128xf32>
    %c0_8 = arith.constant 0 : index
    %c0_9 = arith.constant 0 : index
    %31 = vector.load %arg19[%c0_8, %c0_9] : memref<64x128xf32, #tpu.memory_space<vmem>>, vector<64x128xf32>
    tpu.vector_store %arg19[%c0_8, %c0_9], %30 {strides = array<i32>} : memref<64x128xf32, #tpu.memory_space<vmem>>, vector<64x128xf32>,
    %c0_10 = arith.constant 0 : index
    %c0_11 = arith.constant 0 : index
    %32 = vector.load %arg4[%c0_10, %c0_11] : memref<32x128xf32, #tpu.memory_space<vmem>>, vector<32x128xf32>
    %cst_12 = arith.constant 0.000000e+00 : f32
    %33 = vector.broadcast %cst_12 : f32 to vector<8x32xf32>
    %cst_13 = arith.constant 0.000000e+00 : f32
    %34 = vector.broadcast %cst_13 : f32 to vector<8x32xf32>
    %c0_14 = arith.constant 0 : index
    %c0_15 = arith.constant 0 : index
    %35 = vector.load %arg19[%c0_14, %c0_15] : memref<64x128xf32, #tpu.memory_space<vmem>>, vector<8x128xf32>
    %cst_16 = arith.constant dense<0.000000e+00> : vector<8x128xf32>
    %36 = tpu.matmul %33, %32, %cst_16 {dimension_numbers = #tpu.dot_dimension_numbers<[1], [0], [0], [1], [0, 0, 1, 1], [], []>} : vector<8x32xf32>, vector<32x128xf32>, vector<8x128xf32> -> vector<8x128xf32>
    %37 = arith.addf %35, %36 : vector<8x128xf32>
    %38 = arith.negf %37 : vector<8x128xf32>
    %39 = math.exp %38 : vector<8x128xf32>
    %cst_17 = arith.constant 1.000000e+00 : f32
    %40 = vector.broadcast %cst_17 : f32 to vector<8x128xf32>
    %41 = arith.addf %40, %39 : vector<8x128xf32>
    %42 = arith.divf %40, %41 : vector<8x128xf32>
    %43 = vector.extract_strided_slice %42 {offsets = [0, 0], sizes = [8, 32], strides = [1, 1]} : vector<8x128xf32> to vector<8x32xf32>
    %44 = vector.extract_strided_slice %42 {offsets = [0, 32], sizes = [8, 32], strides = [1, 1]} : vector<8x128xf32> to vector<8x32xf32>
    %45 = vector.extract_strided_slice %42 {offsets = [0, 64], sizes = [8, 32], strides = [1, 1]} : vector<8x128xf32> to vector<8x32xf32>
    %46 = vector.extract_strided_slice %37 {offsets = [0, 96], sizes = [8, 32], strides = [1, 1]} : vector<8x128xf32> to vector<8x32xf32>
    %47 = math.tanh %46 : vector<8x32xf32>
    %48 = arith.mulf %44, %34 : vector<8x32xf32>
    %49 = arith.mulf %43, %47 : vector<8x32xf32>
    %50 = arith.addf %48, %49 : vector<8x32xf32>
    %51 = math.tanh %50 : vector<8x32xf32>
    %52 = arith.mulf %45, %51 : vector<8x32xf32>
    %53 = arith.select %4, %52, %19 : vector<8x32xi1>, vector<8x32xf32>
    %c0_18 = arith.constant 0 : index
    %c0_19 = arith.constant 0 : index
    %54 = vector.load %arg20[%c0_18, %c0_19] : memref<64x32xf32, #tpu.memory_space<vmem>>, vector<8x32xf32>
    tpu.vector_store %arg20[%c0_18, %c0_19], %53 {strides = array<i32>} : memref<64x32xf32, #tpu.memory_space<vmem>>, vector<8x32xf32>,
    %55 = arith.select %4, %52, %33 : vector<8x32xi1>, vector<8x32xf32>
    %56 = arith.select %4, %50, %34 : vector<8x32xi1>, vector<8x32xf32>
    %c8 = arith.constant 8 : index
    %c0_20 = arith.constant 0 : index
    %57 = vector.load %arg19[%c8, %c0_20] : memref<64x128xf32, #tpu.memory_space<vmem>>, vector<8x128xf32>
    %cst_21 = arith.constant dense<0.000000e+00> : vector<8x128xf32>
    %58 = tpu.matmul %55, %32, %cst_21 {dimension_numbers = #tpu.dot_dimension_numbers<[1], [0], [0], [1], [0, 0, 1, 1], [], []>} : vector<8x32xf32>, vector<32x128xf32>, vector<8x128xf32> -> vector<8x128xf32>
    %59 = arith.addf %57, %58 : vector<8x128xf32>
    %60 = arith.negf %59 : vector<8x128xf32>
    %61 = math.exp %60 : vector<8x128xf32>
    %cst_22 = arith.constant 1.000000e+00 : f32
    %62 = vector.broadcast %cst_22 : f32 to vector<8x128xf32>
    %63 = arith.addf %62, %61 : vector<8x128xf32>
    %64 = arith.divf %62, %63 : vector<8x128xf32>
    %65 = vector.extract_strided_slice %64 {offsets = [0, 0], sizes = [8, 32], strides = [1, 1]} : vector<8x128xf32> to vector<8x32xf32>
    %66 = vector.extract_strided_slice %64 {offsets = [0, 32], sizes = [8, 32], strides = [1, 1]} : vector<8x128xf32> to vector<8x32xf32>
    %67 = vector.extract_strided_slice %64 {offsets = [0, 64], sizes = [8, 32], strides = [1, 1]} : vector<8x128xf32> to vector<8x32xf32>
    %68 = vector.extract_strided_slice %59 {offsets = [0, 96], sizes = [8, 32], strides = [1, 1]} : vector<8x128xf32> to vector<8x32xf32>
    %69 = math.tanh %68 : vector<8x32xf32>
    %70 = arith.mulf %66, %56 : vector<8x32xf32>
    %71 = arith.mulf %65, %69 : vector<8x32xf32>
    %72 = arith.addf %70, %71 : vector<8x32xf32>
    %73 = math.tanh %72 : vector<8x32xf32>
    %74 = arith.mulf %67, %73 : vector<8x32xf32>
    %75 = arith.select %6, %74, %19 : vector<8x32xi1>, vector<8x32xf32>
    %c8_23 = arith.constant 8 : index
    %c0_24 = arith.constant 0 : index
    %76 = vector.load %arg20[%c8_23, %c0_24] : memref<64x32xf32, #tpu.memory_space<vmem>>, vector<8x32xf32>
    tpu.vector_store %arg20[%c8_23, %c0_24], %75 {strides = array<i32>} : memref<64x32xf32, #tpu.memory_space<vmem>>, vector<8x32xf32>,
    %77 = arith.select %6, %74, %55 : vector<8x32xi1>, vector<8x32xf32>
    %78 = arith.select %6, %72, %56 : vector<8x32xi1>, vector<8x32xf32>
    %c16 = arith.constant 16 : index
    %c0_25 = arith.constant 0 : index
    %79 = vector.load %arg19[%c16, %c0_25] : memref<64x128xf32, #tpu.memory_space<vmem>>, vector<8x128xf32>
    %cst_26 = arith.constant dense<0.000000e+00> : vector<8x128xf32>
    %80 = tpu.matmul %77, %32, %cst_26 {dimension_numbers = #tpu.dot_dimension_numbers<[1], [0], [0], [1], [0, 0, 1, 1], [], []>} : vector<8x32xf32>, vector<32x128xf32>, vector<8x128xf32> -> vector<8x128xf32>
    %81 = arith.addf %79, %80 : vector<8x128xf32>
    %82 = arith.negf %81 : vector<8x128xf32>
    %83 = math.exp %82 : vector<8x128xf32>
    %cst_27 = arith.constant 1.000000e+00 : f32
    %84 = vector.broadcast %cst_27 : f32 to vector<8x128xf32>
    %85 = arith.addf %84, %83 : vector<8x128xf32>
    %86 = arith.divf %84, %85 : vector<8x128xf32>
    %87 = vector.extract_strided_slice %86 {offsets = [0, 0], sizes = [8, 32], strides = [1, 1]} : vector<8x128xf32> to vector<8x32xf32>
    %88 = vector.extract_strided_slice %86 {offsets = [0, 32], sizes = [8, 32], strides = [1, 1]} : vector<8x128xf32> to vector<8x32xf32>
    %89 = vector.extract_strided_slice %86 {offsets = [0, 64], sizes = [8, 32], strides = [1, 1]} : vector<8x128xf32> to vector<8x32xf32>
    %90 = vector.extract_strided_slice %81 {offsets = [0, 96], sizes = [8, 32], strides = [1, 1]} : vector<8x128xf32> to vector<8x32xf32>
    %91 = math.tanh %90 : vector<8x32xf32>
    %92 = arith.mulf %88, %78 : vector<8x32xf32>
    %93 = arith.mulf %87, %91 : vector<8x32xf32>
    %94 = arith.addf %92, %93 : vector<8x32xf32>
    %95 = math.tanh %94 : vector<8x32xf32>
    %96 = arith.mulf %89, %95 : vector<8x32xf32>
    %97 = arith.select %8, %96, %19 : vector<8x32xi1>, vector<8x32xf32>
    %c16_28 = arith.constant 16 : index
    %c0_29 = arith.constant 0 : index
    %98 = vector.load %arg20[%c16_28, %c0_29] : memref<64x32xf32, #tpu.memory_space<vmem>>, vector<8x32xf32>
    tpu.vector_store %arg20[%c16_28, %c0_29], %97 {strides = array<i32>} : memref<64x32xf32, #tpu.memory_space<vmem>>, vector<8x32xf32>,
    %99 = arith.select %8, %96, %77 : vector<8x32xi1>, vector<8x32xf32>
    %100 = arith.select %8, %94, %78 : vector<8x32xi1>, vector<8x32xf32>
    %c24 = arith.constant 24 : index
    %c0_30 = arith.constant 0 : index
    %101 = vector.load %arg19[%c24, %c0_30] : memref<64x128xf32, #tpu.memory_space<vmem>>, vector<8x128xf32>
    %cst_31 = arith.constant dense<0.000000e+00> : vector<8x128xf32>
    %102 = tpu.matmul %99, %32, %cst_31 {dimension_numbers = #tpu.dot_dimension_numbers<[1], [0], [0], [1], [0, 0, 1, 1], [], []>} : vector<8x32xf32>, vector<32x128xf32>, vector<8x128xf32> -> vector<8x128xf32>
    %103 = arith.addf %101, %102 : vector<8x128xf32>
    %104 = arith.negf %103 : vector<8x128xf32>
    %105 = math.exp %104 : vector<8x128xf32>
    %cst_32 = arith.constant 1.000000e+00 : f32
    %106 = vector.broadcast %cst_32 : f32 to vector<8x128xf32>
    %107 = arith.addf %106, %105 : vector<8x128xf32>
    %108 = arith.divf %106, %107 : vector<8x128xf32>
    %109 = vector.extract_strided_slice %108 {offsets = [0, 0], sizes = [8, 32], strides = [1, 1]} : vector<8x128xf32> to vector<8x32xf32>
    %110 = vector.extract_strided_slice %108 {offsets = [0, 32], sizes = [8, 32], strides = [1, 1]} : vector<8x128xf32> to vector<8x32xf32>
    %111 = vector.extract_strided_slice %108 {offsets = [0, 64], sizes = [8, 32], strides = [1, 1]} : vector<8x128xf32> to vector<8x32xf32>
    %112 = vector.extract_strided_slice %103 {offsets = [0, 96], sizes = [8, 32], strides = [1, 1]} : vector<8x128xf32> to vector<8x32xf32>
    %113 = math.tanh %112 : vector<8x32xf32>
    %114 = arith.mulf %110, %100 : vector<8x32xf32>
    %115 = arith.mulf %109, %113 : vector<8x32xf32>
    %116 = arith.addf %114, %115 : vector<8x32xf32>
    %117 = math.tanh %116 : vector<8x32xf32>
    %118 = arith.mulf %111, %117 : vector<8x32xf32>
    %119 = arith.select %10, %118, %19 : vector<8x32xi1>, vector<8x32xf32>
    %c24_33 = arith.constant 24 : index
    %c0_34 = arith.constant 0 : index
    %120 = vector.load %arg20[%c24_33, %c0_34] : memref<64x32xf32, #tpu.memory_space<vmem>>, vector<8x32xf32>
    tpu.vector_store %arg20[%c24_33, %c0_34], %119 {strides = array<i32>} : memref<64x32xf32, #tpu.memory_space<vmem>>, vector<8x32xf32>,
    %121 = arith.select %10, %118, %99 : vector<8x32xi1>, vector<8x32xf32>
    %122 = arith.select %10, %116, %100 : vector<8x32xi1>, vector<8x32xf32>
    %c32 = arith.constant 32 : index
    %c0_35 = arith.constant 0 : index
    %123 = vector.load %arg19[%c32, %c0_35] : memref<64x128xf32, #tpu.memory_space<vmem>>, vector<8x128xf32>
    %cst_36 = arith.constant dense<0.000000e+00> : vector<8x128xf32>
    %124 = tpu.matmul %121, %32, %cst_36 {dimension_numbers = #tpu.dot_dimension_numbers<[1], [0], [0], [1], [0, 0, 1, 1], [], []>} : vector<8x32xf32>, vector<32x128xf32>, vector<8x128xf32> -> vector<8x128xf32>
    %125 = arith.addf %123, %124 : vector<8x128xf32>
    %126 = arith.negf %125 : vector<8x128xf32>
    %127 = math.exp %126 : vector<8x128xf32>
    %cst_37 = arith.constant 1.000000e+00 : f32
    %128 = vector.broadcast %cst_37 : f32 to vector<8x128xf32>
    %129 = arith.addf %128, %127 : vector<8x128xf32>
    %130 = arith.divf %128, %129 : vector<8x128xf32>
    %131 = vector.extract_strided_slice %130 {offsets = [0, 0], sizes = [8, 32], strides = [1, 1]} : vector<8x128xf32> to vector<8x32xf32>
    %132 = vector.extract_strided_slice %130 {offsets = [0, 32], sizes = [8, 32], strides = [1, 1]} : vector<8x128xf32> to vector<8x32xf32>
    %133 = vector.extract_strided_slice %130 {offsets = [0, 64], sizes = [8, 32], strides = [1, 1]} : vector<8x128xf32> to vector<8x32xf32>
    %134 = vector.extract_strided_slice %125 {offsets = [0, 96], sizes = [8, 32], strides = [1, 1]} : vector<8x128xf32> to vector<8x32xf32>
    %135 = math.tanh %134 : vector<8x32xf32>
    %136 = arith.mulf %132, %122 : vector<8x32xf32>
    %137 = arith.mulf %131, %135 : vector<8x32xf32>
    %138 = arith.addf %136, %137 : vector<8x32xf32>
    %139 = math.tanh %138 : vector<8x32xf32>
    %140 = arith.mulf %133, %139 : vector<8x32xf32>
    %141 = arith.select %12, %140, %19 : vector<8x32xi1>, vector<8x32xf32>
    %c32_38 = arith.constant 32 : index
    %c0_39 = arith.constant 0 : index
    %142 = vector.load %arg20[%c32_38, %c0_39] : memref<64x32xf32, #tpu.memory_space<vmem>>, vector<8x32xf32>
    tpu.vector_store %arg20[%c32_38, %c0_39], %141 {strides = array<i32>} : memref<64x32xf32, #tpu.memory_space<vmem>>, vector<8x32xf32>,
    %143 = arith.select %12, %140, %121 : vector<8x32xi1>, vector<8x32xf32>
    %144 = arith.select %12, %138, %122 : vector<8x32xi1>, vector<8x32xf32>
    %c40 = arith.constant 40 : index
    %c0_40 = arith.constant 0 : index
    %145 = vector.load %arg19[%c40, %c0_40] : memref<64x128xf32, #tpu.memory_space<vmem>>, vector<8x128xf32>
    %cst_41 = arith.constant dense<0.000000e+00> : vector<8x128xf32>
    %146 = tpu.matmul %143, %32, %cst_41 {dimension_numbers = #tpu.dot_dimension_numbers<[1], [0], [0], [1], [0, 0, 1, 1], [], []>} : vector<8x32xf32>, vector<32x128xf32>, vector<8x128xf32> -> vector<8x128xf32>
    %147 = arith.addf %145, %146 : vector<8x128xf32>
    %148 = arith.negf %147 : vector<8x128xf32>
    %149 = math.exp %148 : vector<8x128xf32>
    %cst_42 = arith.constant 1.000000e+00 : f32
    %150 = vector.broadcast %cst_42 : f32 to vector<8x128xf32>
    %151 = arith.addf %150, %149 : vector<8x128xf32>
    %152 = arith.divf %150, %151 : vector<8x128xf32>
    %153 = vector.extract_strided_slice %152 {offsets = [0, 0], sizes = [8, 32], strides = [1, 1]} : vector<8x128xf32> to vector<8x32xf32>
    %154 = vector.extract_strided_slice %152 {offsets = [0, 32], sizes = [8, 32], strides = [1, 1]} : vector<8x128xf32> to vector<8x32xf32>
    %155 = vector.extract_strided_slice %152 {offsets = [0, 64], sizes = [8, 32], strides = [1, 1]} : vector<8x128xf32> to vector<8x32xf32>
    %156 = vector.extract_strided_slice %147 {offsets = [0, 96], sizes = [8, 32], strides = [1, 1]} : vector<8x128xf32> to vector<8x32xf32>
    %157 = math.tanh %156 : vector<8x32xf32>
    %158 = arith.mulf %154, %144 : vector<8x32xf32>
    %159 = arith.mulf %153, %157 : vector<8x32xf32>
    %160 = arith.addf %158, %159 : vector<8x32xf32>
    %161 = math.tanh %160 : vector<8x32xf32>
    %162 = arith.mulf %155, %161 : vector<8x32xf32>
    %163 = arith.select %14, %162, %19 : vector<8x32xi1>, vector<8x32xf32>
    %c40_43 = arith.constant 40 : index
    %c0_44 = arith.constant 0 : index
    %164 = vector.load %arg20[%c40_43, %c0_44] : memref<64x32xf32, #tpu.memory_space<vmem>>, vector<8x32xf32>
    tpu.vector_store %arg20[%c40_43, %c0_44], %163 {strides = array<i32>} : memref<64x32xf32, #tpu.memory_space<vmem>>, vector<8x32xf32>,
    %165 = arith.select %14, %162, %143 : vector<8x32xi1>, vector<8x32xf32>
    %166 = arith.select %14, %160, %144 : vector<8x32xi1>, vector<8x32xf32>
    %c48 = arith.constant 48 : index
    %c0_45 = arith.constant 0 : index
    %167 = vector.load %arg19[%c48, %c0_45] : memref<64x128xf32, #tpu.memory_space<vmem>>, vector<8x128xf32>
    %cst_46 = arith.constant dense<0.000000e+00> : vector<8x128xf32>
    %168 = tpu.matmul %165, %32, %cst_46 {dimension_numbers = #tpu.dot_dimension_numbers<[1], [0], [0], [1], [0, 0, 1, 1], [], []>} : vector<8x32xf32>, vector<32x128xf32>, vector<8x128xf32> -> vector<8x128xf32>
    %169 = arith.addf %167, %168 : vector<8x128xf32>
    %170 = arith.negf %169 : vector<8x128xf32>
    %171 = math.exp %170 : vector<8x128xf32>
    %cst_47 = arith.constant 1.000000e+00 : f32
    %172 = vector.broadcast %cst_47 : f32 to vector<8x128xf32>
    %173 = arith.addf %172, %171 : vector<8x128xf32>
    %174 = arith.divf %172, %173 : vector<8x128xf32>
    %175 = vector.extract_strided_slice %174 {offsets = [0, 0], sizes = [8, 32], strides = [1, 1]} : vector<8x128xf32> to vector<8x32xf32>
    %176 = vector.extract_strided_slice %174 {offsets = [0, 32], sizes = [8, 32], strides = [1, 1]} : vector<8x128xf32> to vector<8x32xf32>
    %177 = vector.extract_strided_slice %174 {offsets = [0, 64], sizes = [8, 32], strides = [1, 1]} : vector<8x128xf32> to vector<8x32xf32>
    %178 = vector.extract_strided_slice %169 {offsets = [0, 96], sizes = [8, 32], strides = [1, 1]} : vector<8x128xf32> to vector<8x32xf32>
    %179 = math.tanh %178 : vector<8x32xf32>
    %180 = arith.mulf %176, %166 : vector<8x32xf32>
    %181 = arith.mulf %175, %179 : vector<8x32xf32>
    %182 = arith.addf %180, %181 : vector<8x32xf32>
    %183 = math.tanh %182 : vector<8x32xf32>
    %184 = arith.mulf %177, %183 : vector<8x32xf32>
    %185 = arith.select %16, %184, %19 : vector<8x32xi1>, vector<8x32xf32>
    %c48_48 = arith.constant 48 : index
    %c0_49 = arith.constant 0 : index
    %186 = vector.load %arg20[%c48_48, %c0_49] : memref<64x32xf32, #tpu.memory_space<vmem>>, vector<8x32xf32>
    tpu.vector_store %arg20[%c48_48, %c0_49], %185 {strides = array<i32>} : memref<64x32xf32, #tpu.memory_space<vmem>>, vector<8x32xf32>,
    %187 = arith.select %16, %184, %165 : vector<8x32xi1>, vector<8x32xf32>
    %188 = arith.select %16, %182, %166 : vector<8x32xi1>, vector<8x32xf32>
    %c56 = arith.constant 56 : index
    %c0_50 = arith.constant 0 : index
    %189 = vector.load %arg19[%c56, %c0_50] : memref<64x128xf32, #tpu.memory_space<vmem>>, vector<8x128xf32>
    %cst_51 = arith.constant dense<0.000000e+00> : vector<8x128xf32>
    %190 = tpu.matmul %187, %32, %cst_51 {dimension_numbers = #tpu.dot_dimension_numbers<[1], [0], [0], [1], [0, 0, 1, 1], [], []>} : vector<8x32xf32>, vector<32x128xf32>, vector<8x128xf32> -> vector<8x128xf32>
    %191 = arith.addf %189, %190 : vector<8x128xf32>
    %192 = arith.negf %191 : vector<8x128xf32>
    %193 = math.exp %192 : vector<8x128xf32>
    %cst_52 = arith.constant 1.000000e+00 : f32
    %194 = vector.broadcast %cst_52 : f32 to vector<8x128xf32>
    %195 = arith.addf %194, %193 : vector<8x128xf32>
    %196 = arith.divf %194, %195 : vector<8x128xf32>
    %197 = vector.extract_strided_slice %196 {offsets = [0, 0], sizes = [8, 32], strides = [1, 1]} : vector<8x128xf32> to vector<8x32xf32>
    %198 = vector.extract_strided_slice %196 {offsets = [0, 32], sizes = [8, 32], strides = [1, 1]} : vector<8x128xf32> to vector<8x32xf32>
    %199 = vector.extract_strided_slice %196 {offsets = [0, 64], sizes = [8, 32], strides = [1, 1]} : vector<8x128xf32> to vector<8x32xf32>
    %200 = vector.extract_strided_slice %191 {offsets = [0, 96], sizes = [8, 32], strides = [1, 1]} : vector<8x128xf32> to vector<8x32xf32>
    %201 = math.tanh %200 : vector<8x32xf32>
    %202 = arith.mulf %198, %188 : vector<8x32xf32>
    %203 = arith.mulf %197, %201 : vector<8x32xf32>
    %204 = arith.addf %202, %203 : vector<8x32xf32>
    %205 = math.tanh %204 : vector<8x32xf32>
    %206 = arith.mulf %199, %205 : vector<8x32xf32>
    %207 = arith.select %18, %206, %19 : vector<8x32xi1>, vector<8x32xf32>
    %c56_53 = arith.constant 56 : index
    %c0_54 = arith.constant 0 : index
    %208 = vector.load %arg20[%c56_53, %c0_54] : memref<64x32xf32, #tpu.memory_space<vmem>>, vector<8x32xf32>
    tpu.vector_store %arg20[%c56_53, %c0_54], %207 {strides = array<i32>} : memref<64x32xf32, #tpu.memory_space<vmem>>, vector<8x32xf32>,
    %c0_55 = arith.constant 0 : index
    %c0_56 = arith.constant 0 : index
    %209 = vector.load %arg20[%c0_55, %c0_56] : memref<64x32xf32, #tpu.memory_space<vmem>>, vector<64x32xf32>
    %c0_57 = arith.constant 0 : index
    %c0_58 = arith.constant 0 : index
    %210 = vector.load %arg6[%c0_57, %c0_58] : memref<32x128xf32, #tpu.memory_space<vmem>>, vector<32x128xf32>
    %cst_59 = arith.constant dense<0.000000e+00> : vector<64x128xf32>
    %211 = tpu.matmul %209, %210, %cst_59 {dimension_numbers = #tpu.dot_dimension_numbers<[1], [0], [0], [1], [0, 0, 1, 1], [], []>} : vector<64x32xf32>, vector<32x128xf32>, vector<64x128xf32> -> vector<64x128xf32>
    %c0_60 = arith.constant 0 : index
    %c0_61 = arith.constant 0 : index
    %212 = vector.load %arg8[%c0_60, %c0_61] : memref<1x128xf32, #tpu.memory_space<vmem>>, vector<1x128xf32>
    %213 = vector.broadcast %212 : vector<1x128xf32> to vector<64x128xf32>
    %214 = arith.addf %211, %213 : vector<64x128xf32>
    %c0_62 = arith.constant 0 : index
    %c0_63 = arith.constant 0 : index
    %215 = vector.load %arg19[%c0_62, %c0_63] : memref<64x128xf32, #tpu.memory_space<vmem>>, vector<64x128xf32>
    tpu.vector_store %arg19[%c0_62, %c0_63], %214 {strides = array<i32>} : memref<64x128xf32, #tpu.memory_space<vmem>>, vector<64x128xf32>,
    %c0_64 = arith.constant 0 : index
    %c0_65 = arith.constant 0 : index
    %216 = vector.load %arg7[%c0_64, %c0_65] : memref<32x128xf32, #tpu.memory_space<vmem>>, vector<32x128xf32>
    %cst_66 = arith.constant 0.000000e+00 : f32
    %217 = vector.broadcast %cst_66 : f32 to vector<8x32xf32>
    %cst_67 = arith.constant 0.000000e+00 : f32
    %218 = vector.broadcast %cst_67 : f32 to vector<8x32xf32>
    %c0_68 = arith.constant 0 : index
    %c0_69 = arith.constant 0 : index
    %219 = vector.load %arg19[%c0_68, %c0_69] : memref<64x128xf32, #tpu.memory_space<vmem>>, vector<8x128xf32>
    %cst_70 = arith.constant dense<0.000000e+00> : vector<8x128xf32>
    %220 = tpu.matmul %217, %216, %cst_70 {dimension_numbers = #tpu.dot_dimension_numbers<[1], [0], [0], [1], [0, 0, 1, 1], [], []>} : vector<8x32xf32>, vector<32x128xf32>, vector<8x128xf32> -> vector<8x128xf32>
    %221 = arith.addf %219, %220 : vector<8x128xf32>
    %222 = arith.negf %221 : vector<8x128xf32>
    %223 = math.exp %222 : vector<8x128xf32>
    %cst_71 = arith.constant 1.000000e+00 : f32
    %224 = vector.broadcast %cst_71 : f32 to vector<8x128xf32>
    %225 = arith.addf %224, %223 : vector<8x128xf32>
    %226 = arith.divf %224, %225 : vector<8x128xf32>
    %227 = vector.extract_strided_slice %226 {offsets = [0, 0], sizes = [8, 32], strides = [1, 1]} : vector<8x128xf32> to vector<8x32xf32>
    %228 = vector.extract_strided_slice %226 {offsets = [0, 32], sizes = [8, 32], strides = [1, 1]} : vector<8x128xf32> to vector<8x32xf32>
    %229 = vector.extract_strided_slice %226 {offsets = [0, 64], sizes = [8, 32], strides = [1, 1]} : vector<8x128xf32> to vector<8x32xf32>
    %230 = vector.extract_strided_slice %221 {offsets = [0, 96], sizes = [8, 32], strides = [1, 1]} : vector<8x128xf32> to vector<8x32xf32>
    %231 = math.tanh %230 : vector<8x32xf32>
    %232 = arith.mulf %228, %218 : vector<8x32xf32>
    %233 = arith.mulf %227, %231 : vector<8x32xf32>
    %234 = arith.addf %232, %233 : vector<8x32xf32>
    %235 = math.tanh %234 : vector<8x32xf32>
    %236 = arith.mulf %229, %235 : vector<8x32xf32>
    %237 = arith.select %4, %236, %217 : vector<8x32xi1>, vector<8x32xf32>
    %238 = arith.select %4, %234, %218 : vector<8x32xi1>, vector<8x32xf32>
    %c8_72 = arith.constant 8 : index
    %c0_73 = arith.constant 0 : index
    %239 = vector.load %arg19[%c8_72, %c0_73] : memref<64x128xf32, #tpu.memory_space<vmem>>, vector<8x128xf32>
    %cst_74 = arith.constant dense<0.000000e+00> : vector<8x128xf32>
    %240 = tpu.matmul %237, %216, %cst_74 {dimension_numbers = #tpu.dot_dimension_numbers<[1], [0], [0], [1], [0, 0, 1, 1], [], []>} : vector<8x32xf32>, vector<32x128xf32>, vector<8x128xf32> -> vector<8x128xf32>
    %241 = arith.addf %239, %240 : vector<8x128xf32>
    %242 = arith.negf %241 : vector<8x128xf32>
    %243 = math.exp %242 : vector<8x128xf32>
    %cst_75 = arith.constant 1.000000e+00 : f32
    %244 = vector.broadcast %cst_75 : f32 to vector<8x128xf32>
    %245 = arith.addf %244, %243 : vector<8x128xf32>
    %246 = arith.divf %244, %245 : vector<8x128xf32>
    %247 = vector.extract_strided_slice %246 {offsets = [0, 0], sizes = [8, 32], strides = [1, 1]} : vector<8x128xf32> to vector<8x32xf32>
    %248 = vector.extract_strided_slice %246 {offsets = [0, 32], sizes = [8, 32], strides = [1, 1]} : vector<8x128xf32> to vector<8x32xf32>
    %249 = vector.extract_strided_slice %246 {offsets = [0, 64], sizes = [8, 32], strides = [1, 1]} : vector<8x128xf32> to vector<8x32xf32>
    %250 = vector.extract_strided_slice %241 {offsets = [0, 96], sizes = [8, 32], strides = [1, 1]} : vector<8x128xf32> to vector<8x32xf32>
    %251 = math.tanh %250 : vector<8x32xf32>
    %252 = arith.mulf %248, %238 : vector<8x32xf32>
    %253 = arith.mulf %247, %251 : vector<8x32xf32>
    %254 = arith.addf %252, %253 : vector<8x32xf32>
    %255 = math.tanh %254 : vector<8x32xf32>
    %256 = arith.mulf %249, %255 : vector<8x32xf32>
    %257 = arith.select %6, %256, %237 : vector<8x32xi1>, vector<8x32xf32>
    %258 = arith.select %6, %254, %238 : vector<8x32xi1>, vector<8x32xf32>
    %c16_76 = arith.constant 16 : index
    %c0_77 = arith.constant 0 : index
    %259 = vector.load %arg19[%c16_76, %c0_77] : memref<64x128xf32, #tpu.memory_space<vmem>>, vector<8x128xf32>
    %cst_78 = arith.constant dense<0.000000e+00> : vector<8x128xf32>
    %260 = tpu.matmul %257, %216, %cst_78 {dimension_numbers = #tpu.dot_dimension_numbers<[1], [0], [0], [1], [0, 0, 1, 1], [], []>} : vector<8x32xf32>, vector<32x128xf32>, vector<8x128xf32> -> vector<8x128xf32>
    %261 = arith.addf %259, %260 : vector<8x128xf32>
    %262 = arith.negf %261 : vector<8x128xf32>
    %263 = math.exp %262 : vector<8x128xf32>
    %cst_79 = arith.constant 1.000000e+00 : f32
    %264 = vector.broadcast %cst_79 : f32 to vector<8x128xf32>
    %265 = arith.addf %264, %263 : vector<8x128xf32>
    %266 = arith.divf %264, %265 : vector<8x128xf32>
    %267 = vector.extract_strided_slice %266 {offsets = [0, 0], sizes = [8, 32], strides = [1, 1]} : vector<8x128xf32> to vector<8x32xf32>
    %268 = vector.extract_strided_slice %266 {offsets = [0, 32], sizes = [8, 32], strides = [1, 1]} : vector<8x128xf32> to vector<8x32xf32>
    %269 = vector.extract_strided_slice %266 {offsets = [0, 64], sizes = [8, 32], strides = [1, 1]} : vector<8x128xf32> to vector<8x32xf32>
    %270 = vector.extract_strided_slice %261 {offsets = [0, 96], sizes = [8, 32], strides = [1, 1]} : vector<8x128xf32> to vector<8x32xf32>
    %271 = math.tanh %270 : vector<8x32xf32>
    %272 = arith.mulf %268, %258 : vector<8x32xf32>
    %273 = arith.mulf %267, %271 : vector<8x32xf32>
    %274 = arith.addf %272, %273 : vector<8x32xf32>
    %275 = math.tanh %274 : vector<8x32xf32>
    %276 = arith.mulf %269, %275 : vector<8x32xf32>
    %277 = arith.select %8, %276, %257 : vector<8x32xi1>, vector<8x32xf32>
    %278 = arith.select %8, %274, %258 : vector<8x32xi1>, vector<8x32xf32>
    %c24_80 = arith.constant 24 : index
    %c0_81 = arith.constant 0 : index
    %279 = vector.load %arg19[%c24_80, %c0_81] : memref<64x128xf32, #tpu.memory_space<vmem>>, vector<8x128xf32>
    %cst_82 = arith.constant dense<0.000000e+00> : vector<8x128xf32>
    %280 = tpu.matmul %277, %216, %cst_82 {dimension_numbers = #tpu.dot_dimension_numbers<[1], [0], [0], [1], [0, 0, 1, 1], [], []>} : vector<8x32xf32>, vector<32x128xf32>, vector<8x128xf32> -> vector<8x128xf32>
    %281 = arith.addf %279, %280 : vector<8x128xf32>
    %282 = arith.negf %281 : vector<8x128xf32>
    %283 = math.exp %282 : vector<8x128xf32>
    %cst_83 = arith.constant 1.000000e+00 : f32
    %284 = vector.broadcast %cst_83 : f32 to vector<8x128xf32>
    %285 = arith.addf %284, %283 : vector<8x128xf32>
    %286 = arith.divf %284, %285 : vector<8x128xf32>
    %287 = vector.extract_strided_slice %286 {offsets = [0, 0], sizes = [8, 32], strides = [1, 1]} : vector<8x128xf32> to vector<8x32xf32>
    %288 = vector.extract_strided_slice %286 {offsets = [0, 32], sizes = [8, 32], strides = [1, 1]} : vector<8x128xf32> to vector<8x32xf32>
    %289 = vector.extract_strided_slice %286 {offsets = [0, 64], sizes = [8, 32], strides = [1, 1]} : vector<8x128xf32> to vector<8x32xf32>
    %290 = vector.extract_strided_slice %281 {offsets = [0, 96], sizes = [8, 32], strides = [1, 1]} : vector<8x128xf32> to vector<8x32xf32>
    %291 = math.tanh %290 : vector<8x32xf32>
    %292 = arith.mulf %288, %278 : vector<8x32xf32>
    %293 = arith.mulf %287, %291 : vector<8x32xf32>
    %294 = arith.addf %292, %293 : vector<8x32xf32>
    %295 = math.tanh %294 : vector<8x32xf32>
    %296 = arith.mulf %289, %295 : vector<8x32xf32>
    %297 = arith.select %10, %296, %277 : vector<8x32xi1>, vector<8x32xf32>
    %298 = arith.select %10, %294, %278 : vector<8x32xi1>, vector<8x32xf32>
    %c32_84 = arith.constant 32 : index
    %c0_85 = arith.constant 0 : index
    %299 = vector.load %arg19[%c32_84, %c0_85] : memref<64x128xf32, #tpu.memory_space<vmem>>, vector<8x128xf32>
    %cst_86 = arith.constant dense<0.000000e+00> : vector<8x128xf32>
    %300 = tpu.matmul %297, %216, %cst_86 {dimension_numbers = #tpu.dot_dimension_numbers<[1], [0], [0], [1], [0, 0, 1, 1], [], []>} : vector<8x32xf32>, vector<32x128xf32>, vector<8x128xf32> -> vector<8x128xf32>
    %301 = arith.addf %299, %300 : vector<8x128xf32>
    %302 = arith.negf %301 : vector<8x128xf32>
    %303 = math.exp %302 : vector<8x128xf32>
    %cst_87 = arith.constant 1.000000e+00 : f32
    %304 = vector.broadcast %cst_87 : f32 to vector<8x128xf32>
    %305 = arith.addf %304, %303 : vector<8x128xf32>
    %306 = arith.divf %304, %305 : vector<8x128xf32>
    %307 = vector.extract_strided_slice %306 {offsets = [0, 0], sizes = [8, 32], strides = [1, 1]} : vector<8x128xf32> to vector<8x32xf32>
    %308 = vector.extract_strided_slice %306 {offsets = [0, 32], sizes = [8, 32], strides = [1, 1]} : vector<8x128xf32> to vector<8x32xf32>
    %309 = vector.extract_strided_slice %306 {offsets = [0, 64], sizes = [8, 32], strides = [1, 1]} : vector<8x128xf32> to vector<8x32xf32>
    %310 = vector.extract_strided_slice %301 {offsets = [0, 96], sizes = [8, 32], strides = [1, 1]} : vector<8x128xf32> to vector<8x32xf32>
    %311 = math.tanh %310 : vector<8x32xf32>
    %312 = arith.mulf %308, %298 : vector<8x32xf32>
    %313 = arith.mulf %307, %311 : vector<8x32xf32>
    %314 = arith.addf %312, %313 : vector<8x32xf32>
    %315 = math.tanh %314 : vector<8x32xf32>
    %316 = arith.mulf %309, %315 : vector<8x32xf32>
    %317 = arith.select %12, %316, %297 : vector<8x32xi1>, vector<8x32xf32>
    %318 = arith.select %12, %314, %298 : vector<8x32xi1>, vector<8x32xf32>
    %c40_88 = arith.constant 40 : index
    %c0_89 = arith.constant 0 : index
    %319 = vector.load %arg19[%c40_88, %c0_89] : memref<64x128xf32, #tpu.memory_space<vmem>>, vector<8x128xf32>
    %cst_90 = arith.constant dense<0.000000e+00> : vector<8x128xf32>
    %320 = tpu.matmul %317, %216, %cst_90 {dimension_numbers = #tpu.dot_dimension_numbers<[1], [0], [0], [1], [0, 0, 1, 1], [], []>} : vector<8x32xf32>, vector<32x128xf32>, vector<8x128xf32> -> vector<8x128xf32>
    %321 = arith.addf %319, %320 : vector<8x128xf32>
    %322 = arith.negf %321 : vector<8x128xf32>
    %323 = math.exp %322 : vector<8x128xf32>
    %cst_91 = arith.constant 1.000000e+00 : f32
    %324 = vector.broadcast %cst_91 : f32 to vector<8x128xf32>
    %325 = arith.addf %324, %323 : vector<8x128xf32>
    %326 = arith.divf %324, %325 : vector<8x128xf32>
    %327 = vector.extract_strided_slice %326 {offsets = [0, 0], sizes = [8, 32], strides = [1, 1]} : vector<8x128xf32> to vector<8x32xf32>
    %328 = vector.extract_strided_slice %326 {offsets = [0, 32], sizes = [8, 32], strides = [1, 1]} : vector<8x128xf32> to vector<8x32xf32>
    %329 = vector.extract_strided_slice %326 {offsets = [0, 64], sizes = [8, 32], strides = [1, 1]} : vector<8x128xf32> to vector<8x32xf32>
    %330 = vector.extract_strided_slice %321 {offsets = [0, 96], sizes = [8, 32], strides = [1, 1]} : vector<8x128xf32> to vector<8x32xf32>
    %331 = math.tanh %330 : vector<8x32xf32>
    %332 = arith.mulf %328, %318 : vector<8x32xf32>
    %333 = arith.mulf %327, %331 : vector<8x32xf32>
    %334 = arith.addf %332, %333 : vector<8x32xf32>
    %335 = math.tanh %334 : vector<8x32xf32>
    %336 = arith.mulf %329, %335 : vector<8x32xf32>
    %337 = arith.select %14, %336, %317 : vector<8x32xi1>, vector<8x32xf32>
    %338 = arith.select %14, %334, %318 : vector<8x32xi1>, vector<8x32xf32>
    %c48_92 = arith.constant 48 : index
    %c0_93 = arith.constant 0 : index
    %339 = vector.load %arg19[%c48_92, %c0_93] : memref<64x128xf32, #tpu.memory_space<vmem>>, vector<8x128xf32>
    %cst_94 = arith.constant dense<0.000000e+00> : vector<8x128xf32>
    %340 = tpu.matmul %337, %216, %cst_94 {dimension_numbers = #tpu.dot_dimension_numbers<[1], [0], [0], [1], [0, 0, 1, 1], [], []>} : vector<8x32xf32>, vector<32x128xf32>, vector<8x128xf32> -> vector<8x128xf32>
    %341 = arith.addf %339, %340 : vector<8x128xf32>
    %342 = arith.negf %341 : vector<8x128xf32>
    %343 = math.exp %342 : vector<8x128xf32>
    %cst_95 = arith.constant 1.000000e+00 : f32
    %344 = vector.broadcast %cst_95 : f32 to vector<8x128xf32>
    %345 = arith.addf %344, %343 : vector<8x128xf32>
    %346 = arith.divf %344, %345 : vector<8x128xf32>
    %347 = vector.extract_strided_slice %346 {offsets = [0, 0], sizes = [8, 32], strides = [1, 1]} : vector<8x128xf32> to vector<8x32xf32>
    %348 = vector.extract_strided_slice %346 {offsets = [0, 32], sizes = [8, 32], strides = [1, 1]} : vector<8x128xf32> to vector<8x32xf32>
    %349 = vector.extract_strided_slice %346 {offsets = [0, 64], sizes = [8, 32], strides = [1, 1]} : vector<8x128xf32> to vector<8x32xf32>
    %350 = vector.extract_strided_slice %341 {offsets = [0, 96], sizes = [8, 32], strides = [1, 1]} : vector<8x128xf32> to vector<8x32xf32>
    %351 = math.tanh %350 : vector<8x32xf32>
    %352 = arith.mulf %348, %338 : vector<8x32xf32>
    %353 = arith.mulf %347, %351 : vector<8x32xf32>
    %354 = arith.addf %352, %353 : vector<8x32xf32>
    %355 = math.tanh %354 : vector<8x32xf32>
    %356 = arith.mulf %349, %355 : vector<8x32xf32>
    %357 = arith.select %16, %356, %337 : vector<8x32xi1>, vector<8x32xf32>
    %358 = arith.select %16, %354, %338 : vector<8x32xi1>, vector<8x32xf32>
    %c56_96 = arith.constant 56 : index
    %c0_97 = arith.constant 0 : index
    %359 = vector.load %arg19[%c56_96, %c0_97] : memref<64x128xf32, #tpu.memory_space<vmem>>, vector<8x128xf32>
    %cst_98 = arith.constant dense<0.000000e+00> : vector<8x128xf32>
    %360 = tpu.matmul %357, %216, %cst_98 {dimension_numbers = #tpu.dot_dimension_numbers<[1], [0], [0], [1], [0, 0, 1, 1], [], []>} : vector<8x32xf32>, vector<32x128xf32>, vector<8x128xf32> -> vector<8x128xf32>
    %361 = arith.addf %359, %360 : vector<8x128xf32>
    %362 = arith.negf %361 : vector<8x128xf32>
    %363 = math.exp %362 : vector<8x128xf32>
    %cst_99 = arith.constant 1.000000e+00 : f32
    %364 = vector.broadcast %cst_99 : f32 to vector<8x128xf32>
    %365 = arith.addf %364, %363 : vector<8x128xf32>
    %366 = arith.divf %364, %365 : vector<8x128xf32>
    %367 = vector.extract_strided_slice %366 {offsets = [0, 0], sizes = [8, 32], strides = [1, 1]} : vector<8x128xf32> to vector<8x32xf32>
    %368 = vector.extract_strided_slice %366 {offsets = [0, 32], sizes = [8, 32], strides = [1, 1]} : vector<8x128xf32> to vector<8x32xf32>
    %369 = vector.extract_strided_slice %366 {offsets = [0, 64], sizes = [8, 32], strides = [1, 1]} : vector<8x128xf32> to vector<8x32xf32>
    %370 = vector.extract_strided_slice %361 {offsets = [0, 96], sizes = [8, 32], strides = [1, 1]} : vector<8x128xf32> to vector<8x32xf32>
    %371 = math.tanh %370 : vector<8x32xf32>
    %372 = arith.mulf %368, %358 : vector<8x32xf32>
    %373 = arith.mulf %367, %371 : vector<8x32xf32>
    %374 = arith.addf %372, %373 : vector<8x32xf32>
    %375 = math.tanh %374 : vector<8x32xf32>
    %376 = arith.mulf %369, %375 : vector<8x32xf32>
    %377 = arith.select %18, %376, %357 : vector<8x32xi1>, vector<8x32xf32>
    %378 = arith.mulf %377, %377 : vector<8x32xf32>
    %cst_100 = arith.constant dense<0.000000e+00> : vector<8xf32>
    %379 = vector.multi_reduction <add>, %378, %cst_100 [1] : vector<8x32xf32> to vector<8xf32>
    %380 = vector.shape_cast %379 : vector<8xf32> to vector<8x1xf32>
    %cst_101 = arith.constant 9.99999996E-13 : f32
    %381 = vector.broadcast %cst_101 : f32 to vector<8x1xf32>
    %382 = arith.maximumf %380, %381 : vector<8x1xf32>
    %383 = math.rsqrt %382 : vector<8x1xf32>
    %384 = vector.broadcast %383 : vector<8x1xf32> to vector<8x32xf32>
    %385 = arith.mulf %377, %384 : vector<8x32xf32>
    %c0_102 = arith.constant 0 : index
    %c0_103 = arith.constant 0 : index
    %386 = vector.load %arg18[%c0_102, %c0_103] : memref<8x32xf32, #tpu.memory_space<vmem>>, vector<8x32xf32>
    tpu.vector_store %arg18[%c0_102, %c0_103], %385 {strides = array<i32>} : memref<8x32xf32, #tpu.memory_space<vmem>>, vector<8x32xf32>,
    %c0_104 = arith.constant 0 : index
    %c0_105 = arith.constant 0 : index
    %387 = vector.load %arg9[%c0_104, %c0_105] : memref<32x128xf32, #tpu.memory_space<vmem>>, vector<32x128xf32>
    %cst_106 = arith.constant dense<0.000000e+00> : vector<8x128xf32>
    %388 = tpu.matmul %385, %387, %cst_106 {dimension_numbers = #tpu.dot_dimension_numbers<[1], [0], [0], [1], [0, 0, 1, 1], [], []>} : vector<8x32xf32>, vector<32x128xf32>, vector<8x128xf32> -> vector<8x128xf32>
    %c0_107 = arith.constant 0 : index
    %c0_108 = arith.constant 0 : index
    %389 = vector.load %arg3[%c0_107, %c0_108] : memref<64x128xf32, #tpu.memory_space<vmem>>, vector<64x128xf32>
    %cst_109 = arith.constant dense<0.000000e+00> : vector<64x128xf32>
    %390 = tpu.matmul %25, %389, %cst_109 {dimension_numbers = #tpu.dot_dimension_numbers<[1], [0], [0], [1], [0, 0, 1, 1], [], []>} : vector<64x64xf32>, vector<64x128xf32>, vector<64x128xf32> -> vector<64x128xf32>
    %c0_110 = arith.constant 0 : index
    %c0_111 = arith.constant 0 : index
    %391 = vector.load %arg11[%c0_110, %c0_111] : memref<1x128xf32, #tpu.memory_space<vmem>>, vector<1x128xf32>
    %392 = vector.broadcast %391 : vector<1x128xf32> to vector<64x128xf32>
    %393 = arith.addf %390, %392 : vector<64x128xf32>
    %394 = tpu.concatenate %388, %388, %388, %388, %388, %388, %388, %388 in 0 : vector<8x128xf32>, vector<8x128xf32>, vector<8x128xf32>, vector<8x128xf32>, vector<8x128xf32>, vector<8x128xf32>, vector<8x128xf32>, vector<8x128xf32> -> vector<64x128xf32>
    %395 = arith.addf %393, %394 : vector<64x128xf32>
    %c0_112 = arith.constant 0 : index
    %c0_113 = arith.constant 0 : index
    %396 = vector.load %arg19[%c0_112, %c0_113] : memref<64x128xf32, #tpu.memory_space<vmem>>, vector<64x128xf32>
    tpu.vector_store %arg19[%c0_112, %c0_113], %395 {strides = array<i32>} : memref<64x128xf32, #tpu.memory_space<vmem>>, vector<64x128xf32>,
    %c0_114 = arith.constant 0 : index
    %c0_115 = arith.constant 0 : index
    %397 = vector.load %arg10[%c0_114, %c0_115] : memref<32x128xf32, #tpu.memory_space<vmem>>, vector<32x128xf32>
    %cst_116 = arith.constant 0.000000e+00 : f32
    %398 = vector.broadcast %cst_116 : f32 to vector<8x32xf32>
    %cst_117 = arith.constant 0.000000e+00 : f32
    %399 = vector.broadcast %cst_117 : f32 to vector<8x32xf32>
    %c0_118 = arith.constant 0 : index
    %c0_119 = arith.constant 0 : index
    %400 = vector.load %arg19[%c0_118, %c0_119] : memref<64x128xf32, #tpu.memory_space<vmem>>, vector<8x128xf32>
    %cst_120 = arith.constant dense<0.000000e+00> : vector<8x128xf32>
    %401 = tpu.matmul %398, %397, %cst_120 {dimension_numbers = #tpu.dot_dimension_numbers<[1], [0], [0], [1], [0, 0, 1, 1], [], []>} : vector<8x32xf32>, vector<32x128xf32>, vector<8x128xf32> -> vector<8x128xf32>
    %402 = arith.addf %400, %401 : vector<8x128xf32>
    %403 = arith.negf %402 : vector<8x128xf32>
    %404 = math.exp %403 : vector<8x128xf32>
    %cst_121 = arith.constant 1.000000e+00 : f32
    %405 = vector.broadcast %cst_121 : f32 to vector<8x128xf32>
    %406 = arith.addf %405, %404 : vector<8x128xf32>
    %407 = arith.divf %405, %406 : vector<8x128xf32>
    %408 = vector.extract_strided_slice %407 {offsets = [0, 0], sizes = [8, 32], strides = [1, 1]} : vector<8x128xf32> to vector<8x32xf32>
    %409 = vector.extract_strided_slice %407 {offsets = [0, 32], sizes = [8, 32], strides = [1, 1]} : vector<8x128xf32> to vector<8x32xf32>
    %410 = vector.extract_strided_slice %407 {offsets = [0, 64], sizes = [8, 32], strides = [1, 1]} : vector<8x128xf32> to vector<8x32xf32>
    %411 = vector.extract_strided_slice %402 {offsets = [0, 96], sizes = [8, 32], strides = [1, 1]} : vector<8x128xf32> to vector<8x32xf32>
    %412 = math.tanh %411 : vector<8x32xf32>
    %413 = arith.mulf %409, %399 : vector<8x32xf32>
    %414 = arith.mulf %408, %412 : vector<8x32xf32>
    %415 = arith.addf %413, %414 : vector<8x32xf32>
    %416 = math.tanh %415 : vector<8x32xf32>
    %417 = arith.mulf %410, %416 : vector<8x32xf32>
    %418 = arith.select %4, %417, %19 : vector<8x32xi1>, vector<8x32xf32>
    %c0_122 = arith.constant 0 : index
    %c0_123 = arith.constant 0 : index
    %419 = vector.load %arg20[%c0_122, %c0_123] : memref<64x32xf32, #tpu.memory_space<vmem>>, vector<8x32xf32>
    tpu.vector_store %arg20[%c0_122, %c0_123], %418 {strides = array<i32>} : memref<64x32xf32, #tpu.memory_space<vmem>>, vector<8x32xf32>,
    %420 = arith.select %4, %417, %398 : vector<8x32xi1>, vector<8x32xf32>
    %421 = arith.select %4, %415, %399 : vector<8x32xi1>, vector<8x32xf32>
    %c8_124 = arith.constant 8 : index
    %c0_125 = arith.constant 0 : index
    %422 = vector.load %arg19[%c8_124, %c0_125] : memref<64x128xf32, #tpu.memory_space<vmem>>, vector<8x128xf32>
    %cst_126 = arith.constant dense<0.000000e+00> : vector<8x128xf32>
    %423 = tpu.matmul %420, %397, %cst_126 {dimension_numbers = #tpu.dot_dimension_numbers<[1], [0], [0], [1], [0, 0, 1, 1], [], []>} : vector<8x32xf32>, vector<32x128xf32>, vector<8x128xf32> -> vector<8x128xf32>
    %424 = arith.addf %422, %423 : vector<8x128xf32>
    %425 = arith.negf %424 : vector<8x128xf32>
    %426 = math.exp %425 : vector<8x128xf32>
    %cst_127 = arith.constant 1.000000e+00 : f32
    %427 = vector.broadcast %cst_127 : f32 to vector<8x128xf32>
    %428 = arith.addf %427, %426 : vector<8x128xf32>
    %429 = arith.divf %427, %428 : vector<8x128xf32>
    %430 = vector.extract_strided_slice %429 {offsets = [0, 0], sizes = [8, 32], strides = [1, 1]} : vector<8x128xf32> to vector<8x32xf32>
    %431 = vector.extract_strided_slice %429 {offsets = [0, 32], sizes = [8, 32], strides = [1, 1]} : vector<8x128xf32> to vector<8x32xf32>
    %432 = vector.extract_strided_slice %429 {offsets = [0, 64], sizes = [8, 32], strides = [1, 1]} : vector<8x128xf32> to vector<8x32xf32>
    %433 = vector.extract_strided_slice %424 {offsets = [0, 96], sizes = [8, 32], strides = [1, 1]} : vector<8x128xf32> to vector<8x32xf32>
    %434 = math.tanh %433 : vector<8x32xf32>
    %435 = arith.mulf %431, %421 : vector<8x32xf32>
    %436 = arith.mulf %430, %434 : vector<8x32xf32>
    %437 = arith.addf %435, %436 : vector<8x32xf32>
    %438 = math.tanh %437 : vector<8x32xf32>
    %439 = arith.mulf %432, %438 : vector<8x32xf32>
    %440 = arith.select %6, %439, %19 : vector<8x32xi1>, vector<8x32xf32>
    %c8_128 = arith.constant 8 : index
    %c0_129 = arith.constant 0 : index
    %441 = vector.load %arg20[%c8_128, %c0_129] : memref<64x32xf32, #tpu.memory_space<vmem>>, vector<8x32xf32>
    tpu.vector_store %arg20[%c8_128, %c0_129], %440 {strides = array<i32>} : memref<64x32xf32, #tpu.memory_space<vmem>>, vector<8x32xf32>,
    %442 = arith.select %6, %439, %420 : vector<8x32xi1>, vector<8x32xf32>
    %443 = arith.select %6, %437, %421 : vector<8x32xi1>, vector<8x32xf32>
    %c16_130 = arith.constant 16 : index
    %c0_131 = arith.constant 0 : index
    %444 = vector.load %arg19[%c16_130, %c0_131] : memref<64x128xf32, #tpu.memory_space<vmem>>, vector<8x128xf32>
    %cst_132 = arith.constant dense<0.000000e+00> : vector<8x128xf32>
    %445 = tpu.matmul %442, %397, %cst_132 {dimension_numbers = #tpu.dot_dimension_numbers<[1], [0], [0], [1], [0, 0, 1, 1], [], []>} : vector<8x32xf32>, vector<32x128xf32>, vector<8x128xf32> -> vector<8x128xf32>
    %446 = arith.addf %444, %445 : vector<8x128xf32>
    %447 = arith.negf %446 : vector<8x128xf32>
    %448 = math.exp %447 : vector<8x128xf32>
    %cst_133 = arith.constant 1.000000e+00 : f32
    %449 = vector.broadcast %cst_133 : f32 to vector<8x128xf32>
    %450 = arith.addf %449, %448 : vector<8x128xf32>
    %451 = arith.divf %449, %450 : vector<8x128xf32>
    %452 = vector.extract_strided_slice %451 {offsets = [0, 0], sizes = [8, 32], strides = [1, 1]} : vector<8x128xf32> to vector<8x32xf32>
    %453 = vector.extract_strided_slice %451 {offsets = [0, 32], sizes = [8, 32], strides = [1, 1]} : vector<8x128xf32> to vector<8x32xf32>
    %454 = vector.extract_strided_slice %451 {offsets = [0, 64], sizes = [8, 32], strides = [1, 1]} : vector<8x128xf32> to vector<8x32xf32>
    %455 = vector.extract_strided_slice %446 {offsets = [0, 96], sizes = [8, 32], strides = [1, 1]} : vector<8x128xf32> to vector<8x32xf32>
    %456 = math.tanh %455 : vector<8x32xf32>
    %457 = arith.mulf %453, %443 : vector<8x32xf32>
    %458 = arith.mulf %452, %456 : vector<8x32xf32>
    %459 = arith.addf %457, %458 : vector<8x32xf32>
    %460 = math.tanh %459 : vector<8x32xf32>
    %461 = arith.mulf %454, %460 : vector<8x32xf32>
    %462 = arith.select %8, %461, %19 : vector<8x32xi1>, vector<8x32xf32>
    %c16_134 = arith.constant 16 : index
    %c0_135 = arith.constant 0 : index
    %463 = vector.load %arg20[%c16_134, %c0_135] : memref<64x32xf32, #tpu.memory_space<vmem>>, vector<8x32xf32>
    tpu.vector_store %arg20[%c16_134, %c0_135], %462 {strides = array<i32>} : memref<64x32xf32, #tpu.memory_space<vmem>>, vector<8x32xf32>,
    %464 = arith.select %8, %461, %442 : vector<8x32xi1>, vector<8x32xf32>
    %465 = arith.select %8, %459, %443 : vector<8x32xi1>, vector<8x32xf32>
    %c24_136 = arith.constant 24 : index
    %c0_137 = arith.constant 0 : index
    %466 = vector.load %arg19[%c24_136, %c0_137] : memref<64x128xf32, #tpu.memory_space<vmem>>, vector<8x128xf32>
    %cst_138 = arith.constant dense<0.000000e+00> : vector<8x128xf32>
    %467 = tpu.matmul %464, %397, %cst_138 {dimension_numbers = #tpu.dot_dimension_numbers<[1], [0], [0], [1], [0, 0, 1, 1], [], []>} : vector<8x32xf32>, vector<32x128xf32>, vector<8x128xf32> -> vector<8x128xf32>
    %468 = arith.addf %466, %467 : vector<8x128xf32>
    %469 = arith.negf %468 : vector<8x128xf32>
    %470 = math.exp %469 : vector<8x128xf32>
    %cst_139 = arith.constant 1.000000e+00 : f32
    %471 = vector.broadcast %cst_139 : f32 to vector<8x128xf32>
    %472 = arith.addf %471, %470 : vector<8x128xf32>
    %473 = arith.divf %471, %472 : vector<8x128xf32>
    %474 = vector.extract_strided_slice %473 {offsets = [0, 0], sizes = [8, 32], strides = [1, 1]} : vector<8x128xf32> to vector<8x32xf32>
    %475 = vector.extract_strided_slice %473 {offsets = [0, 32], sizes = [8, 32], strides = [1, 1]} : vector<8x128xf32> to vector<8x32xf32>
    %476 = vector.extract_strided_slice %473 {offsets = [0, 64], sizes = [8, 32], strides = [1, 1]} : vector<8x128xf32> to vector<8x32xf32>
    %477 = vector.extract_strided_slice %468 {offsets = [0, 96], sizes = [8, 32], strides = [1, 1]} : vector<8x128xf32> to vector<8x32xf32>
    %478 = math.tanh %477 : vector<8x32xf32>
    %479 = arith.mulf %475, %465 : vector<8x32xf32>
    %480 = arith.mulf %474, %478 : vector<8x32xf32>
    %481 = arith.addf %479, %480 : vector<8x32xf32>
    %482 = math.tanh %481 : vector<8x32xf32>
    %483 = arith.mulf %476, %482 : vector<8x32xf32>
    %484 = arith.select %10, %483, %19 : vector<8x32xi1>, vector<8x32xf32>
    %c24_140 = arith.constant 24 : index
    %c0_141 = arith.constant 0 : index
    %485 = vector.load %arg20[%c24_140, %c0_141] : memref<64x32xf32, #tpu.memory_space<vmem>>, vector<8x32xf32>
    tpu.vector_store %arg20[%c24_140, %c0_141], %484 {strides = array<i32>} : memref<64x32xf32, #tpu.memory_space<vmem>>, vector<8x32xf32>,
    %486 = arith.select %10, %483, %464 : vector<8x32xi1>, vector<8x32xf32>
    %487 = arith.select %10, %481, %465 : vector<8x32xi1>, vector<8x32xf32>
    %c32_142 = arith.constant 32 : index
    %c0_143 = arith.constant 0 : index
    %488 = vector.load %arg19[%c32_142, %c0_143] : memref<64x128xf32, #tpu.memory_space<vmem>>, vector<8x128xf32>
    %cst_144 = arith.constant dense<0.000000e+00> : vector<8x128xf32>
    %489 = tpu.matmul %486, %397, %cst_144 {dimension_numbers = #tpu.dot_dimension_numbers<[1], [0], [0], [1], [0, 0, 1, 1], [], []>} : vector<8x32xf32>, vector<32x128xf32>, vector<8x128xf32> -> vector<8x128xf32>
    %490 = arith.addf %488, %489 : vector<8x128xf32>
    %491 = arith.negf %490 : vector<8x128xf32>
    %492 = math.exp %491 : vector<8x128xf32>
    %cst_145 = arith.constant 1.000000e+00 : f32
    %493 = vector.broadcast %cst_145 : f32 to vector<8x128xf32>
    %494 = arith.addf %493, %492 : vector<8x128xf32>
    %495 = arith.divf %493, %494 : vector<8x128xf32>
    %496 = vector.extract_strided_slice %495 {offsets = [0, 0], sizes = [8, 32], strides = [1, 1]} : vector<8x128xf32> to vector<8x32xf32>
    %497 = vector.extract_strided_slice %495 {offsets = [0, 32], sizes = [8, 32], strides = [1, 1]} : vector<8x128xf32> to vector<8x32xf32>
    %498 = vector.extract_strided_slice %495 {offsets = [0, 64], sizes = [8, 32], strides = [1, 1]} : vector<8x128xf32> to vector<8x32xf32>
    %499 = vector.extract_strided_slice %490 {offsets = [0, 96], sizes = [8, 32], strides = [1, 1]} : vector<8x128xf32> to vector<8x32xf32>
    %500 = math.tanh %499 : vector<8x32xf32>
    %501 = arith.mulf %497, %487 : vector<8x32xf32>
    %502 = arith.mulf %496, %500 : vector<8x32xf32>
    %503 = arith.addf %501, %502 : vector<8x32xf32>
    %504 = math.tanh %503 : vector<8x32xf32>
    %505 = arith.mulf %498, %504 : vector<8x32xf32>
    %506 = arith.select %12, %505, %19 : vector<8x32xi1>, vector<8x32xf32>
    %c32_146 = arith.constant 32 : index
    %c0_147 = arith.constant 0 : index
    %507 = vector.load %arg20[%c32_146, %c0_147] : memref<64x32xf32, #tpu.memory_space<vmem>>, vector<8x32xf32>
    tpu.vector_store %arg20[%c32_146, %c0_147], %506 {strides = array<i32>} : memref<64x32xf32, #tpu.memory_space<vmem>>, vector<8x32xf32>,
    %508 = arith.select %12, %505, %486 : vector<8x32xi1>, vector<8x32xf32>
    %509 = arith.select %12, %503, %487 : vector<8x32xi1>, vector<8x32xf32>
    %c40_148 = arith.constant 40 : index
    %c0_149 = arith.constant 0 : index
    %510 = vector.load %arg19[%c40_148, %c0_149] : memref<64x128xf32, #tpu.memory_space<vmem>>, vector<8x128xf32>
    %cst_150 = arith.constant dense<0.000000e+00> : vector<8x128xf32>
    %511 = tpu.matmul %508, %397, %cst_150 {dimension_numbers = #tpu.dot_dimension_numbers<[1], [0], [0], [1], [0, 0, 1, 1], [], []>} : vector<8x32xf32>, vector<32x128xf32>, vector<8x128xf32> -> vector<8x128xf32>
    %512 = arith.addf %510, %511 : vector<8x128xf32>
    %513 = arith.negf %512 : vector<8x128xf32>
    %514 = math.exp %513 : vector<8x128xf32>
    %cst_151 = arith.constant 1.000000e+00 : f32
    %515 = vector.broadcast %cst_151 : f32 to vector<8x128xf32>
    %516 = arith.addf %515, %514 : vector<8x128xf32>
    %517 = arith.divf %515, %516 : vector<8x128xf32>
    %518 = vector.extract_strided_slice %517 {offsets = [0, 0], sizes = [8, 32], strides = [1, 1]} : vector<8x128xf32> to vector<8x32xf32>
    %519 = vector.extract_strided_slice %517 {offsets = [0, 32], sizes = [8, 32], strides = [1, 1]} : vector<8x128xf32> to vector<8x32xf32>
    %520 = vector.extract_strided_slice %517 {offsets = [0, 64], sizes = [8, 32], strides = [1, 1]} : vector<8x128xf32> to vector<8x32xf32>
    %521 = vector.extract_strided_slice %512 {offsets = [0, 96], sizes = [8, 32], strides = [1, 1]} : vector<8x128xf32> to vector<8x32xf32>
    %522 = math.tanh %521 : vector<8x32xf32>
    %523 = arith.mulf %519, %509 : vector<8x32xf32>
    %524 = arith.mulf %518, %522 : vector<8x32xf32>
    %525 = arith.addf %523, %524 : vector<8x32xf32>
    %526 = math.tanh %525 : vector<8x32xf32>
    %527 = arith.mulf %520, %526 : vector<8x32xf32>
    %528 = arith.select %14, %527, %19 : vector<8x32xi1>, vector<8x32xf32>
    %c40_152 = arith.constant 40 : index
    %c0_153 = arith.constant 0 : index
    %529 = vector.load %arg20[%c40_152, %c0_153] : memref<64x32xf32, #tpu.memory_space<vmem>>, vector<8x32xf32>
    tpu.vector_store %arg20[%c40_152, %c0_153], %528 {strides = array<i32>} : memref<64x32xf32, #tpu.memory_space<vmem>>, vector<8x32xf32>,
    %530 = arith.select %14, %527, %508 : vector<8x32xi1>, vector<8x32xf32>
    %531 = arith.select %14, %525, %509 : vector<8x32xi1>, vector<8x32xf32>
    %c48_154 = arith.constant 48 : index
    %c0_155 = arith.constant 0 : index
    %532 = vector.load %arg19[%c48_154, %c0_155] : memref<64x128xf32, #tpu.memory_space<vmem>>, vector<8x128xf32>
    %cst_156 = arith.constant dense<0.000000e+00> : vector<8x128xf32>
    %533 = tpu.matmul %530, %397, %cst_156 {dimension_numbers = #tpu.dot_dimension_numbers<[1], [0], [0], [1], [0, 0, 1, 1], [], []>} : vector<8x32xf32>, vector<32x128xf32>, vector<8x128xf32> -> vector<8x128xf32>
    %534 = arith.addf %532, %533 : vector<8x128xf32>
    %535 = arith.negf %534 : vector<8x128xf32>
    %536 = math.exp %535 : vector<8x128xf32>
    %cst_157 = arith.constant 1.000000e+00 : f32
    %537 = vector.broadcast %cst_157 : f32 to vector<8x128xf32>
    %538 = arith.addf %537, %536 : vector<8x128xf32>
    %539 = arith.divf %537, %538 : vector<8x128xf32>
    %540 = vector.extract_strided_slice %539 {offsets = [0, 0], sizes = [8, 32], strides = [1, 1]} : vector<8x128xf32> to vector<8x32xf32>
    %541 = vector.extract_strided_slice %539 {offsets = [0, 32], sizes = [8, 32], strides = [1, 1]} : vector<8x128xf32> to vector<8x32xf32>
    %542 = vector.extract_strided_slice %539 {offsets = [0, 64], sizes = [8, 32], strides = [1, 1]} : vector<8x128xf32> to vector<8x32xf32>
    %543 = vector.extract_strided_slice %534 {offsets = [0, 96], sizes = [8, 32], strides = [1, 1]} : vector<8x128xf32> to vector<8x32xf32>
    %544 = math.tanh %543 : vector<8x32xf32>
    %545 = arith.mulf %541, %531 : vector<8x32xf32>
    %546 = arith.mulf %540, %544 : vector<8x32xf32>
    %547 = arith.addf %545, %546 : vector<8x32xf32>
    %548 = math.tanh %547 : vector<8x32xf32>
    %549 = arith.mulf %542, %548 : vector<8x32xf32>
    %550 = arith.select %16, %549, %19 : vector<8x32xi1>, vector<8x32xf32>
    %c48_158 = arith.constant 48 : index
    %c0_159 = arith.constant 0 : index
    %551 = vector.load %arg20[%c48_158, %c0_159] : memref<64x32xf32, #tpu.memory_space<vmem>>, vector<8x32xf32>
    tpu.vector_store %arg20[%c48_158, %c0_159], %550 {strides = array<i32>} : memref<64x32xf32, #tpu.memory_space<vmem>>, vector<8x32xf32>,
    %552 = arith.select %16, %549, %530 : vector<8x32xi1>, vector<8x32xf32>
    %553 = arith.select %16, %547, %531 : vector<8x32xi1>, vector<8x32xf32>
    %c56_160 = arith.constant 56 : index
    %c0_161 = arith.constant 0 : index
    %554 = vector.load %arg19[%c56_160, %c0_161] : memref<64x128xf32, #tpu.memory_space<vmem>>, vector<8x128xf32>
    %cst_162 = arith.constant dense<0.000000e+00> : vector<8x128xf32>
    %555 = tpu.matmul %552, %397, %cst_162 {dimension_numbers = #tpu.dot_dimension_numbers<[1], [0], [0], [1], [0, 0, 1, 1], [], []>} : vector<8x32xf32>, vector<32x128xf32>, vector<8x128xf32> -> vector<8x128xf32>
    %556 = arith.addf %554, %555 : vector<8x128xf32>
    %557 = arith.negf %556 : vector<8x128xf32>
    %558 = math.exp %557 : vector<8x128xf32>
    %cst_163 = arith.constant 1.000000e+00 : f32
    %559 = vector.broadcast %cst_163 : f32 to vector<8x128xf32>
    %560 = arith.addf %559, %558 : vector<8x128xf32>
    %561 = arith.divf %559, %560 : vector<8x128xf32>
    %562 = vector.extract_strided_slice %561 {offsets = [0, 0], sizes = [8, 32], strides = [1, 1]} : vector<8x128xf32> to vector<8x32xf32>
    %563 = vector.extract_strided_slice %561 {offsets = [0, 32], sizes = [8, 32], strides = [1, 1]} : vector<8x128xf32> to vector<8x32xf32>
    %564 = vector.extract_strided_slice %561 {offsets = [0, 64], sizes = [8, 32], strides = [1, 1]} : vector<8x128xf32> to vector<8x32xf32>
    %565 = vector.extract_strided_slice %556 {offsets = [0, 96], sizes = [8, 32], strides = [1, 1]} : vector<8x128xf32> to vector<8x32xf32>
    %566 = math.tanh %565 : vector<8x32xf32>
    %567 = arith.mulf %563, %553 : vector<8x32xf32>
    %568 = arith.mulf %562, %566 : vector<8x32xf32>
    %569 = arith.addf %567, %568 : vector<8x32xf32>
    %570 = math.tanh %569 : vector<8x32xf32>
    %571 = arith.mulf %564, %570 : vector<8x32xf32>
    %572 = arith.select %18, %571, %19 : vector<8x32xi1>, vector<8x32xf32>
    %c56_164 = arith.constant 56 : index
    %c0_165 = arith.constant 0 : index
    %573 = vector.load %arg20[%c56_164, %c0_165] : memref<64x32xf32, #tpu.memory_space<vmem>>, vector<8x32xf32>
    tpu.vector_store %arg20[%c56_164, %c0_165], %572 {strides = array<i32>} : memref<64x32xf32, #tpu.memory_space<vmem>>, vector<8x32xf32>,
    %c0_166 = arith.constant 0 : index
    %c0_167 = arith.constant 0 : index
    %574 = vector.load %arg20[%c0_166, %c0_167] : memref<64x32xf32, #tpu.memory_space<vmem>>, vector<64x32xf32>
    %c0_168 = arith.constant 0 : index
    %c0_169 = arith.constant 0 : index
    %575 = vector.load %arg12[%c0_168, %c0_169] : memref<32x128xf32, #tpu.memory_space<vmem>>, vector<32x128xf32>
    %cst_170 = arith.constant dense<0.000000e+00> : vector<64x128xf32>
    %576 = tpu.matmul %574, %575, %cst_170 {dimension_numbers = #tpu.dot_dimension_numbers<[1], [0], [0], [1], [0, 0, 1, 1], [], []>} : vector<64x32xf32>, vector<32x128xf32>, vector<64x128xf32> -> vector<64x128xf32>
    %c0_171 = arith.constant 0 : index
    %c0_172 = arith.constant 0 : index
    %577 = vector.load %arg14[%c0_171, %c0_172] : memref<1x128xf32, #tpu.memory_space<vmem>>, vector<1x128xf32>
    %578 = vector.broadcast %577 : vector<1x128xf32> to vector<64x128xf32>
    %579 = arith.addf %576, %578 : vector<64x128xf32>
    %c0_173 = arith.constant 0 : index
    %c0_174 = arith.constant 0 : index
    %580 = vector.load %arg19[%c0_173, %c0_174] : memref<64x128xf32, #tpu.memory_space<vmem>>, vector<64x128xf32>
    tpu.vector_store %arg19[%c0_173, %c0_174], %579 {strides = array<i32>} : memref<64x128xf32, #tpu.memory_space<vmem>>, vector<64x128xf32>,
    %c0_175 = arith.constant 0 : index
    %c0_176 = arith.constant 0 : index
    %581 = vector.load %arg13[%c0_175, %c0_176] : memref<32x128xf32, #tpu.memory_space<vmem>>, vector<32x128xf32>
    %cst_177 = arith.constant 0.000000e+00 : f32
    %582 = vector.broadcast %cst_177 : f32 to vector<8x32xf32>
    %cst_178 = arith.constant 0.000000e+00 : f32
    %583 = vector.broadcast %cst_178 : f32 to vector<8x32xf32>
    %c0_179 = arith.constant 0 : index
    %c0_180 = arith.constant 0 : index
    %584 = vector.load %arg19[%c0_179, %c0_180] : memref<64x128xf32, #tpu.memory_space<vmem>>, vector<8x128xf32>
    %cst_181 = arith.constant dense<0.000000e+00> : vector<8x128xf32>
    %585 = tpu.matmul %582, %581, %cst_181 {dimension_numbers = #tpu.dot_dimension_numbers<[1], [0], [0], [1], [0, 0, 1, 1], [], []>} : vector<8x32xf32>, vector<32x128xf32>, vector<8x128xf32> -> vector<8x128xf32>
    %586 = arith.addf %584, %585 : vector<8x128xf32>
    %587 = arith.negf %586 : vector<8x128xf32>
    %588 = math.exp %587 : vector<8x128xf32>
    %cst_182 = arith.constant 1.000000e+00 : f32
    %589 = vector.broadcast %cst_182 : f32 to vector<8x128xf32>
    %590 = arith.addf %589, %588 : vector<8x128xf32>
    %591 = arith.divf %589, %590 : vector<8x128xf32>
    %592 = vector.extract_strided_slice %591 {offsets = [0, 0], sizes = [8, 32], strides = [1, 1]} : vector<8x128xf32> to vector<8x32xf32>
    %593 = vector.extract_strided_slice %591 {offsets = [0, 32], sizes = [8, 32], strides = [1, 1]} : vector<8x128xf32> to vector<8x32xf32>
    %594 = vector.extract_strided_slice %591 {offsets = [0, 64], sizes = [8, 32], strides = [1, 1]} : vector<8x128xf32> to vector<8x32xf32>
    %595 = vector.extract_strided_slice %586 {offsets = [0, 96], sizes = [8, 32], strides = [1, 1]} : vector<8x128xf32> to vector<8x32xf32>
    %596 = math.tanh %595 : vector<8x32xf32>
    %597 = arith.mulf %593, %583 : vector<8x32xf32>
    %598 = arith.mulf %592, %596 : vector<8x32xf32>
    %599 = arith.addf %597, %598 : vector<8x32xf32>
    %600 = math.tanh %599 : vector<8x32xf32>
    %601 = arith.mulf %594, %600 : vector<8x32xf32>
    %602 = arith.select %4, %601, %19 : vector<8x32xi1>, vector<8x32xf32>
    %c0_183 = arith.constant 0 : index
    %c0_184 = arith.constant 0 : index
    %603 = vector.load %arg20[%c0_183, %c0_184] : memref<64x32xf32, #tpu.memory_space<vmem>>, vector<8x32xf32>
    tpu.vector_store %arg20[%c0_183, %c0_184], %602 {strides = array<i32>} : memref<64x32xf32, #tpu.memory_space<vmem>>, vector<8x32xf32>,
    %604 = arith.select %4, %601, %582 : vector<8x32xi1>, vector<8x32xf32>
    %605 = arith.select %4, %599, %583 : vector<8x32xi1>, vector<8x32xf32>
    %c8_185 = arith.constant 8 : index
    %c0_186 = arith.constant 0 : index
    %606 = vector.load %arg19[%c8_185, %c0_186] : memref<64x128xf32, #tpu.memory_space<vmem>>, vector<8x128xf32>
    %cst_187 = arith.constant dense<0.000000e+00> : vector<8x128xf32>
    %607 = tpu.matmul %604, %581, %cst_187 {dimension_numbers = #tpu.dot_dimension_numbers<[1], [0], [0], [1], [0, 0, 1, 1], [], []>} : vector<8x32xf32>, vector<32x128xf32>, vector<8x128xf32> -> vector<8x128xf32>
    %608 = arith.addf %606, %607 : vector<8x128xf32>
    %609 = arith.negf %608 : vector<8x128xf32>
    %610 = math.exp %609 : vector<8x128xf32>
    %cst_188 = arith.constant 1.000000e+00 : f32
    %611 = vector.broadcast %cst_188 : f32 to vector<8x128xf32>
    %612 = arith.addf %611, %610 : vector<8x128xf32>
    %613 = arith.divf %611, %612 : vector<8x128xf32>
    %614 = vector.extract_strided_slice %613 {offsets = [0, 0], sizes = [8, 32], strides = [1, 1]} : vector<8x128xf32> to vector<8x32xf32>
    %615 = vector.extract_strided_slice %613 {offsets = [0, 32], sizes = [8, 32], strides = [1, 1]} : vector<8x128xf32> to vector<8x32xf32>
    %616 = vector.extract_strided_slice %613 {offsets = [0, 64], sizes = [8, 32], strides = [1, 1]} : vector<8x128xf32> to vector<8x32xf32>
    %617 = vector.extract_strided_slice %608 {offsets = [0, 96], sizes = [8, 32], strides = [1, 1]} : vector<8x128xf32> to vector<8x32xf32>
    %618 = math.tanh %617 : vector<8x32xf32>
    %619 = arith.mulf %615, %605 : vector<8x32xf32>
    %620 = arith.mulf %614, %618 : vector<8x32xf32>
    %621 = arith.addf %619, %620 : vector<8x32xf32>
    %622 = math.tanh %621 : vector<8x32xf32>
    %623 = arith.mulf %616, %622 : vector<8x32xf32>
    %624 = arith.select %6, %623, %19 : vector<8x32xi1>, vector<8x32xf32>
    %c8_189 = arith.constant 8 : index
    %c0_190 = arith.constant 0 : index
    %625 = vector.load %arg20[%c8_189, %c0_190] : memref<64x32xf32, #tpu.memory_space<vmem>>, vector<8x32xf32>
    tpu.vector_store %arg20[%c8_189, %c0_190], %624 {strides = array<i32>} : memref<64x32xf32, #tpu.memory_space<vmem>>, vector<8x32xf32>,
    %626 = arith.select %6, %623, %604 : vector<8x32xi1>, vector<8x32xf32>
    %627 = arith.select %6, %621, %605 : vector<8x32xi1>, vector<8x32xf32>
    %c16_191 = arith.constant 16 : index
    %c0_192 = arith.constant 0 : index
    %628 = vector.load %arg19[%c16_191, %c0_192] : memref<64x128xf32, #tpu.memory_space<vmem>>, vector<8x128xf32>
    %cst_193 = arith.constant dense<0.000000e+00> : vector<8x128xf32>
    %629 = tpu.matmul %626, %581, %cst_193 {dimension_numbers = #tpu.dot_dimension_numbers<[1], [0], [0], [1], [0, 0, 1, 1], [], []>} : vector<8x32xf32>, vector<32x128xf32>, vector<8x128xf32> -> vector<8x128xf32>
    %630 = arith.addf %628, %629 : vector<8x128xf32>
    %631 = arith.negf %630 : vector<8x128xf32>
    %632 = math.exp %631 : vector<8x128xf32>
    %cst_194 = arith.constant 1.000000e+00 : f32
    %633 = vector.broadcast %cst_194 : f32 to vector<8x128xf32>
    %634 = arith.addf %633, %632 : vector<8x128xf32>
    %635 = arith.divf %633, %634 : vector<8x128xf32>
    %636 = vector.extract_strided_slice %635 {offsets = [0, 0], sizes = [8, 32], strides = [1, 1]} : vector<8x128xf32> to vector<8x32xf32>
    %637 = vector.extract_strided_slice %635 {offsets = [0, 32], sizes = [8, 32], strides = [1, 1]} : vector<8x128xf32> to vector<8x32xf32>
    %638 = vector.extract_strided_slice %635 {offsets = [0, 64], sizes = [8, 32], strides = [1, 1]} : vector<8x128xf32> to vector<8x32xf32>
    %639 = vector.extract_strided_slice %630 {offsets = [0, 96], sizes = [8, 32], strides = [1, 1]} : vector<8x128xf32> to vector<8x32xf32>
    %640 = math.tanh %639 : vector<8x32xf32>
    %641 = arith.mulf %637, %627 : vector<8x32xf32>
    %642 = arith.mulf %636, %640 : vector<8x32xf32>
    %643 = arith.addf %641, %642 : vector<8x32xf32>
    %644 = math.tanh %643 : vector<8x32xf32>
    %645 = arith.mulf %638, %644 : vector<8x32xf32>
    %646 = arith.select %8, %645, %19 : vector<8x32xi1>, vector<8x32xf32>
    %c16_195 = arith.constant 16 : index
    %c0_196 = arith.constant 0 : index
    %647 = vector.load %arg20[%c16_195, %c0_196] : memref<64x32xf32, #tpu.memory_space<vmem>>, vector<8x32xf32>
    tpu.vector_store %arg20[%c16_195, %c0_196], %646 {strides = array<i32>} : memref<64x32xf32, #tpu.memory_space<vmem>>, vector<8x32xf32>,
    %648 = arith.select %8, %645, %626 : vector<8x32xi1>, vector<8x32xf32>
    %649 = arith.select %8, %643, %627 : vector<8x32xi1>, vector<8x32xf32>
    %c24_197 = arith.constant 24 : index
    %c0_198 = arith.constant 0 : index
    %650 = vector.load %arg19[%c24_197, %c0_198] : memref<64x128xf32, #tpu.memory_space<vmem>>, vector<8x128xf32>
    %cst_199 = arith.constant dense<0.000000e+00> : vector<8x128xf32>
    %651 = tpu.matmul %648, %581, %cst_199 {dimension_numbers = #tpu.dot_dimension_numbers<[1], [0], [0], [1], [0, 0, 1, 1], [], []>} : vector<8x32xf32>, vector<32x128xf32>, vector<8x128xf32> -> vector<8x128xf32>
    %652 = arith.addf %650, %651 : vector<8x128xf32>
    %653 = arith.negf %652 : vector<8x128xf32>
    %654 = math.exp %653 : vector<8x128xf32>
    %cst_200 = arith.constant 1.000000e+00 : f32
    %655 = vector.broadcast %cst_200 : f32 to vector<8x128xf32>
    %656 = arith.addf %655, %654 : vector<8x128xf32>
    %657 = arith.divf %655, %656 : vector<8x128xf32>
    %658 = vector.extract_strided_slice %657 {offsets = [0, 0], sizes = [8, 32], strides = [1, 1]} : vector<8x128xf32> to vector<8x32xf32>
    %659 = vector.extract_strided_slice %657 {offsets = [0, 32], sizes = [8, 32], strides = [1, 1]} : vector<8x128xf32> to vector<8x32xf32>
    %660 = vector.extract_strided_slice %657 {offsets = [0, 64], sizes = [8, 32], strides = [1, 1]} : vector<8x128xf32> to vector<8x32xf32>
    %661 = vector.extract_strided_slice %652 {offsets = [0, 96], sizes = [8, 32], strides = [1, 1]} : vector<8x128xf32> to vector<8x32xf32>
    %662 = math.tanh %661 : vector<8x32xf32>
    %663 = arith.mulf %659, %649 : vector<8x32xf32>
    %664 = arith.mulf %658, %662 : vector<8x32xf32>
    %665 = arith.addf %663, %664 : vector<8x32xf32>
    %666 = math.tanh %665 : vector<8x32xf32>
    %667 = arith.mulf %660, %666 : vector<8x32xf32>
    %668 = arith.select %10, %667, %19 : vector<8x32xi1>, vector<8x32xf32>
    %c24_201 = arith.constant 24 : index
    %c0_202 = arith.constant 0 : index
    %669 = vector.load %arg20[%c24_201, %c0_202] : memref<64x32xf32, #tpu.memory_space<vmem>>, vector<8x32xf32>
    tpu.vector_store %arg20[%c24_201, %c0_202], %668 {strides = array<i32>} : memref<64x32xf32, #tpu.memory_space<vmem>>, vector<8x32xf32>,
    %670 = arith.select %10, %667, %648 : vector<8x32xi1>, vector<8x32xf32>
    %671 = arith.select %10, %665, %649 : vector<8x32xi1>, vector<8x32xf32>
    %c32_203 = arith.constant 32 : index
    %c0_204 = arith.constant 0 : index
    %672 = vector.load %arg19[%c32_203, %c0_204] : memref<64x128xf32, #tpu.memory_space<vmem>>, vector<8x128xf32>
    %cst_205 = arith.constant dense<0.000000e+00> : vector<8x128xf32>
    %673 = tpu.matmul %670, %581, %cst_205 {dimension_numbers = #tpu.dot_dimension_numbers<[1], [0], [0], [1], [0, 0, 1, 1], [], []>} : vector<8x32xf32>, vector<32x128xf32>, vector<8x128xf32> -> vector<8x128xf32>
    %674 = arith.addf %672, %673 : vector<8x128xf32>
    %675 = arith.negf %674 : vector<8x128xf32>
    %676 = math.exp %675 : vector<8x128xf32>
    %cst_206 = arith.constant 1.000000e+00 : f32
    %677 = vector.broadcast %cst_206 : f32 to vector<8x128xf32>
    %678 = arith.addf %677, %676 : vector<8x128xf32>
    %679 = arith.divf %677, %678 : vector<8x128xf32>
    %680 = vector.extract_strided_slice %679 {offsets = [0, 0], sizes = [8, 32], strides = [1, 1]} : vector<8x128xf32> to vector<8x32xf32>
    %681 = vector.extract_strided_slice %679 {offsets = [0, 32], sizes = [8, 32], strides = [1, 1]} : vector<8x128xf32> to vector<8x32xf32>
    %682 = vector.extract_strided_slice %679 {offsets = [0, 64], sizes = [8, 32], strides = [1, 1]} : vector<8x128xf32> to vector<8x32xf32>
    %683 = vector.extract_strided_slice %674 {offsets = [0, 96], sizes = [8, 32], strides = [1, 1]} : vector<8x128xf32> to vector<8x32xf32>
    %684 = math.tanh %683 : vector<8x32xf32>
    %685 = arith.mulf %681, %671 : vector<8x32xf32>
    %686 = arith.mulf %680, %684 : vector<8x32xf32>
    %687 = arith.addf %685, %686 : vector<8x32xf32>
    %688 = math.tanh %687 : vector<8x32xf32>
    %689 = arith.mulf %682, %688 : vector<8x32xf32>
    %690 = arith.select %12, %689, %19 : vector<8x32xi1>, vector<8x32xf32>
    %c32_207 = arith.constant 32 : index
    %c0_208 = arith.constant 0 : index
    %691 = vector.load %arg20[%c32_207, %c0_208] : memref<64x32xf32, #tpu.memory_space<vmem>>, vector<8x32xf32>
    tpu.vector_store %arg20[%c32_207, %c0_208], %690 {strides = array<i32>} : memref<64x32xf32, #tpu.memory_space<vmem>>, vector<8x32xf32>,
    %692 = arith.select %12, %689, %670 : vector<8x32xi1>, vector<8x32xf32>
    %693 = arith.select %12, %687, %671 : vector<8x32xi1>, vector<8x32xf32>
    %c40_209 = arith.constant 40 : index
    %c0_210 = arith.constant 0 : index
    %694 = vector.load %arg19[%c40_209, %c0_210] : memref<64x128xf32, #tpu.memory_space<vmem>>, vector<8x128xf32>
    %cst_211 = arith.constant dense<0.000000e+00> : vector<8x128xf32>
    %695 = tpu.matmul %692, %581, %cst_211 {dimension_numbers = #tpu.dot_dimension_numbers<[1], [0], [0], [1], [0, 0, 1, 1], [], []>} : vector<8x32xf32>, vector<32x128xf32>, vector<8x128xf32> -> vector<8x128xf32>
    %696 = arith.addf %694, %695 : vector<8x128xf32>
    %697 = arith.negf %696 : vector<8x128xf32>
    %698 = math.exp %697 : vector<8x128xf32>
    %cst_212 = arith.constant 1.000000e+00 : f32
    %699 = vector.broadcast %cst_212 : f32 to vector<8x128xf32>
    %700 = arith.addf %699, %698 : vector<8x128xf32>
    %701 = arith.divf %699, %700 : vector<8x128xf32>
    %702 = vector.extract_strided_slice %701 {offsets = [0, 0], sizes = [8, 32], strides = [1, 1]} : vector<8x128xf32> to vector<8x32xf32>
    %703 = vector.extract_strided_slice %701 {offsets = [0, 32], sizes = [8, 32], strides = [1, 1]} : vector<8x128xf32> to vector<8x32xf32>
    %704 = vector.extract_strided_slice %701 {offsets = [0, 64], sizes = [8, 32], strides = [1, 1]} : vector<8x128xf32> to vector<8x32xf32>
    %705 = vector.extract_strided_slice %696 {offsets = [0, 96], sizes = [8, 32], strides = [1, 1]} : vector<8x128xf32> to vector<8x32xf32>
    %706 = math.tanh %705 : vector<8x32xf32>
    %707 = arith.mulf %703, %693 : vector<8x32xf32>
    %708 = arith.mulf %702, %706 : vector<8x32xf32>
    %709 = arith.addf %707, %708 : vector<8x32xf32>
    %710 = math.tanh %709 : vector<8x32xf32>
    %711 = arith.mulf %704, %710 : vector<8x32xf32>
    %712 = arith.select %14, %711, %19 : vector<8x32xi1>, vector<8x32xf32>
    %c40_213 = arith.constant 40 : index
    %c0_214 = arith.constant 0 : index
    %713 = vector.load %arg20[%c40_213, %c0_214] : memref<64x32xf32, #tpu.memory_space<vmem>>, vector<8x32xf32>
    tpu.vector_store %arg20[%c40_213, %c0_214], %712 {strides = array<i32>} : memref<64x32xf32, #tpu.memory_space<vmem>>, vector<8x32xf32>,
    %714 = arith.select %14, %711, %692 : vector<8x32xi1>, vector<8x32xf32>
    %715 = arith.select %14, %709, %693 : vector<8x32xi1>, vector<8x32xf32>
    %c48_215 = arith.constant 48 : index
    %c0_216 = arith.constant 0 : index
    %716 = vector.load %arg19[%c48_215, %c0_216] : memref<64x128xf32, #tpu.memory_space<vmem>>, vector<8x128xf32>
    %cst_217 = arith.constant dense<0.000000e+00> : vector<8x128xf32>
    %717 = tpu.matmul %714, %581, %cst_217 {dimension_numbers = #tpu.dot_dimension_numbers<[1], [0], [0], [1], [0, 0, 1, 1], [], []>} : vector<8x32xf32>, vector<32x128xf32>, vector<8x128xf32> -> vector<8x128xf32>
    %718 = arith.addf %716, %717 : vector<8x128xf32>
    %719 = arith.negf %718 : vector<8x128xf32>
    %720 = math.exp %719 : vector<8x128xf32>
    %cst_218 = arith.constant 1.000000e+00 : f32
    %721 = vector.broadcast %cst_218 : f32 to vector<8x128xf32>
    %722 = arith.addf %721, %720 : vector<8x128xf32>
    %723 = arith.divf %721, %722 : vector<8x128xf32>
    %724 = vector.extract_strided_slice %723 {offsets = [0, 0], sizes = [8, 32], strides = [1, 1]} : vector<8x128xf32> to vector<8x32xf32>
    %725 = vector.extract_strided_slice %723 {offsets = [0, 32], sizes = [8, 32], strides = [1, 1]} : vector<8x128xf32> to vector<8x32xf32>
    %726 = vector.extract_strided_slice %723 {offsets = [0, 64], sizes = [8, 32], strides = [1, 1]} : vector<8x128xf32> to vector<8x32xf32>
    %727 = vector.extract_strided_slice %718 {offsets = [0, 96], sizes = [8, 32], strides = [1, 1]} : vector<8x128xf32> to vector<8x32xf32>
    %728 = math.tanh %727 : vector<8x32xf32>
    %729 = arith.mulf %725, %715 : vector<8x32xf32>
    %730 = arith.mulf %724, %728 : vector<8x32xf32>
    %731 = arith.addf %729, %730 : vector<8x32xf32>
    %732 = math.tanh %731 : vector<8x32xf32>
    %733 = arith.mulf %726, %732 : vector<8x32xf32>
    %734 = arith.select %16, %733, %19 : vector<8x32xi1>, vector<8x32xf32>
    %c48_219 = arith.constant 48 : index
    %c0_220 = arith.constant 0 : index
    %735 = vector.load %arg20[%c48_219, %c0_220] : memref<64x32xf32, #tpu.memory_space<vmem>>, vector<8x32xf32>
    tpu.vector_store %arg20[%c48_219, %c0_220], %734 {strides = array<i32>} : memref<64x32xf32, #tpu.memory_space<vmem>>, vector<8x32xf32>,
    %736 = arith.select %16, %733, %714 : vector<8x32xi1>, vector<8x32xf32>
    %737 = arith.select %16, %731, %715 : vector<8x32xi1>, vector<8x32xf32>
    %c56_221 = arith.constant 56 : index
    %c0_222 = arith.constant 0 : index
    %738 = vector.load %arg19[%c56_221, %c0_222] : memref<64x128xf32, #tpu.memory_space<vmem>>, vector<8x128xf32>
    %cst_223 = arith.constant dense<0.000000e+00> : vector<8x128xf32>
    %739 = tpu.matmul %736, %581, %cst_223 {dimension_numbers = #tpu.dot_dimension_numbers<[1], [0], [0], [1], [0, 0, 1, 1], [], []>} : vector<8x32xf32>, vector<32x128xf32>, vector<8x128xf32> -> vector<8x128xf32>
    %740 = arith.addf %738, %739 : vector<8x128xf32>
    %741 = arith.negf %740 : vector<8x128xf32>
    %742 = math.exp %741 : vector<8x128xf32>
    %cst_224 = arith.constant 1.000000e+00 : f32
    %743 = vector.broadcast %cst_224 : f32 to vector<8x128xf32>
    %744 = arith.addf %743, %742 : vector<8x128xf32>
    %745 = arith.divf %743, %744 : vector<8x128xf32>
    %746 = vector.extract_strided_slice %745 {offsets = [0, 0], sizes = [8, 32], strides = [1, 1]} : vector<8x128xf32> to vector<8x32xf32>
    %747 = vector.extract_strided_slice %745 {offsets = [0, 32], sizes = [8, 32], strides = [1, 1]} : vector<8x128xf32> to vector<8x32xf32>
    %748 = vector.extract_strided_slice %745 {offsets = [0, 64], sizes = [8, 32], strides = [1, 1]} : vector<8x128xf32> to vector<8x32xf32>
    %749 = vector.extract_strided_slice %740 {offsets = [0, 96], sizes = [8, 32], strides = [1, 1]} : vector<8x128xf32> to vector<8x32xf32>
    %750 = math.tanh %749 : vector<8x32xf32>
    %751 = arith.mulf %747, %737 : vector<8x32xf32>
    %752 = arith.mulf %746, %750 : vector<8x32xf32>
    %753 = arith.addf %751, %752 : vector<8x32xf32>
    %754 = math.tanh %753 : vector<8x32xf32>
    %755 = arith.mulf %748, %754 : vector<8x32xf32>
    %756 = arith.select %18, %755, %19 : vector<8x32xi1>, vector<8x32xf32>
    %c56_225 = arith.constant 56 : index
    %c0_226 = arith.constant 0 : index
    %757 = vector.load %arg20[%c56_225, %c0_226] : memref<64x32xf32, #tpu.memory_space<vmem>>, vector<8x32xf32>
    tpu.vector_store %arg20[%c56_225, %c0_226], %756 {strides = array<i32>} : memref<64x32xf32, #tpu.memory_space<vmem>>, vector<8x32xf32>,
    %c0_227 = arith.constant 0 : index
    %c0_228 = arith.constant 0 : index
    %758 = vector.load %arg20[%c0_227, %c0_228] : memref<64x32xf32, #tpu.memory_space<vmem>>, vector<64x32xf32>
    %c0_229 = arith.constant 0 : index
    %c0_230 = arith.constant 0 : index
    %759 = vector.load %arg15[%c0_229, %c0_230] : memref<32x128xf32, #tpu.memory_space<vmem>>, vector<32x128xf32>
    %cst_231 = arith.constant dense<0.000000e+00> : vector<64x128xf32>
    %760 = tpu.matmul %758, %759, %cst_231 {dimension_numbers = #tpu.dot_dimension_numbers<[1], [0], [0], [1], [0, 0, 1, 1], [], []>} : vector<64x32xf32>, vector<32x128xf32>, vector<64x128xf32> -> vector<64x128xf32>
    %c0_232 = arith.constant 0 : index
    %c0_233 = arith.constant 0 : index
    %761 = vector.load %arg16[%c0_232, %c0_233] : memref<1x128xf32, #tpu.memory_space<vmem>>, vector<1x128xf32>
    %762 = vector.broadcast %761 : vector<1x128xf32> to vector<64x128xf32>
    %763 = arith.addf %760, %762 : vector<64x128xf32>
    %c0_234 = arith.constant 0 : index
    %c0_235 = arith.constant 0 : index
    %764 = vector.load %arg17[%c0_234, %c0_235] : memref<64x128xf32, #tpu.memory_space<vmem>>, vector<64x128xf32>
    tpu.vector_store %arg17[%c0_234, %c0_235], %763 {strides = array<i32>} : memref<64x128xf32, #tpu.memory_space<vmem>>, vector<64x128xf32>,
    return
  }
}

</mosaic_0001>

<llo_original>
// kernel: lstm_aae_forward.1
$region0: #{lstm_aae_forward.1}
  #allocation0 [shape = 'u32[]', space=smem, size = 0x4, offset = 0x4, fixed_abs, tag = 'smem constant byte address 0x4 - core index']
  #allocation1 [shape = 'u32[144,128]{1,0:T(1,128)}', space=vmem, size = 0x12000, scoped, tag = 'internal scratch']
  #allocation2 [shape = 'f32[64,128]{1,0:T(8,128)}', space=vmem, size = 0x8000, scoped, tag = 'scratch operand']
  #allocation3 [shape = 'f32[64,32]{1,0:T(8,128)}', space=vmem, size = 0x8000, scoped, tag = 'scratch operand']
  %s0 = inlined_call_operand.vmem [shape: s32[64,1], index: 0, kind: input, shape index: {}]
  %s1 = inlined_call_operand.vmem [shape: s32[8,1], index: 1, kind: input, shape index: {}]
  %s2 = inlined_call_operand.vmem [shape: f32[64,128], index: 2, kind: input, shape index: {}]
  %s3 = inlined_call_operand.hbm [shape: f32[64,128], index: 3, kind: input, shape index: {}]
  %s4 = inlined_call_operand.vmem [shape: f32[32,128], index: 4, kind: input, shape index: {}]
  %s5 = inlined_call_operand.vmem [shape: f32[1,128], index: 5, kind: input, shape index: {}]
  %s6 = inlined_call_operand.hbm [shape: f32[32,128], index: 6, kind: input, shape index: {}]
  %s7 = inlined_call_operand.hbm [shape: f32[32,128], index: 7, kind: input, shape index: {}]
  %s8 = inlined_call_operand.vmem [shape: f32[1,128], index: 8, kind: input, shape index: {}]
  %s9 = inlined_call_operand.vmem [shape: f32[32,128], index: 9, kind: input, shape index: {}]
  %s10 = inlined_call_operand.hbm [shape: f32[32,128], index: 10, kind: input, shape index: {}]
  %s11 = inlined_call_operand.hbm [shape: f32[1,128], index: 11, kind: input, shape index: {}]
  %s12 = inlined_call_operand.hbm [shape: f32[32,128], index: 12, kind: input, shape index: {}]
  %s13 = inlined_call_operand.hbm [shape: f32[32,128], index: 13, kind: input, shape index: {}]
  %s14 = inlined_call_operand.vmem [shape: f32[1,128], index: 14, kind: input, shape index: {}]
  %s15 = inlined_call_operand.hbm [shape: f32[32,128], index: 15, kind: input, shape index: {}]
  %s16 = inlined_call_operand.vmem [shape: f32[1,128], index: 16, kind: input, shape index: {}]
  %s17 = inlined_call_operand.vmem [shape: f32[64,128], index: 17, kind: output, shape index: {0}]
  %s18 = inlined_call_operand.hbm [shape: f32[8,32], index: 18, kind: output, shape index: {1}]
  %19 = xla_tuple %s17, %s18
  %s20 = sld [smem:[#allocation0]]
  $region118: #{lstm_aae_forward.1} parent=0
    _
  %s22 = ssub.s32 1, %s20
  %s23 = scalar_select 0, %s22, %s20
  $region1: #{lstm_aae_forward.1} parent=0
    #allocation4 [shape = 'u8[32768]{0}', space=vmem, size = 0x8000, scoped, tag = 'input window, operand 3, single buffered']
    #allocation5 [shape = 's32[1]{0}', space=sflag, size = 0x4, scoped, tag = 'scoped memory for lstm_aae_forward.1']
    #allocation6 [shape = 's32[1]{0}', space=sflag, size = 0x4, scoped, tag = 'scoped memory for lstm_aae_forward.1']
    #allocation7 [shape = 'u8[16384]{0}', space=vmem, size = 0x4000, scoped, tag = 'input window, operand 6, single buffered']
    #allocation8 [shape = 's32[1]{0}', space=sflag, size = 0x4, scoped, tag = 'scoped memory for lstm_aae_forward.1']
    #allocation9 [shape = 'u8[16384]{0}', space=vmem, size = 0x4000, scoped, tag = 'input window, operand 7, single buffered']
    #allocation10 [shape = 'u8[16384]{0}', space=vmem, size = 0x4000, scoped, tag = 'input window, operand 10, single buffered']
    #allocation11 [shape = 's32[1]{0}', space=sflag, size = 0x4, scoped, tag = 'scoped memory for lstm_aae_forward.1']
    #allocation12 [shape = 'u8[512]{0}', space=vmem, size = 0x400, scoped, tag = 'input window, operand 11, single buffered']
    #allocation13 [shape = 'u8[16384]{0}', space=vmem, size = 0x4000, scoped, tag = 'input window, operand 12, single buffered']
    #allocation14 [shape = 's32[1]{0}', space=sflag, size = 0x4, scoped, tag = 'scoped memory for lstm_aae_forward.1']
    #allocation15 [shape = 'u8[16384]{0}', space=vmem, size = 0x4000, scoped, tag = 'input window, operand 13, single buffered']
    #allocation16 [shape = 'u8[16384]{0}', space=vmem, size = 0x4000, scoped, tag = 'input window, operand 15, single buffered']
    #allocation17 [shape = 's32[1]{0}', space=sflag, size = 0x4, scoped, tag = 'scoped memory for lstm_aae_forward.1']
    #allocation18 [shape = 'u8[4096]{0}', space=vmem, size = 0x1000, scoped, tag = 'output window, operand 1, single buffered']
    %24 = vsyncpa [#allocation5], 0
    %25 = vsyncpa [#allocation8], 0
    %26 = vsyncpa [#allocation11], 0
    %27 = vsyncpa [#allocation14], 0
    %28 = vsyncpa [#allocation17], 0
    %29 = vsyncpa [#allocation6], 0
    // Predicated region
    $region2: #{lstm_aae_forward.1} parent=1 // pred_check
      _
    $region3: #{lstm_aae_forward.1} parent=1 // pred_check_branch
      %31 = sbr.rel (0) target = $region5
    $region4: #{lstm_aae_forward.1} parent=1 // pred_region
      _
    $region5: #{lstm_aae_forward.1} parent=1 // pred_fallthru
      _
    // Predicated region
    $region6: #{lstm_aae_forward.1} parent=1 // pred_check
      _
    $region7: #{lstm_aae_forward.1} parent=1 // pred_check_branch
      %33 = sbr.rel (0) target = $region9
    $region8: #{lstm_aae_forward.1} parent=1 // pred_region
      _
    $region9: #{lstm_aae_forward.1} parent=1 // pred_fallthru
      _
    // Predicated region
    $region10: #{lstm_aae_forward.1} parent=1 // pred_check
      _
    $region11: #{lstm_aae_forward.1} parent=1 // pred_check_branch
      %35 = sbr.rel (0) target = $region13
    $region12: #{lstm_aae_forward.1} parent=1 // pred_region
      _
    $region13: #{lstm_aae_forward.1} parent=1 // pred_fallthru
      _
    // Predicated region
    $region14: #{lstm_aae_forward.1} parent=1 // pred_check
      _
    $region15: #{lstm_aae_forward.1} parent=1 // pred_check_branch
      %37 = sbr.rel (0) target = $region17
    $region16: #{lstm_aae_forward.1} parent=1 // pred_region
      %s39 = ssub.s32 1024, 1024
      %40 = vsyncadd [#allocation5], %s39
      %s41 = sshll.u32 [#allocation4], 4
      %s42 = int_to_ptr.vmem [resolvable:$true] %s41
      %47 = dma.hbm_to_vmem [thread:$0]  %s3, 1024, %s42, [#allocation5], 128, 128, 8
    $region17: #{lstm_aae_forward.1} parent=1 // pred_fallthru
      _
    // Predicated region
    $region18: #{lstm_aae_forward.1} parent=1 // pred_check
      _
    $region19: #{lstm_aae_forward.1} parent=1 // pred_check_branch
      %49 = sbr.rel (0) target = $region21
    $region20: #{lstm_aae_forward.1} parent=1 // pred_region
      _
    $region21: #{lstm_aae_forward.1} parent=1 // pred_fallthru
      _
    // Predicated region
    $region22: #{lstm_aae_forward.1} parent=1 // pred_check
      _
    $region23: #{lstm_aae_forward.1} parent=1 // pred_check_branch
      %51 = sbr.rel (0) target = $region25
    $region24: #{lstm_aae_forward.1} parent=1 // pred_region
      _
    $region25: #{lstm_aae_forward.1} parent=1 // pred_fallthru
      _
    // Predicated region
    $region26: #{lstm_aae_forward.1} parent=1 // pred_check
      _
    $region27: #{lstm_aae_forward.1} parent=1 // pred_check_branch
      %53 = sbr.rel (0) target = $region29
    $region28: #{lstm_aae_forward.1} parent=1 // pred_region
      %s55 = ssub.s32 512, 512
      %56 = vsyncadd [#allocation8], %s55
      %s57 = sshll.u32 [#allocation7], 4
      %s58 = int_to_ptr.vmem [resolvable:$true] %s57
      %63 = dma.hbm_to_vmem [thread:$0]  %s6, 512, %s58, [#allocation8], 128, 128, 8
    $region29: #{lstm_aae_forward.1} parent=1 // pred_fallthru
      _
    // Predicated region
    $region30: #{lstm_aae_forward.1} parent=1 // pred_check
      _
    $region31: #{lstm_aae_forward.1} parent=1 // pred_check_branch
      %65 = sbr.rel (0) target = $region33
    $region32: #{lstm_aae_forward.1} parent=1 // pred_region
      %s67 = ssub.s32 512, 512
      %68 = vsyncadd [#allocation8], %s67
      %s69 = sshll.u32 [#allocation9], 4
      %s70 = int_to_ptr.vmem [resolvable:$true] %s69
      %75 = dma.hbm_to_vmem [thread:$0]  %s7, 512, %s70, [#allocation8], 128, 128, 8
    $region33: #{lstm_aae_forward.1} parent=1 // pred_fallthru
      _
    // Predicated region
    $region34: #{lstm_aae_forward.1} parent=1 // pred_check
      _
    $region35: #{lstm_aae_forward.1} parent=1 // pred_check_branch
      %77 = sbr.rel (0) target = $region37
    $region36: #{lstm_aae_forward.1} parent=1 // pred_region
      _
    $region37: #{lstm_aae_forward.1} parent=1 // pred_fallthru
      _
    // Predicated region
    $region38: #{lstm_aae_forward.1} parent=1 // pred_check
      _
    $region39: #{lstm_aae_forward.1} parent=1 // pred_check_branch
      %79 = sbr.rel (0) target = $region41
    $region40: #{lstm_aae_forward.1} parent=1 // pred_region
      _
    $region41: #{lstm_aae_forward.1} parent=1 // pred_fallthru
      _
    // Predicated region
    $region42: #{lstm_aae_forward.1} parent=1 // pred_check
      _
    $region43: #{lstm_aae_forward.1} parent=1 // pred_check_branch
      %81 = sbr.rel (0) target = $region45
    $region44: #{lstm_aae_forward.1} parent=1 // pred_region
      %s83 = ssub.s32 512, 512
      %84 = vsyncadd [#allocation11], %s83
      %s85 = sshll.u32 [#allocation10], 4
      %s86 = int_to_ptr.vmem [resolvable:$true] %s85
      %91 = dma.hbm_to_vmem [thread:$0]  %s10, 512, %s86, [#allocation11], 128, 128, 8
    $region45: #{lstm_aae_forward.1} parent=1 // pred_fallthru
      _
    // Predicated region
    $region46: #{lstm_aae_forward.1} parent=1 // pred_check
      _
    $region47: #{lstm_aae_forward.1} parent=1 // pred_check_branch
      %93 = sbr.rel (0) target = $region49
    $region48: #{lstm_aae_forward.1} parent=1 // pred_region
      %s95 = ssub.s32 16, 16
      %96 = vsyncadd [#allocation11], %s95
      %s98 = sshll.u32 [#allocation12], 4
      %s99 = int_to_ptr.vmem [resolvable:$true] %s98
      %101 = dma.hbm_to_vmem [thread:$0]  %s11, 16, %s99, [#allocation11]
    $region49: #{lstm_aae_forward.1} parent=1 // pred_fallthru
      _
    // Predicated region
    $region50: #{lstm_aae_forward.1} parent=1 // pred_check
      _
    $region51: #{lstm_aae_forward.1} parent=1 // pred_check_branch
      %103 = sbr.rel (0) target = $region53
    $region52: #{lstm_aae_forward.1} parent=1 // pred_region
      %s105 = ssub.s32 512, 512
      %106 = vsyncadd [#allocation14], %s105
      %s107 = sshll.u32 [#allocation13], 4
      %s108 = int_to_ptr.vmem [resolvable:$true] %s107
      %113 = dma.hbm_to_vmem [thread:$0]  %s12, 512, %s108, [#allocation14], 128, 128, 8
    $region53: #{lstm_aae_forward.1} parent=1 // pred_fallthru
      _
    // Predicated region
    $region54: #{lstm_aae_forward.1} parent=1 // pred_check
      _
    $region55: #{lstm_aae_forward.1} parent=1 // pred_check_branch
      %115 = sbr.rel (0) target = $region57
    $region56: #{lstm_aae_forward.1} parent=1 // pred_region
      %s117 = ssub.s32 512, 512
      %118 = vsyncadd [#allocation14], %s117
      %s119 = sshll.u32 [#allocation15], 4
      %s120 = int_to_ptr.vmem [resolvable:$true] %s119
      %125 = dma.hbm_to_vmem [thread:$0]  %s13, 512, %s120, [#allocation14], 128, 128, 8
    $region57: #{lstm_aae_forward.1} parent=1 // pred_fallthru
      _
    // Predicated region
    $region58: #{lstm_aae_forward.1} parent=1 // pred_check
      _
    $region59: #{lstm_aae_forward.1} parent=1 // pred_check_branch
      %127 = sbr.rel (0) target = $region61
    $region60: #{lstm_aae_forward.1} parent=1 // pred_region
      _
    $region61: #{lstm_aae_forward.1} parent=1 // pred_fallthru
      _
    // Predicated region
    $region62: #{lstm_aae_forward.1} parent=1 // pred_check
      _
    $region63: #{lstm_aae_forward.1} parent=1 // pred_check_branch
      %129 = sbr.rel (0) target = $region65
    $region64: #{lstm_aae_forward.1} parent=1 // pred_region
      %s131 = ssub.s32 512, 512
      %132 = vsyncadd [#allocation17], %s131
      %s133 = sshll.u32 [#allocation16], 4
      %s134 = int_to_ptr.vmem [resolvable:$true] %s133
      %139 = dma.hbm_to_vmem [thread:$0]  %s15, 512, %s134, [#allocation17], 128, 128, 8
    $region65: #{lstm_aae_forward.1} parent=1 // pred_fallthru
      _
    // Predicated region
    $region66: #{lstm_aae_forward.1} parent=1 // pred_check
      _
    $region67: #{lstm_aae_forward.1} parent=1 // pred_check_branch
      %141 = sbr.rel (0) target = $region69
    $region68: #{lstm_aae_forward.1} parent=1 // pred_region
      _
    $region69: #{lstm_aae_forward.1} parent=1 // pred_fallthru
      _
    // Predicated region
    $region70: #{lstm_aae_forward.1} parent=1 // pred_check
      _
    $region71: #{lstm_aae_forward.1} parent=1 // pred_check_branch
      %143 = sbr.rel (0) target = $region73
    $region72: #{lstm_aae_forward.1} parent=1 // pred_region
      %144 = dma.done [#allocation5], 1024
    $region73: #{lstm_aae_forward.1} parent=1 // pred_fallthru
      _
    // Predicated region
    $region74: #{lstm_aae_forward.1} parent=1 // pred_check
      _
    $region75: #{lstm_aae_forward.1} parent=1 // pred_check_branch
      %146 = sbr.rel (0) target = $region77
    $region76: #{lstm_aae_forward.1} parent=1 // pred_region
      %147 = dma.done [#allocation8], 512
    $region77: #{lstm_aae_forward.1} parent=1 // pred_fallthru
      _
    // Predicated region
    $region78: #{lstm_aae_forward.1} parent=1 // pred_check
      _
    $region79: #{lstm_aae_forward.1} parent=1 // pred_check_branch
      %149 = sbr.rel (0) target = $region81
    $region80: #{lstm_aae_forward.1} parent=1 // pred_region
      %150 = dma.done [#allocation8], 512
    $region81: #{lstm_aae_forward.1} parent=1 // pred_fallthru
      _
    // Predicated region
    $region82: #{lstm_aae_forward.1} parent=1 // pred_check
      _
    $region83: #{lstm_aae_forward.1} parent=1 // pred_check_branch
      %152 = sbr.rel (0) target = $region85
    $region84: #{lstm_aae_forward.1} parent=1 // pred_region
      %153 = dma.done [#allocation11], 512
    $region85: #{lstm_aae_forward.1} parent=1 // pred_fallthru
      _
    // Predicated region
    $region86: #{lstm_aae_forward.1} parent=1 // pred_check
      _
    $region87: #{lstm_aae_forward.1} parent=1 // pred_check_branch
      %155 = sbr.rel (0) target = $region89
    $region88: #{lstm_aae_forward.1} parent=1 // pred_region
      %156 = dma.done [#allocation11], 16
    $region89: #{lstm_aae_forward.1} parent=1 // pred_fallthru
      _
    // Predicated region
    $region90: #{lstm_aae_forward.1} parent=1 // pred_check
      _
    $region91: #{lstm_aae_forward.1} parent=1 // pred_check_branch
      %158 = sbr.rel (0) target = $region93
    $region92: #{lstm_aae_forward.1} parent=1 // pred_region
      %159 = dma.done [#allocation14], 512
    $region93: #{lstm_aae_forward.1} parent=1 // pred_fallthru
      _
    // Predicated region
    $region94: #{lstm_aae_forward.1} parent=1 // pred_check
      _
    $region95: #{lstm_aae_forward.1} parent=1 // pred_check_branch
      %161 = sbr.rel (0) target = $region97
    $region96: #{lstm_aae_forward.1} parent=1 // pred_region
      %162 = dma.done [#allocation14], 512
    $region97: #{lstm_aae_forward.1} parent=1 // pred_fallthru
      _
    // Predicated region
    $region98: #{lstm_aae_forward.1} parent=1 // pred_check
      _
    $region99: #{lstm_aae_forward.1} parent=1 // pred_check_branch
      %164 = sbr.rel (0) target = $region101
    $region100: #{lstm_aae_forward.1} parent=1 // pred_region
      %165 = dma.done [#allocation17], 512
    $region101: #{lstm_aae_forward.1} parent=1 // pred_fallthru
      _
    %v166 = vld [vmem:[%s1] sm:$0xff]
    %167 = vset.pattern.permute.xlu0 0
    %168 = vperm.xlu0 %167, %v166
    %v169 = vpop.permute.xlu0 %168
    %vm170 = vcmp.gt.s32.totalorder %v169, 0
    %vm171 = vcmp.gt.s32.totalorder %v169, 1
    %vm172 = vcmp.gt.s32.totalorder %v169, 2
    %vm173 = vcmp.gt.s32.totalorder %v169, 3
    %vm174 = vcmp.gt.s32.totalorder %v169, 4
    %vm175 = vcmp.gt.s32.totalorder %v169, 5
    %vm176 = vcmp.gt.s32.totalorder %v169, 6
    %vm177 = vcmp.gt.s32.totalorder %v169, 7
    %v178 = vld [vmem:[%s0] sm:$0xff]
    %v179 = vld [vmem:[%s0 + $0x8] sm:$0xff]
    %v180 = vld [vmem:[%s0 + $0x10] sm:$0xff]
    %v181 = vld [vmem:[%s0 + $0x18] sm:$0xff]
    %v182 = vld [vmem:[%s0 + $0x20] sm:$0xff]
    %v183 = vld [vmem:[%s0 + $0x28] sm:$0xff]
    %v184 = vld [vmem:[%s0 + $0x30] sm:$0xff]
    %v185 = vld [vmem:[%s0 + $0x38] sm:$0xff]
    %v186 = vlaneseq
    %v187 = vand.u32 %v186, 127
    %188 = vset.pattern.permute.xlu0 0
    %189 = vperm.xlu0 %188, %v178
    %v190 = vpop.permute.xlu0 %189
    %191 = vset.pattern.permute.xlu0 0
    %192 = vperm.xlu0 %191, %v179
    %v193 = vpop.permute.xlu0 %192
    %194 = vset.pattern.permute.xlu0 0
    %195 = vperm.xlu0 %194, %v180
    %v196 = vpop.permute.xlu0 %195
    %197 = vset.pattern.permute.xlu0 0
    %198 = vperm.xlu0 %197, %v181
    %v199 = vpop.permute.xlu0 %198
    %200 = vset.pattern.permute.xlu0 0
    %201 = vperm.xlu0 %200, %v182
    %v202 = vpop.permute.xlu0 %201
    %203 = vset.pattern.permute.xlu0 0
    %204 = vperm.xlu0 %203, %v183
    %v205 = vpop.permute.xlu0 %204
    %206 = vset.pattern.permute.xlu0 0
    %207 = vperm.xlu0 %206, %v184
    %v208 = vpop.permute.xlu0 %207
    %209 = vset.pattern.permute.xlu0 0
    %210 = vperm.xlu0 %209, %v185
    %v211 = vpop.permute.xlu0 %210
    %vm212 = vcmp.eq.s32.totalorder %v190, %v187
    %vm213 = vcmp.eq.s32.totalorder %v193, %v187
    %vm214 = vcmp.eq.s32.totalorder %v196, %v187
    %vm215 = vcmp.eq.s32.totalorder %v199, %v187
    %vm216 = vcmp.eq.s32.totalorder %v202, %v187
    %vm217 = vcmp.eq.s32.totalorder %v205, %v187
    %vm218 = vcmp.eq.s32.totalorder %v208, %v187
    %vm219 = vcmp.eq.s32.totalorder %v211, %v187
    %v220 = vsel %vm212, 1, 0
    %v221 = vsel %vm213, 1, 0
    %v222 = vsel %vm214, 1, 0
    %v223 = vsel %vm215, 1, 0
    %v224 = vsel %vm216, 1, 0
    %v225 = vsel %vm217, 1, 0
    %v226 = vsel %vm218, 1, 0
    %v227 = vsel %vm219, 1, 0
    %v228 = vcvt.s32.f32 %v220
    %v229 = vcvt.s32.f32 %v221
    %v230 = vcvt.s32.f32 %v222
    %v231 = vcvt.s32.f32 %v223
    %v232 = vcvt.s32.f32 %v224
    %v233 = vcvt.s32.f32 %v225
    %v234 = vcvt.s32.f32 %v226
    %v235 = vcvt.s32.f32 %v227
    %v236 = vld [vmem:[%s2] sm:$0xff]
    %v237 = vld [vmem:[%s2 + $0x8] sm:$0xff]
    %v238 = vld [vmem:[%s2 + $0x10] sm:$0xff]
    %v239 = vld [vmem:[%s2 + $0x18] sm:$0xff]
    %v240 = vld [vmem:[%s2 + $0x20] sm:$0xff]
    %v241 = vld [vmem:[%s2 + $0x28] sm:$0xff]
    %v242 = vld [vmem:[%s2 + $0x30] sm:$0xff]
    %v243 = vld [vmem:[%s2 + $0x38] sm:$0xff]
    %v244 = vld [vmem:[%s5] sm:$0x1]
    %v246 = vlaneseq
    %v247 = vshrl.u32 %v246, 7
    %v248 = vsub.s32 0, %v247
    %v249 = vrot.slane %v244, %v248
    %vm251 = vcmask 523264
    %v253 = vsel %vm251, %v228, 0
    %v256 = vsel %vm251, %v229, 0
    %v259 = vsel %vm251, %v230, 0
    %v262 = vsel %vm251, %v231, 0
    %v265 = vsel %vm251, %v232, 0
    %v268 = vsel %vm251, %v233, 0
    %v271 = vsel %vm251, %v234, 0
    %v274 = vsel %vm251, %v235, 0
    %276 = vmatprep.subr.mxu0 0.0
    %277 = vmatpush1.msra.mxu0 %v236
    %278 = vmatprep.subr.mxu0 0.0
    %279 = vmatpush1.msra.mxu0 %v237
    %280 = vmatprep.subr.mxu0 0.0
    %281 = vmatpush1.msra.mxu0 %v238
    %282 = vmatprep.subr.mxu0 0.0
    %283 = vmatpush1.msra.mxu0 %v239
    %284 = vmatprep.subr.mxu0 0.0
    %285 = vmatpush1.msra.mxu0 %v240
    %286 = vmatprep.subr.mxu0 0.0
    %287 = vmatpush1.msra.mxu0 %v241
    %288 = vmatprep.subr.mxu0 0.0
    %289 = vmatpush1.msra.mxu0 %v242
    %290 = vmatprep.subr.mxu0 0.0
    %291 = vmatpush1.msra.mxu0 %v243
    %292 = vmatprep.subr.mxu0 0.0
    %293 = vmatpush1.msra.mxu0 0.0
    %294 = vmatprep.subr.mxu0 0.0
    %295 = vmatpush1.msra.mxu0 0.0
    %296 = vmatprep.subr.mxu0 0.0
    %297 = vmatpush1.msra.mxu0 0.0
    %298 = vmatprep.subr.mxu0 0.0
    %299 = vmatpush1.msra.mxu0 0.0
    %300 = vmatprep.subr.mxu0 0.0
    %301 = vmatpush1.msra.mxu0 0.0
    %302 = vmatprep.subr.mxu0 0.0
    %303 = vmatpush1.msra.mxu0 0.0
    %304 = vmatprep.subr.mxu0 0.0
    %305 = vmatpush1.msra.mxu0 0.0
    %306 = vmatprep.subr.mxu0 0.0
    %307 = vmatpush1.msra.mxu0 0.0
    %308 = vmatprep.subr.mxu0 0.0
    %309 = vmatpush1.msra.mxu0 0.0
    %310 = vmatprep.subr.mxu0 0.0
    %311 = vmatpush1.msra.mxu0 0.0
    %312 = vmatprep.subr.mxu0 0.0
    %313 = vmatpush1.msra.mxu0 0.0
    %314 = vmatprep.subr.mxu0 0.0
    %315 = vmatpush1.msra.mxu0 0.0
    %316 = vmatprep.subr.mxu0 0.0
    %317 = vmatpush1.msra.mxu0 0.0
    %318 = vmatprep.subr.mxu0 0.0
    %319 = vmatpush1.msra.mxu0 0.0
    %320 = vmatprep.subr.mxu0 0.0
    %321 = vmatpush1.msra.mxu0 0.0
    %322 = vmatprep.subr.mxu0 0.0
    %323 = vmatpush1.msra.mxu0 0.0
    %324 = vmatprep.subr.mxu0 0.0
    %325 = vmatpush1.msra.mxu0 0.0
    %326 = vmatprep.subr.mxu0 0.0
    %327 = vmatpush1.msra.mxu0 0.0
    %328 = vmatprep.subr.mxu0 0.0
    %329 = vmatpush1.msra.mxu0 0.0
    %330 = vmatprep.subr.mxu0 0.0
    %331 = vmatpush1.msra.mxu0 0.0
    %332 = vmatprep.subr.mxu0 0.0
    %333 = vmatpush1.msra.mxu0 0.0
    %334 = vmatprep.subr.mxu0 0.0
    %335 = vmatpush1.msra.mxu0 0.0
    %336 = vmatprep.subr.mxu0 0.0
    %337 = vmatpush1.msra.mxu0 0.0
    %338 = vmatprep.subr.mxu0 0.0
    %339 = vmatpush1.msra.mxu0 0.0
    %340 = vmatprep.mubr.f32.mxu0 0.0
    %341 = vmatmul.mubr.f32.gmra.mrb[0].mxu0 %v253
    %v342 = vpop.f32.mrb[0].mxu0
    %v343 = vadd.f32 %v249, %v342
    %v344 = vpop.f32.mrb[0].mxu0
    %345 = vmatprep.mubr.f32.mxu0 0.0
    %346 = vmatmul.mubr.f32.gmra.mrb[0].mxu0 %v256
    %v347 = vpop.f32.mrb[0].mxu0
    %v348 = vadd.f32 %v249, %v347
    %v349 = vpop.f32.mrb[0].mxu0
    %350 = vmatprep.mubr.f32.mxu0 0.0
    %351 = vmatmul.mubr.f32.gmra.mrb[0].mxu0 %v259
    %v352 = vpop.f32.mrb[0].mxu0
    %v353 = vadd.f32 %v249, %v352
    %v354 = vpop.f32.mrb[0].mxu0
    %355 = vmatprep.mubr.f32.mxu0 0.0
    %356 = vmatmul.mubr.f32.gmra.mrb[0].mxu0 %v262
    %v357 = vpop.f32.mrb[0].mxu0
    %v358 = vadd.f32 %v249, %v357
    %v359 = vpop.f32.mrb[0].mxu0
    %360 = vmatprep.mubr.f32.mxu0 0.0
    %361 = vmatmul.mubr.f32.gmra.mrb[0].mxu0 %v265
    %v362 = vpop.f32.mrb[0].mxu0
    %v363 = vadd.f32 %v249, %v362
    %v364 = vpop.f32.mrb[0].mxu0
    %365 = vmatprep.mubr.f32.mxu0 0.0
    %366 = vmatmul.mubr.f32.gmra.mrb[0].mxu0 %v268
    %v367 = vpop.f32.mrb[0].mxu0
    %v368 = vadd.f32 %v249, %v367
    %v369 = vpop.f32.mrb[0].mxu0
    %370 = vmatprep.mubr.f32.mxu0 0.0
    %371 = vmatmul.mubr.f32.gmra.mrb[0].mxu0 %v271
    %v372 = vpop.f32.mrb[0].mxu0
    %v373 = vadd.f32 %v249, %v372
    %v374 = vpop.f32.mrb[0].mxu0
    %375 = vmatprep.mubr.f32.mxu0 0.0
    %376 = vmatmul.mubr.f32.gmra.mrb[0].mxu0 %v274
    %v377 = vpop.f32.mrb[0].mxu0
    %v378 = vadd.f32 %v249, %v377
    %v379 = vpop.f32.mrb[0].mxu0
    %380 = vdwg.mxu0
    %381 = vst [vmem:[#allocation2] sm:$0xff] %v343
    %382 = vst [vmem:[#allocation2 + $0x8] sm:$0xff] %v348
    %383 = vst [vmem:[#allocation2 + $0x10] sm:$0xff] %v353
    %384 = vst [vmem:[#allocation2 + $0x18] sm:$0xff] %v358
    %385 = vst [vmem:[#allocation2 + $0x20] sm:$0xff] %v363
    %386 = vst [vmem:[#allocation2 + $0x28] sm:$0xff] %v368
    %387 = vst [vmem:[#allocation2 + $0x30] sm:$0xff] %v373
    %388 = vst [vmem:[#allocation2 + $0x38] sm:$0xff] %v378
    %v389 = vld [vmem:[%s4] sm:$0xff]
    %v390 = vld [vmem:[%s4 + $0x8] sm:$0xff]
    %v391 = vld [vmem:[%s4 + $0x10] sm:$0xff]
    %v392 = vld [vmem:[%s4 + $0x18] sm:$0xff]
    %v393 = vld [vmem:[#allocation2] sm:$0xff]
    %vm394 = vcmask 261120
    %v396 = vsel %vm394, 0.0, 0
    %398 = vmatprep.subr.mxu0 0.0
    %399 = vmatpush1.msra.mxu0 %v389
    %400 = vmatprep.subr.mxu0 0.0
    %401 = vmatpush1.msra.mxu0 %v390
    %402 = vmatprep.subr.mxu0 0.0
    %403 = vmatpush1.msra.mxu0 %v391
    %404 = vmatprep.subr.mxu0 0.0
    %405 = vmatpush1.msra.mxu0 %v392
    %406 = vmatprep.subr.mxu0 0.0
    %407 = vmatpush1.msra.mxu0 0.0
    %408 = vmatprep.subr.mxu0 0.0
    %409 = vmatpush1.msra.mxu0 0.0
    %410 = vmatprep.subr.mxu0 0.0
    %411 = vmatpush1.msra.mxu0 0.0
    %412 = vmatprep.subr.mxu0 0.0
    %413 = vmatpush1.msra.mxu0 0.0
    %414 = vmatprep.subr.mxu0 0.0
    %415 = vmatpush1.msra.mxu0 0.0
    %416 = vmatprep.subr.mxu0 0.0
    %417 = vmatpush1.msra.mxu0 0.0
    %418 = vmatprep.subr.mxu0 0.0
    %419 = vmatpush1.msra.mxu0 0.0
    %420 = vmatprep.subr.mxu0 0.0
    %421 = vmatpush1.msra.mxu0 0.0
    %422 = vmatprep.subr.mxu0 0.0
    %423 = vmatpush1.msra.mxu0 0.0
    %424 = vmatprep.subr.mxu0 0.0
    %425 = vmatpush1.msra.mxu0 0.0
    %426 = vmatprep.subr.mxu0 0.0
    %427 = vmatpush1.msra.mxu0 0.0
    %428 = vmatprep.subr.mxu0 0.0
    %429 = vmatpush1.msra.mxu0 0.0
    %430 = vmatprep.subr.mxu0 0.0
    %431 = vmatpush1.msra.mxu0 0.0
    %432 = vmatprep.subr.mxu0 0.0
    %433 = vmatpush1.msra.mxu0 0.0
    %434 = vmatprep.subr.mxu0 0.0
    %435 = vmatpush1.msra.mxu0 0.0
    %436 = vmatprep.subr.mxu0 0.0
    %437 = vmatpush1.msra.mxu0 0.0
    %438 = vmatprep.subr.mxu0 0.0
    %439 = vmatpush1.msra.mxu0 0.0
    %440 = vmatprep.subr.mxu0 0.0
    %441 = vmatpush1.msra.mxu0 0.0
    %442 = vmatprep.subr.mxu0 0.0
    %443 = vmatpush1.msra.mxu0 0.0
    %444 = vmatprep.subr.mxu0 0.0
    %445 = vmatpush1.msra.mxu0 0.0
    %446 = vmatprep.subr.mxu0 0.0
    %447 = vmatpush1.msra.mxu0 0.0
    %448 = vmatprep.subr.mxu0 0.0
    %449 = vmatpush1.msra.mxu0 0.0
    %450 = vmatprep.subr.mxu0 0.0
    %451 = vmatpush1.msra.mxu0 0.0
    %452 = vmatprep.subr.mxu0 0.0
    %453 = vmatpush1.msra.mxu0 0.0
    %454 = vmatprep.subr.mxu0 0.0
    %455 = vmatpush1.msra.mxu0 0.0
    %456 = vmatprep.subr.mxu0 0.0
    %457 = vmatpush1.msra.mxu0 0.0
    %458 = vmatprep.subr.mxu0 0.0
    %459 = vmatpush1.msra.mxu0 0.0
    %460 = vmatprep.subr.mxu0 0.0
    %461 = vmatpush1.msra.mxu0 0.0
    %462 = vmatprep.mubr.f32.mxu0 0.0
    %463 = vmatmul.mubr.f32.gmra.mrb[0].mxu0 %v396
    %v464 = vpop.f32.mrb[0].mxu0
    %v465 = vadd.f32 0.0, %v464
    %v466 = vpop.f32.mrb[0].mxu0
    %467 = vdwg.mxu0
    %v468 = vadd.f32 %v393, %v465
    %v469 = vxor.u32 %v468, 2147483648
    %v470 = vmul.f32 %v469, 1.442695
    %v471 = vpow.pop %v470
    %v472 = vadd.f32 %v471, 1.0
    %v473 = vrcp.pop %v472
    %v474 = vmul.f32 1.0, %v473
    %v475 = vtanh.pop %v468
    %v476 = vmul.f32 %v474, 0.0
    %478 = vrot.lane.b32.xlu0 %v475, 32
    %v479 = vpop.permute.xlu0 %478
    %v481 = vmul.f32 %v474, %v479
    %483 = vrot.lane.b32.xlu0 %v481, 32
    %v484 = vpop.permute.xlu0 %483
    %v486 = vadd.f32 %v476, %v484
    %v487 = vtanh.pop %v486
    %489 = vrot.lane.b32.xlu0 %v487, 32
    %v490 = vpop.permute.xlu0 %489
    %v492 = vmul.f32 %v474, %v490
    %v493 = vsel %vm170, %v492, 0.0
    %495 = vrot.lane.b32.xlu0 %v493, 64
    %v496 = vpop.permute.xlu0 %495
    %498 = vst.msk [vmem:[#allocation3] sm:$0xff] %vm394, %v496
    %v499 = vsel %vm170, %v486, 0.0
    %v500 = vld [vmem:[#allocation2 + $0x8] sm:$0xff]
    %v501 = vsel %vm394, %v496, 0
    %503 = vmatprep.subr.mxu0 0.0
    %504 = vmatpush1.msra.mxu0 %v389
    %505 = vmatprep.subr.mxu0 0.0
    %506 = vmatpush1.msra.mxu0 %v390
    %507 = vmatprep.subr.mxu0 0.0
    %508 = vmatpush1.msra.mxu0 %v391
    %509 = vmatprep.subr.mxu0 0.0
    %510 = vmatpush1.msra.mxu0 %v392
    %511 = vmatprep.subr.mxu0 0.0
    %512 = vmatpush1.msra.mxu0 0.0
    %513 = vmatprep.subr.mxu0 0.0
    %514 = vmatpush1.msra.mxu0 0.0
    %515 = vmatprep.subr.mxu0 0.0
    %516 = vmatpush1.msra.mxu0 0.0
    %517 = vmatprep.subr.mxu0 0.0
    %518 = vmatpush1.msra.mxu0 0.0
    %519 = vmatprep.subr.mxu0 0.0
    %520 = vmatpush1.msra.mxu0 0.0
    %521 = vmatprep.subr.mxu0 0.0
    %522 = vmatpush1.msra.mxu0 0.0
    %523 = vmatprep.subr.mxu0 0.0
    %524 = vmatpush1.msra.mxu0 0.0
    %525 = vmatprep.subr.mxu0 0.0
    %526 = vmatpush1.msra.mxu0 0.0
    %527 = vmatprep.subr.mxu0 0.0
    %528 = vmatpush1.msra.mxu0 0.0
    %529 = vmatprep.subr.mxu0 0.0
    %530 = vmatpush1.msra.mxu0 0.0
    %531 = vmatprep.subr.mxu0 0.0
    %532 = vmatpush1.msra.mxu0 0.0
    %533 = vmatprep.subr.mxu0 0.0
    %534 = vmatpush1.msra.mxu0 0.0
    %535 = vmatprep.subr.mxu0 0.0
    %536 = vmatpush1.msra.mxu0 0.0
    %537 = vmatprep.subr.mxu0 0.0
    %538 = vmatpush1.msra.mxu0 0.0
    %539 = vmatprep.subr.mxu0 0.0
    %540 = vmatpush1.msra.mxu0 0.0
    %541 = vmatprep.subr.mxu0 0.0
    %542 = vmatpush1.msra.mxu0 0.0
    %543 = vmatprep.subr.mxu0 0.0
    %544 = vmatpush1.msra.mxu0 0.0
    %545 = vmatprep.subr.mxu0 0.0
    %546 = vmatpush1.msra.mxu0 0.0
    %547 = vmatprep.subr.mxu0 0.0
    %548 = vmatpush1.msra.mxu0 0.0
    %549 = vmatprep.subr.mxu0 0.0
    %550 = vmatpush1.msra.mxu0 0.0
    %551 = vmatprep.subr.mxu0 0.0
    %552 = vmatpush1.msra.mxu0 0.0
    %553 = vmatprep.subr.mxu0 0.0
    %554 = vmatpush1.msra.mxu0 0.0
    %555 = vmatprep.subr.mxu0 0.0
    %556 = vmatpush1.msra.mxu0 0.0
    %557 = vmatprep.subr.mxu0 0.0
    %558 = vmatpush1.msra.mxu0 0.0
    %559 = vmatprep.subr.mxu0 0.0
    %560 = vmatpush1.msra.mxu0 0.0
    %561 = vmatprep.subr.mxu0 0.0
    %562 = vmatpush1.msra.mxu0 0.0
    %563 = vmatprep.subr.mxu0 0.0
    %564 = vmatpush1.msra.mxu0 0.0
    %565 = vmatprep.subr.mxu0 0.0
    %566 = vmatpush1.msra.mxu0 0.0
    %567 = vmatprep.mubr.f32.mxu0 0.0
    %568 = vmatmul.mubr.f32.gmra.mrb[0].mxu0 %v501
    %v569 = vpop.f32.mrb[0].mxu0
    %v570 = vadd.f32 0.0, %v569
    %v571 = vpop.f32.mrb[0].mxu0
    %572 = vdwg.mxu0
    %v573 = vadd.f32 %v500, %v570
    %v574 = vxor.u32 %v573, 2147483648
    %v575 = vmul.f32 %v574, 1.442695
    %v576 = vpow.pop %v575
    %v577 = vadd.f32 %v576, 1.0
    %v578 = vrcp.pop %v577
    %v579 = vmul.f32 1.0, %v578
    %v580 = vtanh.pop %v573
    %v581 = vmul.f32 %v579, %v499
    %583 = vrot.lane.b32.xlu0 %v580, 32
    %v584 = vpop.permute.xlu0 %583
    %v586 = vmul.f32 %v579, %v584
    %588 = vrot.lane.b32.xlu0 %v586, 32
    %v589 = vpop.permute.xlu0 %588
    %v591 = vadd.f32 %v581, %v589
    %v592 = vtanh.pop %v591
    %594 = vrot.lane.b32.xlu0 %v592, 32
    %v595 = vpop.permute.xlu0 %594
    %v597 = vmul.f32 %v579, %v595
    %v598 = vsel %vm171, %v597, 0.0
    %600 = vrot.lane.b32.xlu0 %v598, 64
    %v601 = vpop.permute.xlu0 %600
    %603 = vst.msk [vmem:[#allocation3 + $0x8] sm:$0xff] %vm394, %v601
    %v604 = vsel %vm171, %v597, %v493
    %v605 = vsel %vm171, %v591, %v499
    %v606 = vld [vmem:[#allocation2 + $0x10] sm:$0xff]
    %608 = vrot.lane.b32.xlu0 %v604, 64
    %v609 = vpop.permute.xlu0 %608
    %v610 = vsel %vm394, %v609, 0
    %612 = vmatprep.subr.mxu0 0.0
    %613 = vmatpush1.msra.mxu0 %v389
    %614 = vmatprep.subr.mxu0 0.0
    %615 = vmatpush1.msra.mxu0 %v390
    %616 = vmatprep.subr.mxu0 0.0
    %617 = vmatpush1.msra.mxu0 %v391
    %618 = vmatprep.subr.mxu0 0.0
    %619 = vmatpush1.msra.mxu0 %v392
    %620 = vmatprep.subr.mxu0 0.0
    %621 = vmatpush1.msra.mxu0 0.0
    %622 = vmatprep.subr.mxu0 0.0
    %623 = vmatpush1.msra.mxu0 0.0
    %624 = vmatprep.subr.mxu0 0.0
    %625 = vmatpush1.msra.mxu0 0.0
    %626 = vmatprep.subr.mxu0 0.0
    %627 = vmatpush1.msra.mxu0 0.0
    %628 = vmatprep.subr.mxu0 0.0
    %629 = vmatpush1.msra.mxu0 0.0
    %630 = vmatprep.subr.mxu0 0.0
    %631 = vmatpush1.msra.mxu0 0.0
    %632 = vmatprep.subr.mxu0 0.0
    %633 = vmatpush1.msra.mxu0 0.0
    %634 = vmatprep.subr.mxu0 0.0
    %635 = vmatpush1.msra.mxu0 0.0
    %636 = vmatprep.subr.mxu0 0.0
    %637 = vmatpush1.msra.mxu0 0.0
    %638 = vmatprep.subr.mxu0 0.0
    %639 = vmatpush1.msra.mxu0 0.0
    %640 = vmatprep.subr.mxu0 0.0
    %641 = vmatpush1.msra.mxu0 0.0
    %642 = vmatprep.subr.mxu0 0.0
    %643 = vmatpush1.msra.mxu0 0.0
    %644 = vmatprep.subr.mxu0 0.0
    %645 = vmatpush1.msra.mxu0 0.0
    %646 = vmatprep.subr.mxu0 0.0
    %647 = vmatpush1.msra.mxu0 0.0
    %648 = vmatprep.subr.mxu0 0.0
    %649 = vmatpush1.msra.mxu0 0.0
    %650 = vmatprep.subr.mxu0 0.0
    %651 = vmatpush1.msra.mxu0 0.0
    %652 = vmatprep.subr.mxu0 0.0
    %653 = vmatpush1.msra.mxu0 0.0
    %654 = vmatprep.subr.mxu0 0.0
    %655 = vmatpush1.msra.mxu0 0.0
    %656 = vmatprep.subr.mxu0 0.0
    %657 = vmatpush1.msra.mxu0 0.0
    %658 = vmatprep.subr.mxu0 0.0
    %659 = vmatpush1.msra.mxu0 0.0
    %660 = vmatprep.subr.mxu0 0.0
    %661 = vmatpush1.msra.mxu0 0.0
    %662 = vmatprep.subr.mxu0 0.0
    %663 = vmatpush1.msra.mxu0 0.0
    %664 = vmatprep.subr.mxu0 0.0
    %665 = vmatpush1.msra.mxu0 0.0
    %666 = vmatprep.subr.mxu0 0.0
    %667 = vmatpush1.msra.mxu0 0.0
    %668 = vmatprep.subr.mxu0 0.0
    %669 = vmatpush1.msra.mxu0 0.0
    %670 = vmatprep.subr.mxu0 0.0
    %671 = vmatpush1.msra.mxu0 0.0
    %672 = vmatprep.subr.mxu0 0.0
    %673 = vmatpush1.msra.mxu0 0.0
    %674 = vmatprep.subr.mxu0 0.0
    %675 = vmatpush1.msra.mxu0 0.0
    %676 = vmatprep.mubr.f32.mxu0 0.0
    %677 = vmatmul.mubr.f32.gmra.mrb[0].mxu0 %v610
    %v678 = vpop.f32.mrb[0].mxu0
    %v679 = vadd.f32 0.0, %v678
    %v680 = vpop.f32.mrb[0].mxu0
    %681 = vdwg.mxu0
    %v682 = vadd.f32 %v606, %v679
    %v683 = vxor.u32 %v682, 2147483648
    %v684 = vmul.f32 %v683, 1.442695
    %v685 = vpow.pop %v684
    %v686 = vadd.f32 %v685, 1.0
    %v687 = vrcp.pop %v686
    %v688 = vmul.f32 1.0, %v687
    %v689 = vtanh.pop %v682
    %v690 = vmul.f32 %v688, %v605
    %692 = vrot.lane.b32.xlu0 %v689, 32
    %v693 = vpop.permute.xlu0 %692
    %v695 = vmul.f32 %v688, %v693
    %697 = vrot.lane.b32.xlu0 %v695, 32
    %v698 = vpop.permute.xlu0 %697
    %v700 = vadd.f32 %v690, %v698
    %v701 = vtanh.pop %v700
    %703 = vrot.lane.b32.xlu0 %v701, 32
    %v704 = vpop.permute.xlu0 %703
    %v706 = vmul.f32 %v688, %v704
    %v707 = vsel %vm172, %v706, 0.0
    %709 = vrot.lane.b32.xlu0 %v707, 64
    %v710 = vpop.permute.xlu0 %709
    %712 = vst.msk [vmem:[#allocation3 + $0x10] sm:$0xff] %vm394, %v710
    %v713 = vsel %vm172, %v706, %v604
    %v714 = vsel %vm172, %v700, %v605
    %v715 = vld [vmem:[#allocation2 + $0x18] sm:$0xff]
    %717 = vrot.lane.b32.xlu0 %v713, 64
    %v718 = vpop.permute.xlu0 %717
    %v719 = vsel %vm394, %v718, 0
    %721 = vmatprep.subr.mxu0 0.0
    %722 = vmatpush1.msra.mxu0 %v389
    %723 = vmatprep.subr.mxu0 0.0
    %724 = vmatpush1.msra.mxu0 %v390
    %725 = vmatprep.subr.mxu0 0.0
    %726 = vmatpush1.msra.mxu0 %v391
    %727 = vmatprep.subr.mxu0 0.0
    %728 = vmatpush1.msra.mxu0 %v392
    %729 = vmatprep.subr.mxu0 0.0
    %730 = vmatpush1.msra.mxu0 0.0
    %731 = vmatprep.subr.mxu0 0.0
    %732 = vmatpush1.msra.mxu0 0.0
    %733 = vmatprep.subr.mxu0 0.0
    %734 = vmatpush1.msra.mxu0 0.0
    %735 = vmatprep.subr.mxu0 0.0
    %736 = vmatpush1.msra.mxu0 0.0
    %737 = vmatprep.subr.mxu0 0.0
    %738 = vmatpush1.msra.mxu0 0.0
    %739 = vmatprep.subr.mxu0 0.0
    %740 = vmatpush1.msra.mxu0 0.0
    %741 = vmatprep.subr.mxu0 0.0
    %742 = vmatpush1.msra.mxu0 0.0
    %743 = vmatprep.subr.mxu0 0.0
    %744 = vmatpush1.msra.mxu0 0.0
    %745 = vmatprep.subr.mxu0 0.0
    %746 = vmatpush1.msra.mxu0 0.0
    %747 = vmatprep.subr.mxu0 0.0
    %748 = vmatpush1.msra.mxu0 0.0
    %749 = vmatprep.subr.mxu0 0.0
    %750 = vmatpush1.msra.mxu0 0.0
    %751 = vmatprep.subr.mxu0 0.0
    %752 = vmatpush1.msra.mxu0 0.0
    %753 = vmatprep.subr.mxu0 0.0
    %754 = vmatpush1.msra.mxu0 0.0
    %755 = vmatprep.subr.mxu0 0.0
    %756 = vmatpush1.msra.mxu0 0.0
    %757 = vmatprep.subr.mxu0 0.0
    %758 = vmatpush1.msra.mxu0 0.0
    %759 = vmatprep.subr.mxu0 0.0
    %760 = vmatpush1.msra.mxu0 0.0
    %761 = vmatprep.subr.mxu0 0.0
    %762 = vmatpush1.msra.mxu0 0.0
    %763 = vmatprep.subr.mxu0 0.0
    %764 = vmatpush1.msra.mxu0 0.0
    %765 = vmatprep.subr.mxu0 0.0
    %766 = vmatpush1.msra.mxu0 0.0
    %767 = vmatprep.subr.mxu0 0.0
    %768 = vmatpush1.msra.mxu0 0.0
    %769 = vmatprep.subr.mxu0 0.0
    %770 = vmatpush1.msra.mxu0 0.0
    %771 = vmatprep.subr.mxu0 0.0
    %772 = vmatpush1.msra.mxu0 0.0
    %773 = vmatprep.subr.mxu0 0.0
    %774 = vmatpush1.msra.mxu0 0.0
    %775 = vmatprep.subr.mxu0 0.0
    %776 = vmatpush1.msra.mxu0 0.0
    %777 = vmatprep.subr.mxu0 0.0
    %778 = vmatpush1.msra.mxu0 0.0
    %779 = vmatprep.subr.mxu0 0.0
    %780 = vmatpush1.msra.mxu0 0.0
    %781 = vmatprep.subr.mxu0 0.0
    %782 = vmatpush1.msra.mxu0 0.0
    %783 = vmatprep.subr.mxu0 0.0
    %784 = vmatpush1.msra.mxu0 0.0
    %785 = vmatprep.mubr.f32.mxu0 0.0
    %786 = vmatmul.mubr.f32.gmra.mrb[0].mxu0 %v719
    %v787 = vpop.f32.mrb[0].mxu0
    %v788 = vadd.f32 0.0, %v787
    %v789 = vpop.f32.mrb[0].mxu0
    %790 = vdwg.mxu0
    %v791 = vadd.f32 %v715, %v788
    %v792 = vxor.u32 %v791, 2147483648
    %v793 = vmul.f32 %v792, 1.442695
    %v794 = vpow.pop %v793
    %v795 = vadd.f32 %v794, 1.0
    %v796 = vrcp.pop %v795
    %v797 = vmul.f32 1.0, %v796
    %v798 = vtanh.pop %v791
    %v799 = vmul.f32 %v797, %v714
    %801 = vrot.lane.b32.xlu0 %v798, 32
    %v802 = vpop.permute.xlu0 %801
    %v804 = vmul.f32 %v797, %v802
    %806 = vrot.lane.b32.xlu0 %v804, 32
    %v807 = vpop.permute.xlu0 %806
    %v809 = vadd.f32 %v799, %v807
    %v810 = vtanh.pop %v809
    %812 = vrot.lane.b32.xlu0 %v810, 32
    %v813 = vpop.permute.xlu0 %812
    %v815 = vmul.f32 %v797, %v813
    %v816 = vsel %vm173, %v815, 0.0
    %818 = vrot.lane.b32.xlu0 %v816, 64
    %v819 = vpop.permute.xlu0 %818
    %821 = vst.msk [vmem:[#allocation3 + $0x18] sm:$0xff] %vm394, %v819
    %v822 = vsel %vm173, %v815, %v713
    %v823 = vsel %vm173, %v809, %v714
    %v824 = vld [vmem:[#allocation2 + $0x20] sm:$0xff]
    %826 = vrot.lane.b32.xlu0 %v822, 64
    %v827 = vpop.permute.xlu0 %826
    %v828 = vsel %vm394, %v827, 0
    %830 = vmatprep.subr.mxu0 0.0
    %831 = vmatpush1.msra.mxu0 %v389
    %832 = vmatprep.subr.mxu0 0.0
    %833 = vmatpush1.msra.mxu0 %v390
    %834 = vmatprep.subr.mxu0 0.0
    %835 = vmatpush1.msra.mxu0 %v391
    %836 = vmatprep.subr.mxu0 0.0
    %837 = vmatpush1.msra.mxu0 %v392
    %838 = vmatprep.subr.mxu0 0.0
    %839 = vmatpush1.msra.mxu0 0.0
    %840 = vmatprep.subr.mxu0 0.0
    %841 = vmatpush1.msra.mxu0 0.0
    %842 = vmatprep.subr.mxu0 0.0
    %843 = vmatpush1.msra.mxu0 0.0
    %844 = vmatprep.subr.mxu0 0.0
    %845 = vmatpush1.msra.mxu0 0.0
    %846 = vmatprep.subr.mxu0 0.0
    %847 = vmatpush1.msra.mxu0 0.0
    %848 = vmatprep.subr.mxu0 0.0
    %849 = vmatpush1.msra.mxu0 0.0
    %850 = vmatprep.subr.mxu0 0.0
    %851 = vmatpush1.msra.mxu0 0.0
    %852 = vmatprep.subr.mxu0 0.0
    %853 = vmatpush1.msra.mxu0 0.0
    %854 = vmatprep.subr.mxu0 0.0
    %855 = vmatpush1.msra.mxu0 0.0
    %856 = vmatprep.subr.mxu0 0.0
    %857 = vmatpush1.msra.mxu0 0.0
    %858 = vmatprep.subr.mxu0 0.0
    %859 = vmatpush1.msra.mxu0 0.0
    %860 = vmatprep.subr.mxu0 0.0
    %861 = vmatpush1.msra.mxu0 0.0
    %862 = vmatprep.subr.mxu0 0.0
    %863 = vmatpush1.msra.mxu0 0.0
    %864 = vmatprep.subr.mxu0 0.0
    %865 = vmatpush1.msra.mxu0 0.0
    %866 = vmatprep.subr.mxu0 0.0
    %867 = vmatpush1.msra.mxu0 0.0
    %868 = vmatprep.subr.mxu0 0.0
    %869 = vmatpush1.msra.mxu0 0.0
    %870 = vmatprep.subr.mxu0 0.0
    %871 = vmatpush1.msra.mxu0 0.0
    %872 = vmatprep.subr.mxu0 0.0
    %873 = vmatpush1.msra.mxu0 0.0
    %874 = vmatprep.subr.mxu0 0.0
    %875 = vmatpush1.msra.mxu0 0.0
    %876 = vmatprep.subr.mxu0 0.0
    %877 = vmatpush1.msra.mxu0 0.0
    %878 = vmatprep.subr.mxu0 0.0
    %879 = vmatpush1.msra.mxu0 0.0
    %880 = vmatprep.subr.mxu0 0.0
    %881 = vmatpush1.msra.mxu0 0.0
    %882 = vmatprep.subr.mxu0 0.0
    %883 = vmatpush1.msra.mxu0 0.0
    %884 = vmatprep.subr.mxu0 0.0
    %885 = vmatpush1.msra.mxu0 0.0
    %886 = vmatprep.subr.mxu0 0.0
    %887 = vmatpush1.msra.mxu0 0.0
    %888 = vmatprep.subr.mxu0 0.0
    %889 = vmatpush1.msra.mxu0 0.0
    %890 = vmatprep.subr.mxu0 0.0
    %891 = vmatpush1.msra.mxu0 0.0
    %892 = vmatprep.subr.mxu0 0.0
    %893 = vmatpush1.msra.mxu0 0.0
    %894 = vmatprep.mubr.f32.mxu0 0.0
    %895 = vmatmul.mubr.f32.gmra.mrb[0].mxu0 %v828
    %v896 = vpop.f32.mrb[0].mxu0
    %v897 = vadd.f32 0.0, %v896
    %v898 = vpop.f32.mrb[0].mxu0
    %899 = vdwg.mxu0
    %v900 = vadd.f32 %v824, %v897
    %v901 = vxor.u32 %v900, 2147483648
    %v902 = vmul.f32 %v901, 1.442695
    %v903 = vpow.pop %v902
    %v904 = vadd.f32 %v903, 1.0
    %v905 = vrcp.pop %v904
    %v906 = vmul.f32 1.0, %v905
    %v907 = vtanh.pop %v900
    %v908 = vmul.f32 %v906, %v823
    %910 = vrot.lane.b32.xlu0 %v907, 32
    %v911 = vpop.permute.xlu0 %910
    %v913 = vmul.f32 %v906, %v911
    %915 = vrot.lane.b32.xlu0 %v913, 32
    %v916 = vpop.permute.xlu0 %915
    %v918 = vadd.f32 %v908, %v916
    %v919 = vtanh.pop %v918
    %921 = vrot.lane.b32.xlu0 %v919, 32
    %v922 = vpop.permute.xlu0 %921
    %v924 = vmul.f32 %v906, %v922
    %v925 = vsel %vm174, %v924, 0.0
    %927 = vrot.lane.b32.xlu0 %v925, 64
    %v928 = vpop.permute.xlu0 %927
    %930 = vst.msk [vmem:[#allocation3 + $0x20] sm:$0xff] %vm394, %v928
    %v931 = vsel %vm174, %v924, %v822
    %v932 = vsel %vm174, %v918, %v823
    %v933 = vld [vmem:[#allocation2 + $0x28] sm:$0xff]
    %935 = vrot.lane.b32.xlu0 %v931, 64
    %v936 = vpop.permute.xlu0 %935
    %v937 = vsel %vm394, %v936, 0
    %939 = vmatprep.subr.mxu0 0.0
    %940 = vmatpush1.msra.mxu0 %v389
    %941 = vmatprep.subr.mxu0 0.0
    %942 = vmatpush1.msra.mxu0 %v390
    %943 = vmatprep.subr.mxu0 0.0
    %944 = vmatpush1.msra.mxu0 %v391
    %945 = vmatprep.subr.mxu0 0.0
    %946 = vmatpush1.msra.mxu0 %v392
    %947 = vmatprep.subr.mxu0 0.0
    %948 = vmatpush1.msra.mxu0 0.0
    %949 = vmatprep.subr.mxu0 0.0
    %950 = vmatpush1.msra.mxu0 0.0
    %951 = vmatprep.subr.mxu0 0.0
    %952 = vmatpush1.msra.mxu0 0.0
    %953 = vmatprep.subr.mxu0 0.0
    %954 = vmatpush1.msra.mxu0 0.0
    %955 = vmatprep.subr.mxu0 0.0
    %956 = vmatpush1.msra.mxu0 0.0
    %957 = vmatprep.subr.mxu0 0.0
    %958 = vmatpush1.msra.mxu0 0.0
    %959 = vmatprep.subr.mxu0 0.0
    %960 = vmatpush1.msra.mxu0 0.0
    %961 = vmatprep.subr.mxu0 0.0
    %962 = vmatpush1.msra.mxu0 0.0
    %963 = vmatprep.subr.mxu0 0.0
    %964 = vmatpush1.msra.mxu0 0.0
    %965 = vmatprep.subr.mxu0 0.0
    %966 = vmatpush1.msra.mxu0 0.0
    %967 = vmatprep.subr.mxu0 0.0
    %968 = vmatpush1.msra.mxu0 0.0
    %969 = vmatprep.subr.mxu0 0.0
    %970 = vmatpush1.msra.mxu0 0.0
    %971 = vmatprep.subr.mxu0 0.0
    %972 = vmatpush1.msra.mxu0 0.0
    %973 = vmatprep.subr.mxu0 0.0
    %974 = vmatpush1.msra.mxu0 0.0
    %975 = vmatprep.subr.mxu0 0.0
    %976 = vmatpush1.msra.mxu0 0.0
    %977 = vmatprep.subr.mxu0 0.0
    %978 = vmatpush1.msra.mxu0 0.0
    %979 = vmatprep.subr.mxu0 0.0
    %980 = vmatpush1.msra.mxu0 0.0
    %981 = vmatprep.subr.mxu0 0.0
    %982 = vmatpush1.msra.mxu0 0.0
    %983 = vmatprep.subr.mxu0 0.0
    %984 = vmatpush1.msra.mxu0 0.0
    %985 = vmatprep.subr.mxu0 0.0
    %986 = vmatpush1.msra.mxu0 0.0
    %987 = vmatprep.subr.mxu0 0.0
    %988 = vmatpush1.msra.mxu0 0.0
    %989 = vmatprep.subr.mxu0 0.0
    %990 = vmatpush1.msra.mxu0 0.0
    %991 = vmatprep.subr.mxu0 0.0
    %992 = vmatpush1.msra.mxu0 0.0
    %993 = vmatprep.subr.mxu0 0.0
    %994 = vmatpush1.msra.mxu0 0.0
    %995 = vmatprep.subr.mxu0 0.0
    %996 = vmatpush1.msra.mxu0 0.0
    %997 = vmatprep.subr.mxu0 0.0
    %998 = vmatpush1.msra.mxu0 0.0
    %999 = vmatprep.subr.mxu0 0.0
    %1000 = vmatpush1.msra.mxu0 0.0
    %1001 = vmatprep.subr.mxu0 0.0
    %1002 = vmatpush1.msra.mxu0 0.0
    %1003 = vmatprep.mubr.f32.mxu0 0.0
    %1004 = vmatmul.mubr.f32.gmra.mrb[0].mxu0 %v937
    %v1005 = vpop.f32.mrb[0].mxu0
    %v1006 = vadd.f32 0.0, %v1005
    %v1007 = vpop.f32.mrb[0].mxu0
    %1008 = vdwg.mxu0
    %v1009 = vadd.f32 %v933, %v1006
    %v1010 = vxor.u32 %v1009, 2147483648
    %v1011 = vmul.f32 %v1010, 1.442695
    %v1012 = vpow.pop %v1011
    %v1013 = vadd.f32 %v1012, 1.0
    %v1014 = vrcp.pop %v1013
    %v1015 = vmul.f32 1.0, %v1014
    %v1016 = vtanh.pop %v1009
    %v1017 = vmul.f32 %v1015, %v932
    %1019 = vrot.lane.b32.xlu0 %v1016, 32
    %v1020 = vpop.permute.xlu0 %1019
    %v1022 = vmul.f32 %v1015, %v1020
    %1024 = vrot.lane.b32.xlu0 %v1022, 32
    %v1025 = vpop.permute.xlu0 %1024
    %v1027 = vadd.f32 %v1017, %v1025
    %v1028 = vtanh.pop %v1027
    %1030 = vrot.lane.b32.xlu0 %v1028, 32
    %v1031 = vpop.permute.xlu0 %1030
    %v1033 = vmul.f32 %v1015, %v1031
    %v1034 = vsel %vm175, %v1033, 0.0
    %1036 = vrot.lane.b32.xlu0 %v1034, 64
    %v1037 = vpop.permute.xlu0 %1036
    %1039 = vst.msk [vmem:[#allocation3 + $0x28] sm:$0xff] %vm394, %v1037
    %v1040 = vsel %vm175, %v1033, %v931
    %v1041 = vsel %vm175, %v1027, %v932
    %v1042 = vld [vmem:[#allocation2 + $0x30] sm:$0xff]
    %1044 = vrot.lane.b32.xlu0 %v1040, 64
    %v1045 = vpop.permute.xlu0 %1044
    %v1046 = vsel %vm394, %v1045, 0
    %1048 = vmatprep.subr.mxu0 0.0
    %1049 = vmatpush1.msra.mxu0 %v389
    %1050 = vmatprep.subr.mxu0 0.0
    %1051 = vmatpush1.msra.mxu0 %v390
    %1052 = vmatprep.subr.mxu0 0.0
    %1053 = vmatpush1.msra.mxu0 %v391
    %1054 = vmatprep.subr.mxu0 0.0
    %1055 = vmatpush1.msra.mxu0 %v392
    %1056 = vmatprep.subr.mxu0 0.0
    %1057 = vmatpush1.msra.mxu0 0.0
    %1058 = vmatprep.subr.mxu0 0.0
    %1059 = vmatpush1.msra.mxu0 0.0
    %1060 = vmatprep.subr.mxu0 0.0
    %1061 = vmatpush1.msra.mxu0 0.0
    %1062 = vmatprep.subr.mxu0 0.0
    %1063 = vmatpush1.msra.mxu0 0.0
    %1064 = vmatprep.subr.mxu0 0.0
    %1065 = vmatpush1.msra.mxu0 0.0
    %1066 = vmatprep.subr.mxu0 0.0
    %1067 = vmatpush1.msra.mxu0 0.0
    %1068 = vmatprep.subr.mxu0 0.0
    %1069 = vmatpush1.msra.mxu0 0.0
    %1070 = vmatprep.subr.mxu0 0.0
    %1071 = vmatpush1.msra.mxu0 0.0
    %1072 = vmatprep.subr.mxu0 0.0
    %1073 = vmatpush1.msra.mxu0 0.0
    %1074 = vmatprep.subr.mxu0 0.0
    %1075 = vmatpush1.msra.mxu0 0.0
    %1076 = vmatprep.subr.mxu0 0.0
    %1077 = vmatpush1.msra.mxu0 0.0
    %1078 = vmatprep.subr.mxu0 0.0
    %1079 = vmatpush1.msra.mxu0 0.0
    %1080 = vmatprep.subr.mxu0 0.0
    %1081 = vmatpush1.msra.mxu0 0.0
    %1082 = vmatprep.subr.mxu0 0.0
    %1083 = vmatpush1.msra.mxu0 0.0
    %1084 = vmatprep.subr.mxu0 0.0
    %1085 = vmatpush1.msra.mxu0 0.0
    %1086 = vmatprep.subr.mxu0 0.0
    %1087 = vmatpush1.msra.mxu0 0.0
    %1088 = vmatprep.subr.mxu0 0.0
    %1089 = vmatpush1.msra.mxu0 0.0
    %1090 = vmatprep.subr.mxu0 0.0
    %1091 = vmatpush1.msra.mxu0 0.0
    %1092 = vmatprep.subr.mxu0 0.0
    %1093 = vmatpush1.msra.mxu0 0.0
    %1094 = vmatprep.subr.mxu0 0.0
    %1095 = vmatpush1.msra.mxu0 0.0
    %1096 = vmatprep.subr.mxu0 0.0
    %1097 = vmatpush1.msra.mxu0 0.0
    %1098 = vmatprep.subr.mxu0 0.0
    %1099 = vmatpush1.msra.mxu0 0.0
    %1100 = vmatprep.subr.mxu0 0.0
    %1101 = vmatpush1.msra.mxu0 0.0
    %1102 = vmatprep.subr.mxu0 0.0
    %1103 = vmatpush1.msra.mxu0 0.0
    %1104 = vmatprep.subr.mxu0 0.0
    %1105 = vmatpush1.msra.mxu0 0.0
    %1106 = vmatprep.subr.mxu0 0.0
    %1107 = vmatpush1.msra.mxu0 0.0
    %1108 = vmatprep.subr.mxu0 0.0
    %1109 = vmatpush1.msra.mxu0 0.0
    %1110 = vmatprep.subr.mxu0 0.0
    %1111 = vmatpush1.msra.mxu0 0.0
    %1112 = vmatprep.mubr.f32.mxu0 0.0
    %1113 = vmatmul.mubr.f32.gmra.mrb[0].mxu0 %v1046
    %v1114 = vpop.f32.mrb[0].mxu0
    %v1115 = vadd.f32 0.0, %v1114
    %v1116 = vpop.f32.mrb[0].mxu0
    %1117 = vdwg.mxu0
    %v1118 = vadd.f32 %v1042, %v1115
    %v1119 = vxor.u32 %v1118, 2147483648
    %v1120 = vmul.f32 %v1119, 1.442695
    %v1121 = vpow.pop %v1120
    %v1122 = vadd.f32 %v1121, 1.0
    %v1123 = vrcp.pop %v1122
    %v1124 = vmul.f32 1.0, %v1123
    %v1125 = vtanh.pop %v1118
    %v1126 = vmul.f32 %v1124, %v1041
    %1128 = vrot.lane.b32.xlu0 %v1125, 32
    %v1129 = vpop.permute.xlu0 %1128
    %v1131 = vmul.f32 %v1124, %v1129
    %1133 = vrot.lane.b32.xlu0 %v1131, 32
    %v1134 = vpop.permute.xlu0 %1133
    %v1136 = vadd.f32 %v1126, %v1134
    %v1137 = vtanh.pop %v1136
    %1139 = vrot.lane.b32.xlu0 %v1137, 32
    %v1140 = vpop.permute.xlu0 %1139
    %v1142 = vmul.f32 %v1124, %v1140
    %v1143 = vsel %vm176, %v1142, 0.0
    %1145 = vrot.lane.b32.xlu0 %v1143, 64
    %v1146 = vpop.permute.xlu0 %1145
    %1148 = vst.msk [vmem:[#allocation3 + $0x30] sm:$0xff] %vm394, %v1146
    %v1149 = vsel %vm176, %v1142, %v1040
    %v1150 = vsel %vm176, %v1136, %v1041
    %v1151 = vld [vmem:[#allocation2 + $0x38] sm:$0xff]
    %1153 = vrot.lane.b32.xlu0 %v1149, 64
    %v1154 = vpop.permute.xlu0 %1153
    %v1155 = vsel %vm394, %v1154, 0
    %1157 = vmatprep.subr.mxu0 0.0
    %1158 = vmatpush1.msra.mxu0 %v389
    %1159 = vmatprep.subr.mxu0 0.0
    %1160 = vmatpush1.msra.mxu0 %v390
    %1161 = vmatprep.subr.mxu0 0.0
    %1162 = vmatpush1.msra.mxu0 %v391
    %1163 = vmatprep.subr.mxu0 0.0
    %1164 = vmatpush1.msra.mxu0 %v392
    %1165 = vmatprep.subr.mxu0 0.0
    %1166 = vmatpush1.msra.mxu0 0.0
    %1167 = vmatprep.subr.mxu0 0.0
    %1168 = vmatpush1.msra.mxu0 0.0
    %1169 = vmatprep.subr.mxu0 0.0
    %1170 = vmatpush1.msra.mxu0 0.0
    %1171 = vmatprep.subr.mxu0 0.0
    %1172 = vmatpush1.msra.mxu0 0.0
    %1173 = vmatprep.subr.mxu0 0.0
    %1174 = vmatpush1.msra.mxu0 0.0
    %1175 = vmatprep.subr.mxu0 0.0
    %1176 = vmatpush1.msra.mxu0 0.0
    %1177 = vmatprep.subr.mxu0 0.0
    %1178 = vmatpush1.msra.mxu0 0.0
    %1179 = vmatprep.subr.mxu0 0.0
    %1180 = vmatpush1.msra.mxu0 0.0
    %1181 = vmatprep.subr.mxu0 0.0
    %1182 = vmatpush1.msra.mxu0 0.0
    %1183 = vmatprep.subr.mxu0 0.0
    %1184 = vmatpush1.msra.mxu0 0.0
    %1185 = vmatprep.subr.mxu0 0.0
    %1186 = vmatpush1.msra.mxu0 0.0
    %1187 = vmatprep.subr.mxu0 0.0
    %1188 = vmatpush1.msra.mxu0 0.0
    %1189 = vmatprep.subr.mxu0 0.0
    %1190 = vmatpush1.msra.mxu0 0.0
    %1191 = vmatprep.subr.mxu0 0.0
    %1192 = vmatpush1.msra.mxu0 0.0
    %1193 = vmatprep.subr.mxu0 0.0
    %1194 = vmatpush1.msra.mxu0 0.0
    %1195 = vmatprep.subr.mxu0 0.0
    %1196 = vmatpush1.msra.mxu0 0.0
    %1197 = vmatprep.subr.mxu0 0.0
    %1198 = vmatpush1.msra.mxu0 0.0
    %1199 = vmatprep.subr.mxu0 0.0
    %1200 = vmatpush1.msra.mxu0 0.0
    %1201 = vmatprep.subr.mxu0 0.0
    %1202 = vmatpush1.msra.mxu0 0.0
    %1203 = vmatprep.subr.mxu0 0.0
    %1204 = vmatpush1.msra.mxu0 0.0
    %1205 = vmatprep.subr.mxu0 0.0
    %1206 = vmatpush1.msra.mxu0 0.0
    %1207 = vmatprep.subr.mxu0 0.0
    %1208 = vmatpush1.msra.mxu0 0.0
    %1209 = vmatprep.subr.mxu0 0.0
    %1210 = vmatpush1.msra.mxu0 0.0
    %1211 = vmatprep.subr.mxu0 0.0
    %1212 = vmatpush1.msra.mxu0 0.0
    %1213 = vmatprep.subr.mxu0 0.0
    %1214 = vmatpush1.msra.mxu0 0.0
    %1215 = vmatprep.subr.mxu0 0.0
    %1216 = vmatpush1.msra.mxu0 0.0
    %1217 = vmatprep.subr.mxu0 0.0
    %1218 = vmatpush1.msra.mxu0 0.0
    %1219 = vmatprep.subr.mxu0 0.0
    %1220 = vmatpush1.msra.mxu0 0.0
    %1221 = vmatprep.mubr.f32.mxu0 0.0
    %1222 = vmatmul.mubr.f32.gmra.mrb[0].mxu0 %v1155
    %v1223 = vpop.f32.mrb[0].mxu0
    %v1224 = vadd.f32 0.0, %v1223
    %v1225 = vpop.f32.mrb[0].mxu0
    %1226 = vdwg.mxu0
    %v1227 = vadd.f32 %v1151, %v1224
    %v1228 = vxor.u32 %v1227, 2147483648
    %v1229 = vmul.f32 %v1228, 1.442695
    %v1230 = vpow.pop %v1229
    %v1231 = vadd.f32 %v1230, 1.0
    %v1232 = vrcp.pop %v1231
    %v1233 = vmul.f32 1.0, %v1232
    %v1234 = vtanh.pop %v1227
    %v1235 = vmul.f32 %v1233, %v1150
    %1237 = vrot.lane.b32.xlu0 %v1234, 32
    %v1238 = vpop.permute.xlu0 %1237
    %v1240 = vmul.f32 %v1233, %v1238
    %1242 = vrot.lane.b32.xlu0 %v1240, 32
    %v1243 = vpop.permute.xlu0 %1242
    %v1245 = vadd.f32 %v1235, %v1243
    %v1246 = vtanh.pop %v1245
    %1248 = vrot.lane.b32.xlu0 %v1246, 32
    %v1249 = vpop.permute.xlu0 %1248
    %v1251 = vmul.f32 %v1233, %v1249
    %v1252 = vsel %vm177, %v1251, 0.0
    %1254 = vrot.lane.b32.xlu0 %v1252, 64
    %v1255 = vpop.permute.xlu0 %1254
    %1257 = vst.msk [vmem:[#allocation3 + $0x38] sm:$0xff] %vm394, %v1255
    %v1258 = vld [vmem:[#allocation3] sm:$0xff]
    %v1259 = vld [vmem:[#allocation3 + $0x8] sm:$0xff]
    %v1260 = vld [vmem:[#allocation3 + $0x10] sm:$0xff]
    %v1261 = vld [vmem:[#allocation3 + $0x18] sm:$0xff]
    %v1262 = vld [vmem:[#allocation3 + $0x20] sm:$0xff]
    %v1263 = vld [vmem:[#allocation3 + $0x28] sm:$0xff]
    %v1264 = vld [vmem:[#allocation3 + $0x30] sm:$0xff]
    %v1265 = vld [vmem:[#allocation3 + $0x38] sm:$0xff]
    %v1266 = vld [vmem:[#allocation7] sm:$0xff]
    %v1267 = vld [vmem:[#allocation7 + $0x8] sm:$0xff]
    %v1268 = vld [vmem:[#allocation7 + $0x10] sm:$0xff]
    %v1269 = vld [vmem:[#allocation7 + $0x18] sm:$0xff]
    %v1270 = vld [vmem:[%s8] sm:$0x1]
    %v1272 = vlaneseq
    %v1273 = vshrl.u32 %v1272, 7
    %v1274 = vsub.s32 0, %v1273
    %v1275 = vrot.slane %v1270, %v1274
    %v1278 = vsel %vm394, %v1258, 0
    %v1281 = vsel %vm394, %v1259, 0
    %v1284 = vsel %vm394, %v1260, 0
    %v1287 = vsel %vm394, %v1261, 0
    %v1290 = vsel %vm394, %v1262, 0
    %v1293 = vsel %vm394, %v1263, 0
    %v1296 = vsel %vm394, %v1264, 0
    %v1299 = vsel %vm394, %v1265, 0
    %1301 = vmatprep.subr.mxu0 0.0
    %1302 = vmatpush1.msra.mxu0 %v1266
    %1303 = vmatprep.subr.mxu0 0.0
    %1304 = vmatpush1.msra.mxu0 %v1267
    %1305 = vmatprep.subr.mxu0 0.0
    %1306 = vmatpush1.msra.mxu0 %v1268
    %1307 = vmatprep.subr.mxu0 0.0
    %1308 = vmatpush1.msra.mxu0 %v1269
    %1309 = vmatprep.subr.mxu0 0.0
    %1310 = vmatpush1.msra.mxu0 0.0
    %1311 = vmatprep.subr.mxu0 0.0
    %1312 = vmatpush1.msra.mxu0 0.0
    %1313 = vmatprep.subr.mxu0 0.0
    %1314 = vmatpush1.msra.mxu0 0.0
    %1315 = vmatprep.subr.mxu0 0.0
    %1316 = vmatpush1.msra.mxu0 0.0
    %1317 = vmatprep.subr.mxu0 0.0
    %1318 = vmatpush1.msra.mxu0 0.0
    %1319 = vmatprep.subr.mxu0 0.0
    %1320 = vmatpush1.msra.mxu0 0.0
    %1321 = vmatprep.subr.mxu0 0.0
    %1322 = vmatpush1.msra.mxu0 0.0
    %1323 = vmatprep.subr.mxu0 0.0
    %1324 = vmatpush1.msra.mxu0 0.0
    %1325 = vmatprep.subr.mxu0 0.0
    %1326 = vmatpush1.msra.mxu0 0.0
    %1327 = vmatprep.subr.mxu0 0.0
    %1328 = vmatpush1.msra.mxu0 0.0
    %1329 = vmatprep.subr.mxu0 0.0
    %1330 = vmatpush1.msra.mxu0 0.0
    %1331 = vmatprep.subr.mxu0 0.0
    %1332 = vmatpush1.msra.mxu0 0.0
    %1333 = vmatprep.subr.mxu0 0.0
    %1334 = vmatpush1.msra.mxu0 0.0
    %1335 = vmatprep.subr.mxu0 0.0
    %1336 = vmatpush1.msra.mxu0 0.0
    %1337 = vmatprep.subr.mxu0 0.0
    %1338 = vmatpush1.msra.mxu0 0.0
    %1339 = vmatprep.subr.mxu0 0.0
    %1340 = vmatpush1.msra.mxu0 0.0
    %1341 = vmatprep.subr.mxu0 0.0
    %1342 = vmatpush1.msra.mxu0 0.0
    %1343 = vmatprep.subr.mxu0 0.0
    %1344 = vmatpush1.msra.mxu0 0.0
    %1345 = vmatprep.subr.mxu0 0.0
    %1346 = vmatpush1.msra.mxu0 0.0
    %1347 = vmatprep.subr.mxu0 0.0
    %1348 = vmatpush1.msra.mxu0 0.0
    %1349 = vmatprep.subr.mxu0 0.0
    %1350 = vmatpush1.msra.mxu0 0.0
    %1351 = vmatprep.subr.mxu0 0.0
    %1352 = vmatpush1.msra.mxu0 0.0
    %1353 = vmatprep.subr.mxu0 0.0
    %1354 = vmatpush1.msra.mxu0 0.0
    %1355 = vmatprep.subr.mxu0 0.0
    %1356 = vmatpush1.msra.mxu0 0.0
    %1357 = vmatprep.subr.mxu0 0.0
    %1358 = vmatpush1.msra.mxu0 0.0
    %1359 = vmatprep.subr.mxu0 0.0
    %1360 = vmatpush1.msra.mxu0 0.0
    %1361 = vmatprep.subr.mxu0 0.0
    %1362 = vmatpush1.msra.mxu0 0.0
    %1363 = vmatprep.subr.mxu0 0.0
    %1364 = vmatpush1.msra.mxu0 0.0
    %1365 = vmatprep.mubr.f32.mxu0 0.0
    %1366 = vmatmul.mubr.f32.gmra.mrb[0].mxu0 %v1278
    %v1367 = vpop.f32.mrb[0].mxu0
    %v1368 = vadd.f32 %v1275, %v1367
    %v1369 = vpop.f32.mrb[0].mxu0
    %1370 = vmatprep.mubr.f32.mxu0 0.0
    %1371 = vmatmul.mubr.f32.gmra.mrb[0].mxu0 %v1281
    %v1372 = vpop.f32.mrb[0].mxu0
    %v1373 = vadd.f32 %v1275, %v1372
    %v1374 = vpop.f32.mrb[0].mxu0
    %1375 = vmatprep.mubr.f32.mxu0 0.0
    %1376 = vmatmul.mubr.f32.gmra.mrb[0].mxu0 %v1284
    %v1377 = vpop.f32.mrb[0].mxu0
    %v1378 = vadd.f32 %v1275, %v1377
    %v1379 = vpop.f32.mrb[0].mxu0
    %1380 = vmatprep.mubr.f32.mxu0 0.0
    %1381 = vmatmul.mubr.f32.gmra.mrb[0].mxu0 %v1287
    %v1382 = vpop.f32.mrb[0].mxu0
    %v1383 = vadd.f32 %v1275, %v1382
    %v1384 = vpop.f32.mrb[0].mxu0
    %1385 = vmatprep.mubr.f32.mxu0 0.0
    %1386 = vmatmul.mubr.f32.gmra.mrb[0].mxu0 %v1290
    %v1387 = vpop.f32.mrb[0].mxu0
    %v1388 = vadd.f32 %v1275, %v1387
    %v1389 = vpop.f32.mrb[0].mxu0
    %1390 = vmatprep.mubr.f32.mxu0 0.0
    %1391 = vmatmul.mubr.f32.gmra.mrb[0].mxu0 %v1293
    %v1392 = vpop.f32.mrb[0].mxu0
    %v1393 = vadd.f32 %v1275, %v1392
    %v1394 = vpop.f32.mrb[0].mxu0
    %1395 = vmatprep.mubr.f32.mxu0 0.0
    %1396 = vmatmul.mubr.f32.gmra.mrb[0].mxu0 %v1296
    %v1397 = vpop.f32.mrb[0].mxu0
    %v1398 = vadd.f32 %v1275, %v1397
    %v1399 = vpop.f32.mrb[0].mxu0
    %1400 = vmatprep.mubr.f32.mxu0 0.0
    %1401 = vmatmul.mubr.f32.gmra.mrb[0].mxu0 %v1299
    %v1402 = vpop.f32.mrb[0].mxu0
    %v1403 = vadd.f32 %v1275, %v1402
    %v1404 = vpop.f32.mrb[0].mxu0
    %1405 = vdwg.mxu0
    %1406 = vst [vmem:[#allocation2] sm:$0xff] %v1368
    %1407 = vst [vmem:[#allocation2 + $0x8] sm:$0xff] %v1373
    %1408 = vst [vmem:[#allocation2 + $0x10] sm:$0xff] %v1378
    %1409 = vst [vmem:[#allocation2 + $0x18] sm:$0xff] %v1383
    %1410 = vst [vmem:[#allocation2 + $0x20] sm:$0xff] %v1388
    %1411 = vst [vmem:[#allocation2 + $0x28] sm:$0xff] %v1393
    %1412 = vst [vmem:[#allocation2 + $0x30] sm:$0xff] %v1398
    %1413 = vst [vmem:[#allocation2 + $0x38] sm:$0xff] %v1403
    %v1414 = vld [vmem:[#allocation9] sm:$0xff]
    %v1415 = vld [vmem:[#allocation9 + $0x8] sm:$0xff]
    %v1416 = vld [vmem:[#allocation9 + $0x10] sm:$0xff]
    %v1417 = vld [vmem:[#allocation9 + $0x18] sm:$0xff]
    %v1418 = vld [vmem:[#allocation2] sm:$0xff]
    %1419 = vmatprep.subr.mxu0 0.0
    %1420 = vmatpush1.msra.mxu0 %v1414
    %1421 = vmatprep.subr.mxu0 0.0
    %1422 = vmatpush1.msra.mxu0 %v1415
    %1423 = vmatprep.subr.mxu0 0.0
    %1424 = vmatpush1.msra.mxu0 %v1416
    %1425 = vmatprep.subr.mxu0 0.0
    %1426 = vmatpush1.msra.mxu0 %v1417
    %1427 = vmatprep.subr.mxu0 0.0
    %1428 = vmatpush1.msra.mxu0 0.0
    %1429 = vmatprep.subr.mxu0 0.0
    %1430 = vmatpush1.msra.mxu0 0.0
    %1431 = vmatprep.subr.mxu0 0.0
    %1432 = vmatpush1.msra.mxu0 0.0
    %1433 = vmatprep.subr.mxu0 0.0
    %1434 = vmatpush1.msra.mxu0 0.0
    %1435 = vmatprep.subr.mxu0 0.0
    %1436 = vmatpush1.msra.mxu0 0.0
    %1437 = vmatprep.subr.mxu0 0.0
    %1438 = vmatpush1.msra.mxu0 0.0
    %1439 = vmatprep.subr.mxu0 0.0
    %1440 = vmatpush1.msra.mxu0 0.0
    %1441 = vmatprep.subr.mxu0 0.0
    %1442 = vmatpush1.msra.mxu0 0.0
    %1443 = vmatprep.subr.mxu0 0.0
    %1444 = vmatpush1.msra.mxu0 0.0
    %1445 = vmatprep.subr.mxu0 0.0
    %1446 = vmatpush1.msra.mxu0 0.0
    %1447 = vmatprep.subr.mxu0 0.0
    %1448 = vmatpush1.msra.mxu0 0.0
    %1449 = vmatprep.subr.mxu0 0.0
    %1450 = vmatpush1.msra.mxu0 0.0
    %1451 = vmatprep.subr.mxu0 0.0
    %1452 = vmatpush1.msra.mxu0 0.0
    %1453 = vmatprep.subr.mxu0 0.0
    %1454 = vmatpush1.msra.mxu0 0.0
    %1455 = vmatprep.subr.mxu0 0.0
    %1456 = vmatpush1.msra.mxu0 0.0
    %1457 = vmatprep.subr.mxu0 0.0
    %1458 = vmatpush1.msra.mxu0 0.0
    %1459 = vmatprep.subr.mxu0 0.0
    %1460 = vmatpush1.msra.mxu0 0.0
    %1461 = vmatprep.subr.mxu0 0.0
    %1462 = vmatpush1.msra.mxu0 0.0
    %1463 = vmatprep.subr.mxu0 0.0
    %1464 = vmatpush1.msra.mxu0 0.0
    %1465 = vmatprep.subr.mxu0 0.0
    %1466 = vmatpush1.msra.mxu0 0.0
    %1467 = vmatprep.subr.mxu0 0.0
    %1468 = vmatpush1.msra.mxu0 0.0
    %1469 = vmatprep.subr.mxu0 0.0
    %1470 = vmatpush1.msra.mxu0 0.0
    %1471 = vmatprep.subr.mxu0 0.0
    %1472 = vmatpush1.msra.mxu0 0.0
    %1473 = vmatprep.subr.mxu0 0.0
    %1474 = vmatpush1.msra.mxu0 0.0
    %1475 = vmatprep.subr.mxu0 0.0
    %1476 = vmatpush1.msra.mxu0 0.0
    %1477 = vmatprep.subr.mxu0 0.0
    %1478 = vmatpush1.msra.mxu0 0.0
    %1479 = vmatprep.subr.mxu0 0.0
    %1480 = vmatpush1.msra.mxu0 0.0
    %1481 = vmatprep.subr.mxu0 0.0
    %1482 = vmatpush1.msra.mxu0 0.0
    %1483 = vmatprep.mubr.f32.mxu0 0.0
    %1484 = vmatmul.mubr.f32.gmra.mrb[0].mxu0 %v396
    %v1485 = vpop.f32.mrb[0].mxu0
    %v1486 = vadd.f32 0.0, %v1485
    %v1487 = vpop.f32.mrb[0].mxu0
    %1488 = vdwg.mxu0
    %v1489 = vadd.f32 %v1418, %v1486
    %v1490 = vxor.u32 %v1489, 2147483648
    %v1491 = vmul.f32 %v1490, 1.442695
    %v1492 = vpow.pop %v1491
    %v1493 = vadd.f32 %v1492, 1.0
    %v1494 = vrcp.pop %v1493
    %v1495 = vmul.f32 1.0, %v1494
    %v1496 = vtanh.pop %v1489
    %v1497 = vmul.f32 %v1495, 0.0
    %1499 = vrot.lane.b32.xlu0 %v1496, 32
    %v1500 = vpop.permute.xlu0 %1499
    %v1502 = vmul.f32 %v1495, %v1500
    %1504 = vrot.lane.b32.xlu0 %v1502, 32
    %v1505 = vpop.permute.xlu0 %1504
    %v1507 = vadd.f32 %v1497, %v1505
    %v1508 = vtanh.pop %v1507
    %1510 = vrot.lane.b32.xlu0 %v1508, 32
    %v1511 = vpop.permute.xlu0 %1510
    %v1513 = vmul.f32 %v1495, %v1511
    %v1514 = vsel %vm170, %v1513, 0.0
    %v1515 = vsel %vm170, %v1507, 0.0
    %v1516 = vld [vmem:[#allocation2 + $0x8] sm:$0xff]
    %1518 = vrot.lane.b32.xlu0 %v1514, 64
    %v1519 = vpop.permute.xlu0 %1518
    %v1520 = vsel %vm394, %v1519, 0
    %1522 = vmatprep.subr.mxu0 0.0
    %1523 = vmatpush1.msra.mxu0 %v1414
    %1524 = vmatprep.subr.mxu0 0.0
    %1525 = vmatpush1.msra.mxu0 %v1415
    %1526 = vmatprep.subr.mxu0 0.0
    %1527 = vmatpush1.msra.mxu0 %v1416
    %1528 = vmatprep.subr.mxu0 0.0
    %1529 = vmatpush1.msra.mxu0 %v1417
    %1530 = vmatprep.subr.mxu0 0.0
    %1531 = vmatpush1.msra.mxu0 0.0
    %1532 = vmatprep.subr.mxu0 0.0
    %1533 = vmatpush1.msra.mxu0 0.0
    %1534 = vmatprep.subr.mxu0 0.0
    %1535 = vmatpush1.msra.mxu0 0.0
    %1536 = vmatprep.subr.mxu0 0.0
    %1537 = vmatpush1.msra.mxu0 0.0
    %1538 = vmatprep.subr.mxu0 0.0
    %1539 = vmatpush1.msra.mxu0 0.0
    %1540 = vmatprep.subr.mxu0 0.0
    %1541 = vmatpush1.msra.mxu0 0.0
    %1542 = vmatprep.subr.mxu0 0.0
    %1543 = vmatpush1.msra.mxu0 0.0
    %1544 = vmatprep.subr.mxu0 0.0
    %1545 = vmatpush1.msra.mxu0 0.0
    %1546 = vmatprep.subr.mxu0 0.0
    %1547 = vmatpush1.msra.mxu0 0.0
    %1548 = vmatprep.subr.mxu0 0.0
    %1549 = vmatpush1.msra.mxu0 0.0
    %1550 = vmatprep.subr.mxu0 0.0
    %1551 = vmatpush1.msra.mxu0 0.0
    %1552 = vmatprep.subr.mxu0 0.0
    %1553 = vmatpush1.msra.mxu0 0.0
    %1554 = vmatprep.subr.mxu0 0.0
    %1555 = vmatpush1.msra.mxu0 0.0
    %1556 = vmatprep.subr.mxu0 0.0
    %1557 = vmatpush1.msra.mxu0 0.0
    %1558 = vmatprep.subr.mxu0 0.0
    %1559 = vmatpush1.msra.mxu0 0.0
    %1560 = vmatprep.subr.mxu0 0.0
    %1561 = vmatpush1.msra.mxu0 0.0
    %1562 = vmatprep.subr.mxu0 0.0
    %1563 = vmatpush1.msra.mxu0 0.0
    %1564 = vmatprep.subr.mxu0 0.0
    %1565 = vmatpush1.msra.mxu0 0.0
    %1566 = vmatprep.subr.mxu0 0.0
    %1567 = vmatpush1.msra.mxu0 0.0
    %1568 = vmatprep.subr.mxu0 0.0
    %1569 = vmatpush1.msra.mxu0 0.0
    %1570 = vmatprep.subr.mxu0 0.0
    %1571 = vmatpush1.msra.mxu0 0.0
    %1572 = vmatprep.subr.mxu0 0.0
    %1573 = vmatpush1.msra.mxu0 0.0
    %1574 = vmatprep.subr.mxu0 0.0
    %1575 = vmatpush1.msra.mxu0 0.0
    %1576 = vmatprep.subr.mxu0 0.0
    %1577 = vmatpush1.msra.mxu0 0.0
    %1578 = vmatprep.subr.mxu0 0.0
    %1579 = vmatpush1.msra.mxu0 0.0
    %1580 = vmatprep.subr.mxu0 0.0
    %1581 = vmatpush1.msra.mxu0 0.0
    %1582 = vmatprep.subr.mxu0 0.0
    %1583 = vmatpush1.msra.mxu0 0.0
    %1584 = vmatprep.subr.mxu0 0.0
    %1585 = vmatpush1.msra.mxu0 0.0
    %1586 = vmatprep.mubr.f32.mxu0 0.0
    %1587 = vmatmul.mubr.f32.gmra.mrb[0].mxu0 %v1520
    %v1588 = vpop.f32.mrb[0].mxu0
    %v1589 = vadd.f32 0.0, %v1588
    %v1590 = vpop.f32.mrb[0].mxu0
    %1591 = vdwg.mxu0
    %v1592 = vadd.f32 %v1516, %v1589
    %v1593 = vxor.u32 %v1592, 2147483648
    %v1594 = vmul.f32 %v1593, 1.442695
    %v1595 = vpow.pop %v1594
    %v1596 = vadd.f32 %v1595, 1.0
    %v1597 = vrcp.pop %v1596
    %v1598 = vmul.f32 1.0, %v1597
    %v1599 = vtanh.pop %v1592
    %v1600 = vmul.f32 %v1598, %v1515
    %1602 = vrot.lane.b32.xlu0 %v1599, 32
    %v1603 = vpop.permute.xlu0 %1602
    %v1605 = vmul.f32 %v1598, %v1603
    %1607 = vrot.lane.b32.xlu0 %v1605, 32
    %v1608 = vpop.permute.xlu0 %1607
    %v1610 = vadd.f32 %v1600, %v1608
    %v1611 = vtanh.pop %v1610
    %1613 = vrot.lane.b32.xlu0 %v1611, 32
    %v1614 = vpop.permute.xlu0 %1613
    %v1616 = vmul.f32 %v1598, %v1614
    %v1617 = vsel %vm171, %v1616, %v1514
    %v1618 = vsel %vm171, %v1610, %v1515
    %v1619 = vld [vmem:[#allocation2 + $0x10] sm:$0xff]
    %1621 = vrot.lane.b32.xlu0 %v1617, 64
    %v1622 = vpop.permute.xlu0 %1621
    %v1623 = vsel %vm394, %v1622, 0
    %1625 = vmatprep.subr.mxu0 0.0
    %1626 = vmatpush1.msra.mxu0 %v1414
    %1627 = vmatprep.subr.mxu0 0.0
    %1628 = vmatpush1.msra.mxu0 %v1415
    %1629 = vmatprep.subr.mxu0 0.0
    %1630 = vmatpush1.msra.mxu0 %v1416
    %1631 = vmatprep.subr.mxu0 0.0
    %1632 = vmatpush1.msra.mxu0 %v1417
    %1633 = vmatprep.subr.mxu0 0.0
    %1634 = vmatpush1.msra.mxu0 0.0
    %1635 = vmatprep.subr.mxu0 0.0
    %1636 = vmatpush1.msra.mxu0 0.0
    %1637 = vmatprep.subr.mxu0 0.0
    %1638 = vmatpush1.msra.mxu0 0.0
    %1639 = vmatprep.subr.mxu0 0.0
    %1640 = vmatpush1.msra.mxu0 0.0
    %1641 = vmatprep.subr.mxu0 0.0
    %1642 = vmatpush1.msra.mxu0 0.0
    %1643 = vmatprep.subr.mxu0 0.0
    %1644 = vmatpush1.msra.mxu0 0.0
    %1645 = vmatprep.subr.mxu0 0.0
    %1646 = vmatpush1.msra.mxu0 0.0
    %1647 = vmatprep.subr.mxu0 0.0
    %1648 = vmatpush1.msra.mxu0 0.0
    %1649 = vmatprep.subr.mxu0 0.0
    %1650 = vmatpush1.msra.mxu0 0.0
    %1651 = vmatprep.subr.mxu0 0.0
    %1652 = vmatpush1.msra.mxu0 0.0
    %1653 = vmatprep.subr.mxu0 0.0
    %1654 = vmatpush1.msra.mxu0 0.0
    %1655 = vmatprep.subr.mxu0 0.0
    %1656 = vmatpush1.msra.mxu0 0.0
    %1657 = vmatprep.subr.mxu0 0.0
    %1658 = vmatpush1.msra.mxu0 0.0
    %1659 = vmatprep.subr.mxu0 0.0
    %1660 = vmatpush1.msra.mxu0 0.0
    %1661 = vmatprep.subr.mxu0 0.0
    %1662 = vmatpush1.msra.mxu0 0.0
    %1663 = vmatprep.subr.mxu0 0.0
    %1664 = vmatpush1.msra.mxu0 0.0
    %1665 = vmatprep.subr.mxu0 0.0
    %1666 = vmatpush1.msra.mxu0 0.0
    %1667 = vmatprep.subr.mxu0 0.0
    %1668 = vmatpush1.msra.mxu0 0.0
    %1669 = vmatprep.subr.mxu0 0.0
    %1670 = vmatpush1.msra.mxu0 0.0
    %1671 = vmatprep.subr.mxu0 0.0
    %1672 = vmatpush1.msra.mxu0 0.0
    %1673 = vmatprep.subr.mxu0 0.0
    %1674 = vmatpush1.msra.mxu0 0.0
    %1675 = vmatprep.subr.mxu0 0.0
    %1676 = vmatpush1.msra.mxu0 0.0
    %1677 = vmatprep.subr.mxu0 0.0
    %1678 = vmatpush1.msra.mxu0 0.0
    %1679 = vmatprep.subr.mxu0 0.0
    %1680 = vmatpush1.msra.mxu0 0.0
    %1681 = vmatprep.subr.mxu0 0.0
    %1682 = vmatpush1.msra.mxu0 0.0
    %1683 = vmatprep.subr.mxu0 0.0
    %1684 = vmatpush1.msra.mxu0 0.0
    %1685 = vmatprep.subr.mxu0 0.0
    %1686 = vmatpush1.msra.mxu0 0.0
    %1687 = vmatprep.subr.mxu0 0.0
    %1688 = vmatpush1.msra.mxu0 0.0
    %1689 = vmatprep.mubr.f32.mxu0 0.0
    %1690 = vmatmul.mubr.f32.gmra.mrb[0].mxu0 %v1623
    %v1691 = vpop.f32.mrb[0].mxu0
    %v1692 = vadd.f32 0.0, %v1691
    %v1693 = vpop.f32.mrb[0].mxu0
    %1694 = vdwg.mxu0
    %v1695 = vadd.f32 %v1619, %v1692
    %v1696 = vxor.u32 %v1695, 2147483648
    %v1697 = vmul.f32 %v1696, 1.442695
    %v1698 = vpow.pop %v1697
    %v1699 = vadd.f32 %v1698, 1.0
    %v1700 = vrcp.pop %v1699
    %v1701 = vmul.f32 1.0, %v1700
    %v1702 = vtanh.pop %v1695
    %v1703 = vmul.f32 %v1701, %v1618
    %1705 = vrot.lane.b32.xlu0 %v1702, 32
    %v1706 = vpop.permute.xlu0 %1705
    %v1708 = vmul.f32 %v1701, %v1706
    %1710 = vrot.lane.b32.xlu0 %v1708, 32
    %v1711 = vpop.permute.xlu0 %1710
    %v1713 = vadd.f32 %v1703, %v1711
    %v1714 = vtanh.pop %v1713
    %1716 = vrot.lane.b32.xlu0 %v1714, 32
    %v1717 = vpop.permute.xlu0 %1716
    %v1719 = vmul.f32 %v1701, %v1717
    %v1720 = vsel %vm172, %v1719, %v1617
    %v1721 = vsel %vm172, %v1713, %v1618
    %v1722 = vld [vmem:[#allocation2 + $0x18] sm:$0xff]
    %1724 = vrot.lane.b32.xlu0 %v1720, 64
    %v1725 = vpop.permute.xlu0 %1724
    %v1726 = vsel %vm394, %v1725, 0
    %1728 = vmatprep.subr.mxu0 0.0
    %1729 = vmatpush1.msra.mxu0 %v1414
    %1730 = vmatprep.subr.mxu0 0.0
    %1731 = vmatpush1.msra.mxu0 %v1415
    %1732 = vmatprep.subr.mxu0 0.0
    %1733 = vmatpush1.msra.mxu0 %v1416
    %1734 = vmatprep.subr.mxu0 0.0
    %1735 = vmatpush1.msra.mxu0 %v1417
    %1736 = vmatprep.subr.mxu0 0.0
    %1737 = vmatpush1.msra.mxu0 0.0
    %1738 = vmatprep.subr.mxu0 0.0
    %1739 = vmatpush1.msra.mxu0 0.0
    %1740 = vmatprep.subr.mxu0 0.0
    %1741 = vmatpush1.msra.mxu0 0.0
    %1742 = vmatprep.subr.mxu0 0.0
    %1743 = vmatpush1.msra.mxu0 0.0
    %1744 = vmatprep.subr.mxu0 0.0
    %1745 = vmatpush1.msra.mxu0 0.0
    %1746 = vmatprep.subr.mxu0 0.0
    %1747 = vmatpush1.msra.mxu0 0.0
    %1748 = vmatprep.subr.mxu0 0.0
    %1749 = vmatpush1.msra.mxu0 0.0
    %1750 = vmatprep.subr.mxu0 0.0
    %1751 = vmatpush1.msra.mxu0 0.0
    %1752 = vmatprep.subr.mxu0 0.0
    %1753 = vmatpush1.msra.mxu0 0.0
    %1754 = vmatprep.subr.mxu0 0.0
    %1755 = vmatpush1.msra.mxu0 0.0
    %1756 = vmatprep.subr.mxu0 0.0
    %1757 = vmatpush1.msra.mxu0 0.0
    %1758 = vmatprep.subr.mxu0 0.0
    %1759 = vmatpush1.msra.mxu0 0.0
    %1760 = vmatprep.subr.mxu0 0.0
    %1761 = vmatpush1.msra.mxu0 0.0
    %1762 = vmatprep.subr.mxu0 0.0
    %1763 = vmatpush1.msra.mxu0 0.0
    %1764 = vmatprep.subr.mxu0 0.0
    %1765 = vmatpush1.msra.mxu0 0.0
    %1766 = vmatprep.subr.mxu0 0.0
    %1767 = vmatpush1.msra.mxu0 0.0
    %1768 = vmatprep.subr.mxu0 0.0
    %1769 = vmatpush1.msra.mxu0 0.0
    %1770 = vmatprep.subr.mxu0 0.0
    %1771 = vmatpush1.msra.mxu0 0.0
    %1772 = vmatprep.subr.mxu0 0.0
    %1773 = vmatpush1.msra.mxu0 0.0
    %1774 = vmatprep.subr.mxu0 0.0
    %1775 = vmatpush1.msra.mxu0 0.0
    %1776 = vmatprep.subr.mxu0 0.0
    %1777 = vmatpush1.msra.mxu0 0.0
    %1778 = vmatprep.subr.mxu0 0.0
    %1779 = vmatpush1.msra.mxu0 0.0
    %1780 = vmatprep.subr.mxu0 0.0
    %1781 = vmatpush1.msra.mxu0 0.0
    %1782 = vmatprep.subr.mxu0 0.0
    %1783 = vmatpush1.msra.mxu0 0.0
    %1784 = vmatprep.subr.mxu0 0.0
    %1785 = vmatpush1.msra.mxu0 0.0
    %1786 = vmatprep.subr.mxu0 0.0
    %1787 = vmatpush1.msra.mxu0 0.0
    %1788 = vmatprep.subr.mxu0 0.0
    %1789 = vmatpush1.msra.mxu0 0.0
    %1790 = vmatprep.subr.mxu0 0.0
    %1791 = vmatpush1.msra.mxu0 0.0
    %1792 = vmatprep.mubr.f32.mxu0 0.0
    %1793 = vmatmul.mubr.f32.gmra.mrb[0].mxu0 %v1726
    %v1794 = vpop.f32.mrb[0].mxu0
    %v1795 = vadd.f32 0.0, %v1794
    %v1796 = vpop.f32.mrb[0].mxu0
    %1797 = vdwg.mxu0
    %v1798 = vadd.f32 %v1722, %v1795
    %v1799 = vxor.u32 %v1798, 2147483648
    %v1800 = vmul.f32 %v1799, 1.442695
    %v1801 = vpow.pop %v1800
    %v1802 = vadd.f32 %v1801, 1.0
    %v1803 = vrcp.pop %v1802
    %v1804 = vmul.f32 1.0, %v1803
    %v1805 = vtanh.pop %v1798
    %v1806 = vmul.f32 %v1804, %v1721
    %1808 = vrot.lane.b32.xlu0 %v1805, 32
    %v1809 = vpop.permute.xlu0 %1808
    %v1811 = vmul.f32 %v1804, %v1809
    %1813 = vrot.lane.b32.xlu0 %v1811, 32
    %v1814 = vpop.permute.xlu0 %1813
    %v1816 = vadd.f32 %v1806, %v1814
    %v1817 = vtanh.pop %v1816
    %1819 = vrot.lane.b32.xlu0 %v1817, 32
    %v1820 = vpop.permute.xlu0 %1819
    %v1822 = vmul.f32 %v1804, %v1820
    %v1823 = vsel %vm173, %v1822, %v1720
    %v1824 = vsel %vm173, %v1816, %v1721
    %v1825 = vld [vmem:[#allocation2 + $0x20] sm:$0xff]
    %1827 = vrot.lane.b32.xlu0 %v1823, 64
    %v1828 = vpop.permute.xlu0 %1827
    %v1829 = vsel %vm394, %v1828, 0
    %1831 = vmatprep.subr.mxu0 0.0
    %1832 = vmatpush1.msra.mxu0 %v1414
    %1833 = vmatprep.subr.mxu0 0.0
    %1834 = vmatpush1.msra.mxu0 %v1415
    %1835 = vmatprep.subr.mxu0 0.0
    %1836 = vmatpush1.msra.mxu0 %v1416
    %1837 = vmatprep.subr.mxu0 0.0
    %1838 = vmatpush1.msra.mxu0 %v1417
    %1839 = vmatprep.subr.mxu0 0.0
    %1840 = vmatpush1.msra.mxu0 0.0
    %1841 = vmatprep.subr.mxu0 0.0
    %1842 = vmatpush1.msra.mxu0 0.0
    %1843 = vmatprep.subr.mxu0 0.0
    %1844 = vmatpush1.msra.mxu0 0.0
    %1845 = vmatprep.subr.mxu0 0.0
    %1846 = vmatpush1.msra.mxu0 0.0
    %1847 = vmatprep.subr.mxu0 0.0
    %1848 = vmatpush1.msra.mxu0 0.0
    %1849 = vmatprep.subr.mxu0 0.0
    %1850 = vmatpush1.msra.mxu0 0.0
    %1851 = vmatprep.subr.mxu0 0.0
    %1852 = vmatpush1.msra.mxu0 0.0
    %1853 = vmatprep.subr.mxu0 0.0
    %1854 = vmatpush1.msra.mxu0 0.0
    %1855 = vmatprep.subr.mxu0 0.0
    %1856 = vmatpush1.msra.mxu0 0.0
    %1857 = vmatprep.subr.mxu0 0.0
    %1858 = vmatpush1.msra.mxu0 0.0
    %1859 = vmatprep.subr.mxu0 0.0
    %1860 = vmatpush1.msra.mxu0 0.0
    %1861 = vmatprep.subr.mxu0 0.0
    %1862 = vmatpush1.msra.mxu0 0.0
    %1863 = vmatprep.subr.mxu0 0.0
    %1864 = vmatpush1.msra.mxu0 0.0
    %1865 = vmatprep.subr.mxu0 0.0
    %1866 = vmatpush1.msra.mxu0 0.0
    %1867 = vmatprep.subr.mxu0 0.0
    %1868 = vmatpush1.msra.mxu0 0.0
    %1869 = vmatprep.subr.mxu0 0.0
    %1870 = vmatpush1.msra.mxu0 0.0
    %1871 = vmatprep.subr.mxu0 0.0
    %1872 = vmatpush1.msra.mxu0 0.0
    %1873 = vmatprep.subr.mxu0 0.0
    %1874 = vmatpush1.msra.mxu0 0.0
    %1875 = vmatprep.subr.mxu0 0.0
    %1876 = vmatpush1.msra.mxu0 0.0
    %1877 = vmatprep.subr.mxu0 0.0
    %1878 = vmatpush1.msra.mxu0 0.0
    %1879 = vmatprep.subr.mxu0 0.0
    %1880 = vmatpush1.msra.mxu0 0.0
    %1881 = vmatprep.subr.mxu0 0.0
    %1882 = vmatpush1.msra.mxu0 0.0
    %1883 = vmatprep.subr.mxu0 0.0
    %1884 = vmatpush1.msra.mxu0 0.0
    %1885 = vmatprep.subr.mxu0 0.0
    %1886 = vmatpush1.msra.mxu0 0.0
    %1887 = vmatprep.subr.mxu0 0.0
    %1888 = vmatpush1.msra.mxu0 0.0
    %1889 = vmatprep.subr.mxu0 0.0
    %1890 = vmatpush1.msra.mxu0 0.0
    %1891 = vmatprep.subr.mxu0 0.0
    %1892 = vmatpush1.msra.mxu0 0.0
    %1893 = vmatprep.subr.mxu0 0.0
    %1894 = vmatpush1.msra.mxu0 0.0
    %1895 = vmatprep.mubr.f32.mxu0 0.0
    %1896 = vmatmul.mubr.f32.gmra.mrb[0].mxu0 %v1829
    %v1897 = vpop.f32.mrb[0].mxu0
    %v1898 = vadd.f32 0.0, %v1897
    %v1899 = vpop.f32.mrb[0].mxu0
    %1900 = vdwg.mxu0
    %v1901 = vadd.f32 %v1825, %v1898
    %v1902 = vxor.u32 %v1901, 2147483648
    %v1903 = vmul.f32 %v1902, 1.442695
    %v1904 = vpow.pop %v1903
    %v1905 = vadd.f32 %v1904, 1.0
    %v1906 = vrcp.pop %v1905
    %v1907 = vmul.f32 1.0, %v1906
    %v1908 = vtanh.pop %v1901
    %v1909 = vmul.f32 %v1907, %v1824
    %1911 = vrot.lane.b32.xlu0 %v1908, 32
    %v1912 = vpop.permute.xlu0 %1911
    %v1914 = vmul.f32 %v1907, %v1912
    %1916 = vrot.lane.b32.xlu0 %v1914, 32
    %v1917 = vpop.permute.xlu0 %1916
    %v1919 = vadd.f32 %v1909, %v1917
    %v1920 = vtanh.pop %v1919
    %1922 = vrot.lane.b32.xlu0 %v1920, 32
    %v1923 = vpop.permute.xlu0 %1922
    %v1925 = vmul.f32 %v1907, %v1923
    %v1926 = vsel %vm174, %v1925, %v1823
    %v1927 = vsel %vm174, %v1919, %v1824
    %v1928 = vld [vmem:[#allocation2 + $0x28] sm:$0xff]
    %1930 = vrot.lane.b32.xlu0 %v1926, 64
    %v1931 = vpop.permute.xlu0 %1930
    %v1932 = vsel %vm394, %v1931, 0
    %1934 = vmatprep.subr.mxu0 0.0
    %1935 = vmatpush1.msra.mxu0 %v1414
    %1936 = vmatprep.subr.mxu0 0.0
    %1937 = vmatpush1.msra.mxu0 %v1415
    %1938 = vmatprep.subr.mxu0 0.0
    %1939 = vmatpush1.msra.mxu0 %v1416
    %1940 = vmatprep.subr.mxu0 0.0
    %1941 = vmatpush1.msra.mxu0 %v1417
    %1942 = vmatprep.subr.mxu0 0.0
    %1943 = vmatpush1.msra.mxu0 0.0
    %1944 = vmatprep.subr.mxu0 0.0
    %1945 = vmatpush1.msra.mxu0 0.0
    %1946 = vmatprep.subr.mxu0 0.0
    %1947 = vmatpush1.msra.mxu0 0.0
    %1948 = vmatprep.subr.mxu0 0.0
    %1949 = vmatpush1.msra.mxu0 0.0
    %1950 = vmatprep.subr.mxu0 0.0
    %1951 = vmatpush1.msra.mxu0 0.0
    %1952 = vmatprep.subr.mxu0 0.0
    %1953 = vmatpush1.msra.mxu0 0.0
    %1954 = vmatprep.subr.mxu0 0.0
    %1955 = vmatpush1.msra.mxu0 0.0
    %1956 = vmatprep.subr.mxu0 0.0
    %1957 = vmatpush1.msra.mxu0 0.0
    %1958 = vmatprep.subr.mxu0 0.0
    %1959 = vmatpush1.msra.mxu0 0.0
    %1960 = vmatprep.subr.mxu0 0.0
    %1961 = vmatpush1.msra.mxu0 0.0
    %1962 = vmatprep.subr.mxu0 0.0
    %1963 = vmatpush1.msra.mxu0 0.0
    %1964 = vmatprep.subr.mxu0 0.0
    %1965 = vmatpush1.msra.mxu0 0.0
    %1966 = vmatprep.subr.mxu0 0.0
    %1967 = vmatpush1.msra.mxu0 0.0
    %1968 = vmatprep.subr.mxu0 0.0
    %1969 = vmatpush1.msra.mxu0 0.0
    %1970 = vmatprep.subr.mxu0 0.0
    %1971 = vmatpush1.msra.mxu0 0.0
    %1972 = vmatprep.subr.mxu0 0.0
    %1973 = vmatpush1.msra.mxu0 0.0
    %1974 = vmatprep.subr.mxu0 0.0
    %1975 = vmatpush1.msra.mxu0 0.0
    %1976 = vmatprep.subr.mxu0 0.0
    %1977 = vmatpush1.msra.mxu0 0.0
    %1978 = vmatprep.subr.mxu0 0.0
    %1979 = vmatpush1.msra.mxu0 0.0
    %1980 = vmatprep.subr.mxu0 0.0
    %1981 = vmatpush1.msra.mxu0 0.0
    %1982 = vmatprep.subr.mxu0 0.0
    %1983 = vmatpush1.msra.mxu0 0.0
    %1984 = vmatprep.subr.mxu0 0.0
    %1985 = vmatpush1.msra.mxu0 0.0
    %1986 = vmatprep.subr.mxu0 0.0
    %1987 = vmatpush1.msra.mxu0 0.0
    %1988 = vmatprep.subr.mxu0 0.0
    %1989 = vmatpush1.msra.mxu0 0.0
    %1990 = vmatprep.subr.mxu0 0.0
    %1991 = vmatpush1.msra.mxu0 0.0
    %1992 = vmatprep.subr.mxu0 0.0
    %1993 = vmatpush1.msra.mxu0 0.0
    %1994 = vmatprep.subr.mxu0 0.0
    %1995 = vmatpush1.msra.mxu0 0.0
    %1996 = vmatprep.subr.mxu0 0.0
    %1997 = vmatpush1.msra.mxu0 0.0
    %1998 = vmatprep.mubr.f32.mxu0 0.0
    %1999 = vmatmul.mubr.f32.gmra.mrb[0].mxu0 %v1932
    %v2000 = vpop.f32.mrb[0].mxu0
    %v2001 = vadd.f32 0.0, %v2000
    %v2002 = vpop.f32.mrb[0].mxu0
    %2003 = vdwg.mxu0
    %v2004 = vadd.f32 %v1928, %v2001
    %v2005 = vxor.u32 %v2004, 2147483648
    %v2006 = vmul.f32 %v2005, 1.442695
    %v2007 = vpow.pop %v2006
    %v2008 = vadd.f32 %v2007, 1.0
    %v2009 = vrcp.pop %v2008
    %v2010 = vmul.f32 1.0, %v2009
    %v2011 = vtanh.pop %v2004
    %v2012 = vmul.f32 %v2010, %v1927
    %2014 = vrot.lane.b32.xlu0 %v2011, 32
    %v2015 = vpop.permute.xlu0 %2014
    %v2017 = vmul.f32 %v2010, %v2015
    %2019 = vrot.lane.b32.xlu0 %v2017, 32
    %v2020 = vpop.permute.xlu0 %2019
    %v2022 = vadd.f32 %v2012, %v2020
    %v2023 = vtanh.pop %v2022
    %2025 = vrot.lane.b32.xlu0 %v2023, 32
    %v2026 = vpop.permute.xlu0 %2025
    %v2028 = vmul.f32 %v2010, %v2026
    %v2029 = vsel %vm175, %v2028, %v1926
    %v2030 = vsel %vm175, %v2022, %v1927
    %v2031 = vld [vmem:[#allocation2 + $0x30] sm:$0xff]
    %2033 = vrot.lane.b32.xlu0 %v2029, 64
    %v2034 = vpop.permute.xlu0 %2033
    %v2035 = vsel %vm394, %v2034, 0
    %2037 = vmatprep.subr.mxu0 0.0
    %2038 = vmatpush1.msra.mxu0 %v1414
    %2039 = vmatprep.subr.mxu0 0.0
    %2040 = vmatpush1.msra.mxu0 %v1415
    %2041 = vmatprep.subr.mxu0 0.0
    %2042 = vmatpush1.msra.mxu0 %v1416
    %2043 = vmatprep.subr.mxu0 0.0
    %2044 = vmatpush1.msra.mxu0 %v1417
    %2045 = vmatprep.subr.mxu0 0.0
    %2046 = vmatpush1.msra.mxu0 0.0
    %2047 = vmatprep.subr.mxu0 0.0
    %2048 = vmatpush1.msra.mxu0 0.0
    %2049 = vmatprep.subr.mxu0 0.0
    %2050 = vmatpush1.msra.mxu0 0.0
    %2051 = vmatprep.subr.mxu0 0.0
    %2052 = vmatpush1.msra.mxu0 0.0
    %2053 = vmatprep.subr.mxu0 0.0
    %2054 = vmatpush1.msra.mxu0 0.0
    %2055 = vmatprep.subr.mxu0 0.0
    %2056 = vmatpush1.msra.mxu0 0.0
    %2057 = vmatprep.subr.mxu0 0.0
    %2058 = vmatpush1.msra.mxu0 0.0
    %2059 = vmatprep.subr.mxu0 0.0
    %2060 = vmatpush1.msra.mxu0 0.0
    %2061 = vmatprep.subr.mxu0 0.0
    %2062 = vmatpush1.msra.mxu0 0.0
    %2063 = vmatprep.subr.mxu0 0.0
    %2064 = vmatpush1.msra.mxu0 0.0
    %2065 = vmatprep.subr.mxu0 0.0
    %2066 = vmatpush1.msra.mxu0 0.0
    %2067 = vmatprep.subr.mxu0 0.0
    %2068 = vmatpush1.msra.mxu0 0.0
    %2069 = vmatprep.subr.mxu0 0.0
    %2070 = vmatpush1.msra.mxu0 0.0
    %2071 = vmatprep.subr.mxu0 0.0
    %2072 = vmatpush1.msra.mxu0 0.0
    %2073 = vmatprep.subr.mxu0 0.0
    %2074 = vmatpush1.msra.mxu0 0.0
    %2075 = vmatprep.subr.mxu0 0.0
    %2076 = vmatpush1.msra.mxu0 0.0
    %2077 = vmatprep.subr.mxu0 0.0
    %2078 = vmatpush1.msra.mxu0 0.0
    %2079 = vmatprep.subr.mxu0 0.0
    %2080 = vmatpush1.msra.mxu0 0.0
    %2081 = vmatprep.subr.mxu0 0.0
    %2082 = vmatpush1.msra.mxu0 0.0
    %2083 = vmatprep.subr.mxu0 0.0
    %2084 = vmatpush1.msra.mxu0 0.0
    %2085 = vmatprep.subr.mxu0 0.0
    %2086 = vmatpush1.msra.mxu0 0.0
    %2087 = vmatprep.subr.mxu0 0.0
    %2088 = vmatpush1.msra.mxu0 0.0
    %2089 = vmatprep.subr.mxu0 0.0
    %2090 = vmatpush1.msra.mxu0 0.0
    %2091 = vmatprep.subr.mxu0 0.0
    %2092 = vmatpush1.msra.mxu0 0.0
    %2093 = vmatprep.subr.mxu0 0.0
    %2094 = vmatpush1.msra.mxu0 0.0
    %2095 = vmatprep.subr.mxu0 0.0
    %2096 = vmatpush1.msra.mxu0 0.0
    %2097 = vmatprep.subr.mxu0 0.0
    %2098 = vmatpush1.msra.mxu0 0.0
    %2099 = vmatprep.subr.mxu0 0.0
    %2100 = vmatpush1.msra.mxu0 0.0
    %2101 = vmatprep.mubr.f32.mxu0 0.0
    %2102 = vmatmul.mubr.f32.gmra.mrb[0].mxu0 %v2035
    %v2103 = vpop.f32.mrb[0].mxu0
    %v2104 = vadd.f32 0.0, %v2103
    %v2105 = vpop.f32.mrb[0].mxu0
    %2106 = vdwg.mxu0
    %v2107 = vadd.f32 %v2031, %v2104
    %v2108 = vxor.u32 %v2107, 2147483648
    %v2109 = vmul.f32 %v2108, 1.442695
    %v2110 = vpow.pop %v2109
    %v2111 = vadd.f32 %v2110, 1.0
    %v2112 = vrcp.pop %v2111
    %v2113 = vmul.f32 1.0, %v2112
    %v2114 = vtanh.pop %v2107
    %v2115 = vmul.f32 %v2113, %v2030
    %2117 = vrot.lane.b32.xlu0 %v2114, 32
    %v2118 = vpop.permute.xlu0 %2117
    %v2120 = vmul.f32 %v2113, %v2118
    %2122 = vrot.lane.b32.xlu0 %v2120, 32
    %v2123 = vpop.permute.xlu0 %2122
    %v2125 = vadd.f32 %v2115, %v2123
    %v2126 = vtanh.pop %v2125
    %2128 = vrot.lane.b32.xlu0 %v2126, 32
    %v2129 = vpop.permute.xlu0 %2128
    %v2131 = vmul.f32 %v2113, %v2129
    %v2132 = vsel %vm176, %v2131, %v2029
    %v2133 = vsel %vm176, %v2125, %v2030
    %v2134 = vld [vmem:[#allocation2 + $0x38] sm:$0xff]
    %2136 = vrot.lane.b32.xlu0 %v2132, 64
    %v2137 = vpop.permute.xlu0 %2136
    %v2138 = vsel %vm394, %v2137, 0
    %2140 = vmatprep.subr.mxu0 0.0
    %2141 = vmatpush1.msra.mxu0 %v1414
    %2142 = vmatprep.subr.mxu0 0.0
    %2143 = vmatpush1.msra.mxu0 %v1415
    %2144 = vmatprep.subr.mxu0 0.0
    %2145 = vmatpush1.msra.mxu0 %v1416
    %2146 = vmatprep.subr.mxu0 0.0
    %2147 = vmatpush1.msra.mxu0 %v1417
    %2148 = vmatprep.subr.mxu0 0.0
    %2149 = vmatpush1.msra.mxu0 0.0
    %2150 = vmatprep.subr.mxu0 0.0
    %2151 = vmatpush1.msra.mxu0 0.0
    %2152 = vmatprep.subr.mxu0 0.0
    %2153 = vmatpush1.msra.mxu0 0.0
    %2154 = vmatprep.subr.mxu0 0.0
    %2155 = vmatpush1.msra.mxu0 0.0
    %2156 = vmatprep.subr.mxu0 0.0
    %2157 = vmatpush1.msra.mxu0 0.0
    %2158 = vmatprep.subr.mxu0 0.0
    %2159 = vmatpush1.msra.mxu0 0.0
    %2160 = vmatprep.subr.mxu0 0.0
    %2161 = vmatpush1.msra.mxu0 0.0
    %2162 = vmatprep.subr.mxu0 0.0
    %2163 = vmatpush1.msra.mxu0 0.0
    %2164 = vmatprep.subr.mxu0 0.0
    %2165 = vmatpush1.msra.mxu0 0.0
    %2166 = vmatprep.subr.mxu0 0.0
    %2167 = vmatpush1.msra.mxu0 0.0
    %2168 = vmatprep.subr.mxu0 0.0
    %2169 = vmatpush1.msra.mxu0 0.0
    %2170 = vmatprep.subr.mxu0 0.0
    %2171 = vmatpush1.msra.mxu0 0.0
    %2172 = vmatprep.subr.mxu0 0.0
    %2173 = vmatpush1.msra.mxu0 0.0
    %2174 = vmatprep.subr.mxu0 0.0
    %2175 = vmatpush1.msra.mxu0 0.0
    %2176 = vmatprep.subr.mxu0 0.0
    %2177 = vmatpush1.msra.mxu0 0.0
    %2178 = vmatprep.subr.mxu0 0.0
    %2179 = vmatpush1.msra.mxu0 0.0
    %2180 = vmatprep.subr.mxu0 0.0
    %2181 = vmatpush1.msra.mxu0 0.0
    %2182 = vmatprep.subr.mxu0 0.0
    %2183 = vmatpush1.msra.mxu0 0.0
    %2184 = vmatprep.subr.mxu0 0.0
    %2185 = vmatpush1.msra.mxu0 0.0
    %2186 = vmatprep.subr.mxu0 0.0
    %2187 = vmatpush1.msra.mxu0 0.0
    %2188 = vmatprep.subr.mxu0 0.0
    %2189 = vmatpush1.msra.mxu0 0.0
    %2190 = vmatprep.subr.mxu0 0.0
    %2191 = vmatpush1.msra.mxu0 0.0
    %2192 = vmatprep.subr.mxu0 0.0
    %2193 = vmatpush1.msra.mxu0 0.0
    %2194 = vmatprep.subr.mxu0 0.0
    %2195 = vmatpush1.msra.mxu0 0.0
    %2196 = vmatprep.subr.mxu0 0.0
    %2197 = vmatpush1.msra.mxu0 0.0
    %2198 = vmatprep.subr.mxu0 0.0
    %2199 = vmatpush1.msra.mxu0 0.0
    %2200 = vmatprep.subr.mxu0 0.0
    %2201 = vmatpush1.msra.mxu0 0.0
    %2202 = vmatprep.subr.mxu0 0.0
    %2203 = vmatpush1.msra.mxu0 0.0
    %2204 = vmatprep.mubr.f32.mxu0 0.0
    %2205 = vmatmul.mubr.f32.gmra.mrb[0].mxu0 %v2138
    %v2206 = vpop.f32.mrb[0].mxu0
    %v2207 = vadd.f32 0.0, %v2206
    %v2208 = vpop.f32.mrb[0].mxu0
    %2209 = vdwg.mxu0
    %v2210 = vadd.f32 %v2134, %v2207
    %v2211 = vxor.u32 %v2210, 2147483648
    %v2212 = vmul.f32 %v2211, 1.442695
    %v2213 = vpow.pop %v2212
    %v2214 = vadd.f32 %v2213, 1.0
    %v2215 = vrcp.pop %v2214
    %v2216 = vmul.f32 1.0, %v2215
    %v2217 = vtanh.pop %v2210
    %v2218 = vmul.f32 %v2216, %v2133
    %2220 = vrot.lane.b32.xlu0 %v2217, 32
    %v2221 = vpop.permute.xlu0 %2220
    %v2223 = vmul.f32 %v2216, %v2221
    %2225 = vrot.lane.b32.xlu0 %v2223, 32
    %v2226 = vpop.permute.xlu0 %2225
    %v2228 = vadd.f32 %v2218, %v2226
    %v2229 = vtanh.pop %v2228
    %2231 = vrot.lane.b32.xlu0 %v2229, 32
    %v2232 = vpop.permute.xlu0 %2231
    %v2234 = vmul.f32 %v2216, %v2232
    %v2235 = vsel %vm177, %v2234, %v2132
    %v2236 = vmul.f32 %v2235, %v2235
    %2238 = vrot.lane.b32.xlu0 %v2236, 64
    %v2239 = vpop.permute.xlu0 %2238
    %v2241 = vsel %vm394, %v2239, 0.0
    %2242 = vadd.xlane.f32.xlu0 %v2241
    %v2243 = vpop.xlane.xlu0 %2242
    %v2244 = vmax.f32 %v2243, 1e-12
    %v2245 = vrsqrt.pop %v2244
    %v2246 = vmul.f32 %v2235, %v2245
    %2248 = vrot.lane.b32.xlu0 %v2246, 64
    %v2249 = vpop.permute.xlu0 %2248
    %2251 = vst.msk [vmem:[#allocation18] sm:$0xff] %vm394, %v2249
    %v2252 = vld [vmem:[%s9] sm:$0xff]
    %v2253 = vld [vmem:[%s9 + $0x8] sm:$0xff]
    %v2254 = vld [vmem:[%s9 + $0x10] sm:$0xff]
    %v2255 = vld [vmem:[%s9 + $0x18] sm:$0xff]
    %v2256 = vsel %vm394, %v2249, 0
    %2258 = vmatprep.subr.mxu0 0.0
    %2259 = vmatpush1.msra.mxu0 %v2252
    %2260 = vmatprep.subr.mxu0 0.0
    %2261 = vmatpush1.msra.mxu0 %v2253
    %2262 = vmatprep.subr.mxu0 0.0
    %2263 = vmatpush1.msra.mxu0 %v2254
    %2264 = vmatprep.subr.mxu0 0.0
    %2265 = vmatpush1.msra.mxu0 %v2255
    %2266 = vmatprep.subr.mxu0 0.0
    %2267 = vmatpush1.msra.mxu0 0.0
    %2268 = vmatprep.subr.mxu0 0.0
    %2269 = vmatpush1.msra.mxu0 0.0
    %2270 = vmatprep.subr.mxu0 0.0
    %2271 = vmatpush1.msra.mxu0 0.0
    %2272 = vmatprep.subr.mxu0 0.0
    %2273 = vmatpush1.msra.mxu0 0.0
    %2274 = vmatprep.subr.mxu0 0.0
    %2275 = vmatpush1.msra.mxu0 0.0
    %2276 = vmatprep.subr.mxu0 0.0
    %2277 = vmatpush1.msra.mxu0 0.0
    %2278 = vmatprep.subr.mxu0 0.0
    %2279 = vmatpush1.msra.mxu0 0.0
    %2280 = vmatprep.subr.mxu0 0.0
    %2281 = vmatpush1.msra.mxu0 0.0
    %2282 = vmatprep.subr.mxu0 0.0
    %2283 = vmatpush1.msra.mxu0 0.0
    %2284 = vmatprep.subr.mxu0 0.0
    %2285 = vmatpush1.msra.mxu0 0.0
    %2286 = vmatprep.subr.mxu0 0.0
    %2287 = vmatpush1.msra.mxu0 0.0
    %2288 = vmatprep.subr.mxu0 0.0
    %2289 = vmatpush1.msra.mxu0 0.0
    %2290 = vmatprep.subr.mxu0 0.0
    %2291 = vmatpush1.msra.mxu0 0.0
    %2292 = vmatprep.subr.mxu0 0.0
    %2293 = vmatpush1.msra.mxu0 0.0
    %2294 = vmatprep.subr.mxu0 0.0
    %2295 = vmatpush1.msra.mxu0 0.0
    %2296 = vmatprep.subr.mxu0 0.0
    %2297 = vmatpush1.msra.mxu0 0.0
    %2298 = vmatprep.subr.mxu0 0.0
    %2299 = vmatpush1.msra.mxu0 0.0
    %2300 = vmatprep.subr.mxu0 0.0
    %2301 = vmatpush1.msra.mxu0 0.0
    %2302 = vmatprep.subr.mxu0 0.0
    %2303 = vmatpush1.msra.mxu0 0.0
    %2304 = vmatprep.subr.mxu0 0.0
    %2305 = vmatpush1.msra.mxu0 0.0
    %2306 = vmatprep.subr.mxu0 0.0
    %2307 = vmatpush1.msra.mxu0 0.0
    %2308 = vmatprep.subr.mxu0 0.0
    %2309 = vmatpush1.msra.mxu0 0.0
    %2310 = vmatprep.subr.mxu0 0.0
    %2311 = vmatpush1.msra.mxu0 0.0
    %2312 = vmatprep.subr.mxu0 0.0
    %2313 = vmatpush1.msra.mxu0 0.0
    %2314 = vmatprep.subr.mxu0 0.0
    %2315 = vmatpush1.msra.mxu0 0.0
    %2316 = vmatprep.subr.mxu0 0.0
    %2317 = vmatpush1.msra.mxu0 0.0
    %2318 = vmatprep.subr.mxu0 0.0
    %2319 = vmatpush1.msra.mxu0 0.0
    %2320 = vmatprep.subr.mxu0 0.0
    %2321 = vmatpush1.msra.mxu0 0.0
    %2322 = vmatprep.mubr.f32.mxu0 0.0
    %2323 = vmatmul.mubr.f32.gmra.mrb[0].mxu0 %v2256
    %v2324 = vpop.f32.mrb[0].mxu0
    %v2325 = vadd.f32 0.0, %v2324
    %v2326 = vpop.f32.mrb[0].mxu0
    %2327 = vdwg.mxu0
    %v2328 = vld [vmem:[#allocation4] sm:$0xff]
    %v2329 = vld [vmem:[#allocation4 + $0x8] sm:$0xff]
    %v2330 = vld [vmem:[#allocation4 + $0x10] sm:$0xff]
    %v2331 = vld [vmem:[#allocation4 + $0x18] sm:$0xff]
    %v2332 = vld [vmem:[#allocation4 + $0x20] sm:$0xff]
    %v2333 = vld [vmem:[#allocation4 + $0x28] sm:$0xff]
    %v2334 = vld [vmem:[#allocation4 + $0x30] sm:$0xff]
    %v2335 = vld [vmem:[#allocation4 + $0x38] sm:$0xff]
    %v2336 = vld [vmem:[#allocation12] sm:$0x1]
    %v2338 = vlaneseq
    %v2339 = vshrl.u32 %v2338, 7
    %v2340 = vsub.s32 0, %v2339
    %v2341 = vrot.slane %v2336, %v2340
    %2343 = vmatprep.subr.mxu0 0.0
    %2344 = vmatpush1.msra.mxu0 %v2328
    %2345 = vmatprep.subr.mxu0 0.0
    %2346 = vmatpush1.msra.mxu0 %v2329
    %2347 = vmatprep.subr.mxu0 0.0
    %2348 = vmatpush1.msra.mxu0 %v2330
    %2349 = vmatprep.subr.mxu0 0.0
    %2350 = vmatpush1.msra.mxu0 %v2331
    %2351 = vmatprep.subr.mxu0 0.0
    %2352 = vmatpush1.msra.mxu0 %v2332
    %2353 = vmatprep.subr.mxu0 0.0
    %2354 = vmatpush1.msra.mxu0 %v2333
    %2355 = vmatprep.subr.mxu0 0.0
    %2356 = vmatpush1.msra.mxu0 %v2334
    %2357 = vmatprep.subr.mxu0 0.0
    %2358 = vmatpush1.msra.mxu0 %v2335
    %2359 = vmatprep.subr.mxu0 0.0
    %2360 = vmatpush1.msra.mxu0 0.0
    %2361 = vmatprep.subr.mxu0 0.0
    %2362 = vmatpush1.msra.mxu0 0.0
    %2363 = vmatprep.subr.mxu0 0.0
    %2364 = vmatpush1.msra.mxu0 0.0
    %2365 = vmatprep.subr.mxu0 0.0
    %2366 = vmatpush1.msra.mxu0 0.0
    %2367 = vmatprep.subr.mxu0 0.0
    %2368 = vmatpush1.msra.mxu0 0.0
    %2369 = vmatprep.subr.mxu0 0.0
    %2370 = vmatpush1.msra.mxu0 0.0
    %2371 = vmatprep.subr.mxu0 0.0
    %2372 = vmatpush1.msra.mxu0 0.0
    %2373 = vmatprep.subr.mxu0 0.0
    %2374 = vmatpush1.msra.mxu0 0.0
    %2375 = vmatprep.subr.mxu0 0.0
    %2376 = vmatpush1.msra.mxu0 0.0
    %2377 = vmatprep.subr.mxu0 0.0
    %2378 = vmatpush1.msra.mxu0 0.0
    %2379 = vmatprep.subr.mxu0 0.0
    %2380 = vmatpush1.msra.mxu0 0.0
    %2381 = vmatprep.subr.mxu0 0.0
    %2382 = vmatpush1.msra.mxu0 0.0
    %2383 = vmatprep.subr.mxu0 0.0
    %2384 = vmatpush1.msra.mxu0 0.0
    %2385 = vmatprep.subr.mxu0 0.0
    %2386 = vmatpush1.msra.mxu0 0.0
    %2387 = vmatprep.subr.mxu0 0.0
    %2388 = vmatpush1.msra.mxu0 0.0
    %2389 = vmatprep.subr.mxu0 0.0
    %2390 = vmatpush1.msra.mxu0 0.0
    %2391 = vmatprep.subr.mxu0 0.0
    %2392 = vmatpush1.msra.mxu0 0.0
    %2393 = vmatprep.subr.mxu0 0.0
    %2394 = vmatpush1.msra.mxu0 0.0
    %2395 = vmatprep.subr.mxu0 0.0
    %2396 = vmatpush1.msra.mxu0 0.0
    %2397 = vmatprep.subr.mxu0 0.0
    %2398 = vmatpush1.msra.mxu0 0.0
    %2399 = vmatprep.subr.mxu0 0.0
    %2400 = vmatpush1.msra.mxu0 0.0
    %2401 = vmatprep.subr.mxu0 0.0
    %2402 = vmatpush1.msra.mxu0 0.0
    %2403 = vmatprep.subr.mxu0 0.0
    %2404 = vmatpush1.msra.mxu0 0.0
    %2405 = vmatprep.subr.mxu0 0.0
    %2406 = vmatpush1.msra.mxu0 0.0
    %2407 = vmatprep.mubr.f32.mxu0 0.0
    %2408 = vmatmul.mubr.f32.gmra.mrb[0].mxu0 %v253
    %v2409 = vpop.f32.mrb[0].mxu0
    %v2410 = vadd.f32 %v2341, %v2409
    %v2411 = vpop.f32.mrb[0].mxu0
    %2412 = vmatprep.mubr.f32.mxu0 0.0
    %2413 = vmatmul.mubr.f32.gmra.mrb[0].mxu0 %v256
    %v2414 = vpop.f32.mrb[0].mxu0
    %v2415 = vadd.f32 %v2341, %v2414
    %v2416 = vpop.f32.mrb[0].mxu0
    %2417 = vmatprep.mubr.f32.mxu0 0.0
    %2418 = vmatmul.mubr.f32.gmra.mrb[0].mxu0 %v259
    %v2419 = vpop.f32.mrb[0].mxu0
    %v2420 = vadd.f32 %v2341, %v2419
    %v2421 = vpop.f32.mrb[0].mxu0
    %2422 = vmatprep.mubr.f32.mxu0 0.0
    %2423 = vmatmul.mubr.f32.gmra.mrb[0].mxu0 %v262
    %v2424 = vpop.f32.mrb[0].mxu0
    %v2425 = vadd.f32 %v2341, %v2424
    %v2426 = vpop.f32.mrb[0].mxu0
    %2427 = vmatprep.mubr.f32.mxu0 0.0
    %2428 = vmatmul.mubr.f32.gmra.mrb[0].mxu0 %v265
    %v2429 = vpop.f32.mrb[0].mxu0
    %v2430 = vadd.f32 %v2341, %v2429
    %v2431 = vpop.f32.mrb[0].mxu0
    %2432 = vmatprep.mubr.f32.mxu0 0.0
    %2433 = vmatmul.mubr.f32.gmra.mrb[0].mxu0 %v268
    %v2434 = vpop.f32.mrb[0].mxu0
    %v2435 = vadd.f32 %v2341, %v2434
    %v2436 = vpop.f32.mrb[0].mxu0
    %2437 = vmatprep.mubr.f32.mxu0 0.0
    %2438 = vmatmul.mubr.f32.gmra.mrb[0].mxu0 %v271
    %v2439 = vpop.f32.mrb[0].mxu0
    %v2440 = vadd.f32 %v2341, %v2439
    %v2441 = vpop.f32.mrb[0].mxu0
    %2442 = vmatprep.mubr.f32.mxu0 0.0
    %2443 = vmatmul.mubr.f32.gmra.mrb[0].mxu0 %v274
    %v2444 = vpop.f32.mrb[0].mxu0
    %v2445 = vadd.f32 %v2341, %v2444
    %v2446 = vpop.f32.mrb[0].mxu0
    %2447 = vdwg.mxu0
    %v2448 = vadd.f32 %v2410, %v2325
    %v2449 = vadd.f32 %v2415, %v2325
    %v2450 = vadd.f32 %v2420, %v2325
    %v2451 = vadd.f32 %v2425, %v2325
    %v2452 = vadd.f32 %v2430, %v2325
    %v2453 = vadd.f32 %v2435, %v2325
    %v2454 = vadd.f32 %v2440, %v2325
    %v2455 = vadd.f32 %v2445, %v2325
    %2456 = vst [vmem:[#allocation2] sm:$0xff] %v2448
    %2457 = vst [vmem:[#allocation2 + $0x8] sm:$0xff] %v2449
    %2458 = vst [vmem:[#allocation2 + $0x10] sm:$0xff] %v2450
    %2459 = vst [vmem:[#allocation2 + $0x18] sm:$0xff] %v2451
    %2460 = vst [vmem:[#allocation2 + $0x20] sm:$0xff] %v2452
    %2461 = vst [vmem:[#allocation2 + $0x28] sm:$0xff] %v2453
    %2462 = vst [vmem:[#allocation2 + $0x30] sm:$0xff] %v2454
    %2463 = vst [vmem:[#allocation2 + $0x38] sm:$0xff] %v2455
    %v2464 = vld [vmem:[#allocation10] sm:$0xff]
    %v2465 = vld [vmem:[#allocation10 + $0x8] sm:$0xff]
    %v2466 = vld [vmem:[#allocation10 + $0x10] sm:$0xff]
    %v2467 = vld [vmem:[#allocation10 + $0x18] sm:$0xff]
    %v2468 = vld [vmem:[#allocation2] sm:$0xff]
    %2469 = vmatprep.subr.mxu0 0.0
    %2470 = vmatpush1.msra.mxu0 %v2464
    %2471 = vmatprep.subr.mxu0 0.0
    %2472 = vmatpush1.msra.mxu0 %v2465
    %2473 = vmatprep.subr.mxu0 0.0
    %2474 = vmatpush1.msra.mxu0 %v2466
    %2475 = vmatprep.subr.mxu0 0.0
    %2476 = vmatpush1.msra.mxu0 %v2467
    %2477 = vmatprep.subr.mxu0 0.0
    %2478 = vmatpush1.msra.mxu0 0.0
    %2479 = vmatprep.subr.mxu0 0.0
    %2480 = vmatpush1.msra.mxu0 0.0
    %2481 = vmatprep.subr.mxu0 0.0
    %2482 = vmatpush1.msra.mxu0 0.0
    %2483 = vmatprep.subr.mxu0 0.0
    %2484 = vmatpush1.msra.mxu0 0.0
    %2485 = vmatprep.subr.mxu0 0.0
    %2486 = vmatpush1.msra.mxu0 0.0
    %2487 = vmatprep.subr.mxu0 0.0
    %2488 = vmatpush1.msra.mxu0 0.0
    %2489 = vmatprep.subr.mxu0 0.0
    %2490 = vmatpush1.msra.mxu0 0.0
    %2491 = vmatprep.subr.mxu0 0.0
    %2492 = vmatpush1.msra.mxu0 0.0
    %2493 = vmatprep.subr.mxu0 0.0
    %2494 = vmatpush1.msra.mxu0 0.0
    %2495 = vmatprep.subr.mxu0 0.0
    %2496 = vmatpush1.msra.mxu0 0.0
    %2497 = vmatprep.subr.mxu0 0.0
    %2498 = vmatpush1.msra.mxu0 0.0
    %2499 = vmatprep.subr.mxu0 0.0
    %2500 = vmatpush1.msra.mxu0 0.0
    %2501 = vmatprep.subr.mxu0 0.0
    %2502 = vmatpush1.msra.mxu0 0.0
    %2503 = vmatprep.subr.mxu0 0.0
    %2504 = vmatpush1.msra.mxu0 0.0
    %2505 = vmatprep.subr.mxu0 0.0
    %2506 = vmatpush1.msra.mxu0 0.0
    %2507 = vmatprep.subr.mxu0 0.0
    %2508 = vmatpush1.msra.mxu0 0.0
    %2509 = vmatprep.subr.mxu0 0.0
    %2510 = vmatpush1.msra.mxu0 0.0
    %2511 = vmatprep.subr.mxu0 0.0
    %2512 = vmatpush1.msra.mxu0 0.0
    %2513 = vmatprep.subr.mxu0 0.0
    %2514 = vmatpush1.msra.mxu0 0.0
    %2515 = vmatprep.subr.mxu0 0.0
    %2516 = vmatpush1.msra.mxu0 0.0
    %2517 = vmatprep.subr.mxu0 0.0
    %2518 = vmatpush1.msra.mxu0 0.0
    %2519 = vmatprep.subr.mxu0 0.0
    %2520 = vmatpush1.msra.mxu0 0.0
    %2521 = vmatprep.subr.mxu0 0.0
    %2522 = vmatpush1.msra.mxu0 0.0
    %2523 = vmatprep.subr.mxu0 0.0
    %2524 = vmatpush1.msra.mxu0 0.0
    %2525 = vmatprep.subr.mxu0 0.0
    %2526 = vmatpush1.msra.mxu0 0.0
    %2527 = vmatprep.subr.mxu0 0.0
    %2528 = vmatpush1.msra.mxu0 0.0
    %2529 = vmatprep.subr.mxu0 0.0
    %2530 = vmatpush1.msra.mxu0 0.0
    %2531 = vmatprep.subr.mxu0 0.0
    %2532 = vmatpush1.msra.mxu0 0.0
    %2533 = vmatprep.mubr.f32.mxu0 0.0
    %2534 = vmatmul.mubr.f32.gmra.mrb[0].mxu0 %v396
    %v2535 = vpop.f32.mrb[0].mxu0
    %v2536 = vadd.f32 0.0, %v2535
    %v2537 = vpop.f32.mrb[0].mxu0
    %2538 = vdwg.mxu0
    %v2539 = vadd.f32 %v2468, %v2536
    %v2540 = vxor.u32 %v2539, 2147483648
    %v2541 = vmul.f32 %v2540, 1.442695
    %v2542 = vpow.pop %v2541
    %v2543 = vadd.f32 %v2542, 1.0
    %v2544 = vrcp.pop %v2543
    %v2545 = vmul.f32 1.0, %v2544
    %v2546 = vtanh.pop %v2539
    %v2547 = vmul.f32 %v2545, 0.0
    %2549 = vrot.lane.b32.xlu0 %v2546, 32
    %v2550 = vpop.permute.xlu0 %2549
    %v2552 = vmul.f32 %v2545, %v2550
    %2554 = vrot.lane.b32.xlu0 %v2552, 32
    %v2555 = vpop.permute.xlu0 %2554
    %v2557 = vadd.f32 %v2547, %v2555
    %v2558 = vtanh.pop %v2557
    %2560 = vrot.lane.b32.xlu0 %v2558, 32
    %v2561 = vpop.permute.xlu0 %2560
    %v2563 = vmul.f32 %v2545, %v2561
    %v2564 = vsel %vm170, %v2563, 0.0
    %2566 = vrot.lane.b32.xlu0 %v2564, 64
    %v2567 = vpop.permute.xlu0 %2566
    %2569 = vst.msk [vmem:[#allocation3] sm:$0xff] %vm394, %v2567
    %v2570 = vsel %vm170, %v2557, 0.0
    %v2571 = vld [vmem:[#allocation2 + $0x8] sm:$0xff]
    %v2572 = vsel %vm394, %v2567, 0
    %2574 = vmatprep.subr.mxu0 0.0
    %2575 = vmatpush1.msra.mxu0 %v2464
    %2576 = vmatprep.subr.mxu0 0.0
    %2577 = vmatpush1.msra.mxu0 %v2465
    %2578 = vmatprep.subr.mxu0 0.0
    %2579 = vmatpush1.msra.mxu0 %v2466
    %2580 = vmatprep.subr.mxu0 0.0
    %2581 = vmatpush1.msra.mxu0 %v2467
    %2582 = vmatprep.subr.mxu0 0.0
    %2583 = vmatpush1.msra.mxu0 0.0
    %2584 = vmatprep.subr.mxu0 0.0
    %2585 = vmatpush1.msra.mxu0 0.0
    %2586 = vmatprep.subr.mxu0 0.0
    %2587 = vmatpush1.msra.mxu0 0.0
    %2588 = vmatprep.subr.mxu0 0.0
    %2589 = vmatpush1.msra.mxu0 0.0
    %2590 = vmatprep.subr.mxu0 0.0
    %2591 = vmatpush1.msra.mxu0 0.0
    %2592 = vmatprep.subr.mxu0 0.0
    %2593 = vmatpush1.msra.mxu0 0.0
    %2594 = vmatprep.subr.mxu0 0.0
    %2595 = vmatpush1.msra.mxu0 0.0
    %2596 = vmatprep.subr.mxu0 0.0
    %2597 = vmatpush1.msra.mxu0 0.0
    %2598 = vmatprep.subr.mxu0 0.0
    %2599 = vmatpush1.msra.mxu0 0.0
    %2600 = vmatprep.subr.mxu0 0.0
    %2601 = vmatpush1.msra.mxu0 0.0
    %2602 = vmatprep.subr.mxu0 0.0
    %2603 = vmatpush1.msra.mxu0 0.0
    %2604 = vmatprep.subr.mxu0 0.0
    %2605 = vmatpush1.msra.mxu0 0.0
    %2606 = vmatprep.subr.mxu0 0.0
    %2607 = vmatpush1.msra.mxu0 0.0
    %2608 = vmatprep.subr.mxu0 0.0
    %2609 = vmatpush1.msra.mxu0 0.0
    %2610 = vmatprep.subr.mxu0 0.0
    %2611 = vmatpush1.msra.mxu0 0.0
    %2612 = vmatprep.subr.mxu0 0.0
    %2613 = vmatpush1.msra.mxu0 0.0
    %2614 = vmatprep.subr.mxu0 0.0
    %2615 = vmatpush1.msra.mxu0 0.0
    %2616 = vmatprep.subr.mxu0 0.0
    %2617 = vmatpush1.msra.mxu0 0.0
    %2618 = vmatprep.subr.mxu0 0.0
    %2619 = vmatpush1.msra.mxu0 0.0
    %2620 = vmatprep.subr.mxu0 0.0
    %2621 = vmatpush1.msra.mxu0 0.0
    %2622 = vmatprep.subr.mxu0 0.0
    %2623 = vmatpush1.msra.mxu0 0.0
    %2624 = vmatprep.subr.mxu0 0.0
    %2625 = vmatpush1.msra.mxu0 0.0
    %2626 = vmatprep.subr.mxu0 0.0
    %2627 = vmatpush1.msra.mxu0 0.0
    %2628 = vmatprep.subr.mxu0 0.0
    %2629 = vmatpush1.msra.mxu0 0.0
    %2630 = vmatprep.subr.mxu0 0.0
    %2631 = vmatpush1.msra.mxu0 0.0
    %2632 = vmatprep.subr.mxu0 0.0
    %2633 = vmatpush1.msra.mxu0 0.0
    %2634 = vmatprep.subr.mxu0 0.0
    %2635 = vmatpush1.msra.mxu0 0.0
    %2636 = vmatprep.subr.mxu0 0.0
    %2637 = vmatpush1.msra.mxu0 0.0
    %2638 = vmatprep.mubr.f32.mxu0 0.0
    %2639 = vmatmul.mubr.f32.gmra.mrb[0].mxu0 %v2572
    %v2640 = vpop.f32.mrb[0].mxu0
    %v2641 = vadd.f32 0.0, %v2640
    %v2642 = vpop.f32.mrb[0].mxu0
    %2643 = vdwg.mxu0
    %v2644 = vadd.f32 %v2571, %v2641
    %v2645 = vxor.u32 %v2644, 2147483648
    %v2646 = vmul.f32 %v2645, 1.442695
    %v2647 = vpow.pop %v2646
    %v2648 = vadd.f32 %v2647, 1.0
    %v2649 = vrcp.pop %v2648
    %v2650 = vmul.f32 1.0, %v2649
    %v2651 = vtanh.pop %v2644
    %v2652 = vmul.f32 %v2650, %v2570
    %2654 = vrot.lane.b32.xlu0 %v2651, 32
    %v2655 = vpop.permute.xlu0 %2654
    %v2657 = vmul.f32 %v2650, %v2655
    %2659 = vrot.lane.b32.xlu0 %v2657, 32
    %v2660 = vpop.permute.xlu0 %2659
    %v2662 = vadd.f32 %v2652, %v2660
    %v2663 = vtanh.pop %v2662
    %2665 = vrot.lane.b32.xlu0 %v2663, 32
    %v2666 = vpop.permute.xlu0 %2665
    %v2668 = vmul.f32 %v2650, %v2666
    %v2669 = vsel %vm171, %v2668, 0.0
    %2671 = vrot.lane.b32.xlu0 %v2669, 64
    %v2672 = vpop.permute.xlu0 %2671
    %2674 = vst.msk [vmem:[#allocation3 + $0x8] sm:$0xff] %vm394, %v2672
    %v2675 = vsel %vm171, %v2668, %v2564
    %v2676 = vsel %vm171, %v2662, %v2570
    %v2677 = vld [vmem:[#allocation2 + $0x10] sm:$0xff]
    %2679 = vrot.lane.b32.xlu0 %v2675, 64
    %v2680 = vpop.permute.xlu0 %2679
    %v2681 = vsel %vm394, %v2680, 0
    %2683 = vmatprep.subr.mxu0 0.0
    %2684 = vmatpush1.msra.mxu0 %v2464
    %2685 = vmatprep.subr.mxu0 0.0
    %2686 = vmatpush1.msra.mxu0 %v2465
    %2687 = vmatprep.subr.mxu0 0.0
    %2688 = vmatpush1.msra.mxu0 %v2466
    %2689 = vmatprep.subr.mxu0 0.0
    %2690 = vmatpush1.msra.mxu0 %v2467
    %2691 = vmatprep.subr.mxu0 0.0
    %2692 = vmatpush1.msra.mxu0 0.0
    %2693 = vmatprep.subr.mxu0 0.0
    %2694 = vmatpush1.msra.mxu0 0.0
    %2695 = vmatprep.subr.mxu0 0.0
    %2696 = vmatpush1.msra.mxu0 0.0
    %2697 = vmatprep.subr.mxu0 0.0
    %2698 = vmatpush1.msra.mxu0 0.0
    %2699 = vmatprep.subr.mxu0 0.0
    %2700 = vmatpush1.msra.mxu0 0.0
    %2701 = vmatprep.subr.mxu0 0.0
    %2702 = vmatpush1.msra.mxu0 0.0
    %2703 = vmatprep.subr.mxu0 0.0
    %2704 = vmatpush1.msra.mxu0 0.0
    %2705 = vmatprep.subr.mxu0 0.0
    %2706 = vmatpush1.msra.mxu0 0.0
    %2707 = vmatprep.subr.mxu0 0.0
    %2708 = vmatpush1.msra.mxu0 0.0
    %2709 = vmatprep.subr.mxu0 0.0
    %2710 = vmatpush1.msra.mxu0 0.0
    %2711 = vmatprep.subr.mxu0 0.0
    %2712 = vmatpush1.msra.mxu0 0.0
    %2713 = vmatprep.subr.mxu0 0.0
    %2714 = vmatpush1.msra.mxu0 0.0
    %2715 = vmatprep.subr.mxu0 0.0
    %2716 = vmatpush1.msra.mxu0 0.0
    %2717 = vmatprep.subr.mxu0 0.0
    %2718 = vmatpush1.msra.mxu0 0.0
    %2719 = vmatprep.subr.mxu0 0.0
    %2720 = vmatpush1.msra.mxu0 0.0
    %2721 = vmatprep.subr.mxu0 0.0
    %2722 = vmatpush1.msra.mxu0 0.0
    %2723 = vmatprep.subr.mxu0 0.0
    %2724 = vmatpush1.msra.mxu0 0.0
    %2725 = vmatprep.subr.mxu0 0.0
    %2726 = vmatpush1.msra.mxu0 0.0
    %2727 = vmatprep.subr.mxu0 0.0
    %2728 = vmatpush1.msra.mxu0 0.0
    %2729 = vmatprep.subr.mxu0 0.0
    %2730 = vmatpush1.msra.mxu0 0.0
    %2731 = vmatprep.subr.mxu0 0.0
    %2732 = vmatpush1.msra.mxu0 0.0
    %2733 = vmatprep.subr.mxu0 0.0
    %2734 = vmatpush1.msra.mxu0 0.0
    %2735 = vmatprep.subr.mxu0 0.0
    %2736 = vmatpush1.msra.mxu0 0.0
    %2737 = vmatprep.subr.mxu0 0.0
    %2738 = vmatpush1.msra.mxu0 0.0
    %2739 = vmatprep.subr.mxu0 0.0
    %2740 = vmatpush1.msra.mxu0 0.0
    %2741 = vmatprep.subr.mxu0 0.0
    %2742 = vmatpush1.msra.mxu0 0.0
    %2743 = vmatprep.subr.mxu0 0.0
    %2744 = vmatpush1.msra.mxu0 0.0
    %2745 = vmatprep.subr.mxu0 0.0
    %2746 = vmatpush1.msra.mxu0 0.0
    %2747 = vmatprep.mubr.f32.mxu0 0.0
    %2748 = vmatmul.mubr.f32.gmra.mrb[0].mxu0 %v2681
    %v2749 = vpop.f32.mrb[0].mxu0
    %v2750 = vadd.f32 0.0, %v2749
    %v2751 = vpop.f32.mrb[0].mxu0
    %2752 = vdwg.mxu0
    %v2753 = vadd.f32 %v2677, %v2750
    %v2754 = vxor.u32 %v2753, 2147483648
    %v2755 = vmul.f32 %v2754, 1.442695
    %v2756 = vpow.pop %v2755
    %v2757 = vadd.f32 %v2756, 1.0
    %v2758 = vrcp.pop %v2757
    %v2759 = vmul.f32 1.0, %v2758
    %v2760 = vtanh.pop %v2753
    %v2761 = vmul.f32 %v2759, %v2676
    %2763 = vrot.lane.b32.xlu0 %v2760, 32
    %v2764 = vpop.permute.xlu0 %2763
    %v2766 = vmul.f32 %v2759, %v2764
    %2768 = vrot.lane.b32.xlu0 %v2766, 32
    %v2769 = vpop.permute.xlu0 %2768
    %v2771 = vadd.f32 %v2761, %v2769
    %v2772 = vtanh.pop %v2771
    %2774 = vrot.lane.b32.xlu0 %v2772, 32
    %v2775 = vpop.permute.xlu0 %2774
    %v2777 = vmul.f32 %v2759, %v2775
    %v2778 = vsel %vm172, %v2777, 0.0
    %2780 = vrot.lane.b32.xlu0 %v2778, 64
    %v2781 = vpop.permute.xlu0 %2780
    %2783 = vst.msk [vmem:[#allocation3 + $0x10] sm:$0xff] %vm394, %v2781
    %v2784 = vsel %vm172, %v2777, %v2675
    %v2785 = vsel %vm172, %v2771, %v2676
    %v2786 = vld [vmem:[#allocation2 + $0x18] sm:$0xff]
    %2788 = vrot.lane.b32.xlu0 %v2784, 64
    %v2789 = vpop.permute.xlu0 %2788
    %v2790 = vsel %vm394, %v2789, 0
    %2792 = vmatprep.subr.mxu0 0.0
    %2793 = vmatpush1.msra.mxu0 %v2464
    %2794 = vmatprep.subr.mxu0 0.0
    %2795 = vmatpush1.msra.mxu0 %v2465
    %2796 = vmatprep.subr.mxu0 0.0
    %2797 = vmatpush1.msra.mxu0 %v2466
    %2798 = vmatprep.subr.mxu0 0.0
    %2799 = vmatpush1.msra.mxu0 %v2467
    %2800 = vmatprep.subr.mxu0 0.0
    %2801 = vmatpush1.msra.mxu0 0.0
    %2802 = vmatprep.subr.mxu0 0.0
    %2803 = vmatpush1.msra.mxu0 0.0
    %2804 = vmatprep.subr.mxu0 0.0
    %2805 = vmatpush1.msra.mxu0 0.0
    %2806 = vmatprep.subr.mxu0 0.0
    %2807 = vmatpush1.msra.mxu0 0.0
    %2808 = vmatprep.subr.mxu0 0.0
    %2809 = vmatpush1.msra.mxu0 0.0
    %2810 = vmatprep.subr.mxu0 0.0
    %2811 = vmatpush1.msra.mxu0 0.0
    %2812 = vmatprep.subr.mxu0 0.0
    %2813 = vmatpush1.msra.mxu0 0.0
    %2814 = vmatprep.subr.mxu0 0.0
    %2815 = vmatpush1.msra.mxu0 0.0
    %2816 = vmatprep.subr.mxu0 0.0
    %2817 = vmatpush1.msra.mxu0 0.0
    %2818 = vmatprep.subr.mxu0 0.0
    %2819 = vmatpush1.msra.mxu0 0.0
    %2820 = vmatprep.subr.mxu0 0.0
    %2821 = vmatpush1.msra.mxu0 0.0
    %2822 = vmatprep.subr.mxu0 0.0
    %2823 = vmatpush1.msra.mxu0 0.0
    %2824 = vmatprep.subr.mxu0 0.0
    %2825 = vmatpush1.msra.mxu0 0.0
    %2826 = vmatprep.subr.mxu0 0.0
    %2827 = vmatpush1.msra.mxu0 0.0
    %2828 = vmatprep.subr.mxu0 0.0
    %2829 = vmatpush1.msra.mxu0 0.0
    %2830 = vmatprep.subr.mxu0 0.0
    %2831 = vmatpush1.msra.mxu0 0.0
    %2832 = vmatprep.subr.mxu0 0.0
    %2833 = vmatpush1.msra.mxu0 0.0
    %2834 = vmatprep.subr.mxu0 0.0
    %2835 = vmatpush1.msra.mxu0 0.0
    %2836 = vmatprep.subr.mxu0 0.0
    %2837 = vmatpush1.msra.mxu0 0.0
    %2838 = vmatprep.subr.mxu0 0.0
    %2839 = vmatpush1.msra.mxu0 0.0
    %2840 = vmatprep.subr.mxu0 0.0
    %2841 = vmatpush1.msra.mxu0 0.0
    %2842 = vmatprep.subr.mxu0 0.0
    %2843 = vmatpush1.msra.mxu0 0.0
    %2844 = vmatprep.subr.mxu0 0.0
    %2845 = vmatpush1.msra.mxu0 0.0
    %2846 = vmatprep.subr.mxu0 0.0
    %2847 = vmatpush1.msra.mxu0 0.0
    %2848 = vmatprep.subr.mxu0 0.0
    %2849 = vmatpush1.msra.mxu0 0.0
    %2850 = vmatprep.subr.mxu0 0.0
    %2851 = vmatpush1.msra.mxu0 0.0
    %2852 = vmatprep.subr.mxu0 0.0
    %2853 = vmatpush1.msra.mxu0 0.0
    %2854 = vmatprep.subr.mxu0 0.0
    %2855 = vmatpush1.msra.mxu0 0.0
    %2856 = vmatprep.mubr.f32.mxu0 0.0
    %2857 = vmatmul.mubr.f32.gmra.mrb[0].mxu0 %v2790
    %v2858 = vpop.f32.mrb[0].mxu0
    %v2859 = vadd.f32 0.0, %v2858
    %v2860 = vpop.f32.mrb[0].mxu0
    %2861 = vdwg.mxu0
    %v2862 = vadd.f32 %v2786, %v2859
    %v2863 = vxor.u32 %v2862, 2147483648
    %v2864 = vmul.f32 %v2863, 1.442695
    %v2865 = vpow.pop %v2864
    %v2866 = vadd.f32 %v2865, 1.0
    %v2867 = vrcp.pop %v2866
    %v2868 = vmul.f32 1.0, %v2867
    %v2869 = vtanh.pop %v2862
    %v2870 = vmul.f32 %v2868, %v2785
    %2872 = vrot.lane.b32.xlu0 %v2869, 32
    %v2873 = vpop.permute.xlu0 %2872
    %v2875 = vmul.f32 %v2868, %v2873
    %2877 = vrot.lane.b32.xlu0 %v2875, 32
    %v2878 = vpop.permute.xlu0 %2877
    %v2880 = vadd.f32 %v2870, %v2878
    %v2881 = vtanh.pop %v2880
    %2883 = vrot.lane.b32.xlu0 %v2881, 32
    %v2884 = vpop.permute.xlu0 %2883
    %v2886 = vmul.f32 %v2868, %v2884
    %v2887 = vsel %vm173, %v2886, 0.0
    %2889 = vrot.lane.b32.xlu0 %v2887, 64
    %v2890 = vpop.permute.xlu0 %2889
    %2892 = vst.msk [vmem:[#allocation3 + $0x18] sm:$0xff] %vm394, %v2890
    %v2893 = vsel %vm173, %v2886, %v2784
    %v2894 = vsel %vm173, %v2880, %v2785
    %v2895 = vld [vmem:[#allocation2 + $0x20] sm:$0xff]
    %2897 = vrot.lane.b32.xlu0 %v2893, 64
    %v2898 = vpop.permute.xlu0 %2897
    %v2899 = vsel %vm394, %v2898, 0
    %2901 = vmatprep.subr.mxu0 0.0
    %2902 = vmatpush1.msra.mxu0 %v2464
    %2903 = vmatprep.subr.mxu0 0.0
    %2904 = vmatpush1.msra.mxu0 %v2465
    %2905 = vmatprep.subr.mxu0 0.0
    %2906 = vmatpush1.msra.mxu0 %v2466
    %2907 = vmatprep.subr.mxu0 0.0
    %2908 = vmatpush1.msra.mxu0 %v2467
    %2909 = vmatprep.subr.mxu0 0.0
    %2910 = vmatpush1.msra.mxu0 0.0
    %2911 = vmatprep.subr.mxu0 0.0
    %2912 = vmatpush1.msra.mxu0 0.0
    %2913 = vmatprep.subr.mxu0 0.0
    %2914 = vmatpush1.msra.mxu0 0.0
    %2915 = vmatprep.subr.mxu0 0.0
    %2916 = vmatpush1.msra.mxu0 0.0
    %2917 = vmatprep.subr.mxu0 0.0
    %2918 = vmatpush1.msra.mxu0 0.0
    %2919 = vmatprep.subr.mxu0 0.0
    %2920 = vmatpush1.msra.mxu0 0.0
    %2921 = vmatprep.subr.mxu0 0.0
    %2922 = vmatpush1.msra.mxu0 0.0
    %2923 = vmatprep.subr.mxu0 0.0
    %2924 = vmatpush1.msra.mxu0 0.0
    %2925 = vmatprep.subr.mxu0 0.0
    %2926 = vmatpush1.msra.mxu0 0.0
    %2927 = vmatprep.subr.mxu0 0.0
    %2928 = vmatpush1.msra.mxu0 0.0
    %2929 = vmatprep.subr.mxu0 0.0
    %2930 = vmatpush1.msra.mxu0 0.0
    %2931 = vmatprep.subr.mxu0 0.0
    %2932 = vmatpush1.msra.mxu0 0.0
    %2933 = vmatprep.subr.mxu0 0.0
    %2934 = vmatpush1.msra.mxu0 0.0
    %2935 = vmatprep.subr.mxu0 0.0
    %2936 = vmatpush1.msra.mxu0 0.0
    %2937 = vmatprep.subr.mxu0 0.0
    %2938 = vmatpush1.msra.mxu0 0.0
    %2939 = vmatprep.subr.mxu0 0.0
    %2940 = vmatpush1.msra.mxu0 0.0
    %2941 = vmatprep.subr.mxu0 0.0
    %2942 = vmatpush1.msra.mxu0 0.0
    %2943 = vmatprep.subr.mxu0 0.0
    %2944 = vmatpush1.msra.mxu0 0.0
    %2945 = vmatprep.subr.mxu0 0.0
    %2946 = vmatpush1.msra.mxu0 0.0
    %2947 = vmatprep.subr.mxu0 0.0
    %2948 = vmatpush1.msra.mxu0 0.0
    %2949 = vmatprep.subr.mxu0 0.0
    %2950 = vmatpush1.msra.mxu0 0.0
    %2951 = vmatprep.subr.mxu0 0.0
    %2952 = vmatpush1.msra.mxu0 0.0
    %2953 = vmatprep.subr.mxu0 0.0
    %2954 = vmatpush1.msra.mxu0 0.0
    %2955 = vmatprep.subr.mxu0 0.0
    %2956 = vmatpush1.msra.mxu0 0.0
    %2957 = vmatprep.subr.mxu0 0.0
    %2958 = vmatpush1.msra.mxu0 0.0
    %2959 = vmatprep.subr.mxu0 0.0
    %2960 = vmatpush1.msra.mxu0 0.0
    %2961 = vmatprep.subr.mxu0 0.0
    %2962 = vmatpush1.msra.mxu0 0.0
    %2963 = vmatprep.subr.mxu0 0.0
    %2964 = vmatpush1.msra.mxu0 0.0
    %2965 = vmatprep.mubr.f32.mxu0 0.0
    %2966 = vmatmul.mubr.f32.gmra.mrb[0].mxu0 %v2899
    %v2967 = vpop.f32.mrb[0].mxu0
    %v2968 = vadd.f32 0.0, %v2967
    %v2969 = vpop.f32.mrb[0].mxu0
    %2970 = vdwg.mxu0
    %v2971 = vadd.f32 %v2895, %v2968
    %v2972 = vxor.u32 %v2971, 2147483648
    %v2973 = vmul.f32 %v2972, 1.442695
    %v2974 = vpow.pop %v2973
    %v2975 = vadd.f32 %v2974, 1.0
    %v2976 = vrcp.pop %v2975
    %v2977 = vmul.f32 1.0, %v2976
    %v2978 = vtanh.pop %v2971
    %v2979 = vmul.f32 %v2977, %v2894
    %2981 = vrot.lane.b32.xlu0 %v2978, 32
    %v2982 = vpop.permute.xlu0 %2981
    %v2984 = vmul.f32 %v2977, %v2982
    %2986 = vrot.lane.b32.xlu0 %v2984, 32
    %v2987 = vpop.permute.xlu0 %2986
    %v2989 = vadd.f32 %v2979, %v2987
    %v2990 = vtanh.pop %v2989
    %2992 = vrot.lane.b32.xlu0 %v2990, 32
    %v2993 = vpop.permute.xlu0 %2992
    %v2995 = vmul.f32 %v2977, %v2993
    %v2996 = vsel %vm174, %v2995, 0.0
    %2998 = vrot.lane.b32.xlu0 %v2996, 64
    %v2999 = vpop.permute.xlu0 %2998
    %3001 = vst.msk [vmem:[#allocation3 + $0x20] sm:$0xff] %vm394, %v2999
    %v3002 = vsel %vm174, %v2995, %v2893
    %v3003 = vsel %vm174, %v2989, %v2894
    %v3004 = vld [vmem:[#allocation2 + $0x28] sm:$0xff]
    %3006 = vrot.lane.b32.xlu0 %v3002, 64
    %v3007 = vpop.permute.xlu0 %3006
    %v3008 = vsel %vm394, %v3007, 0
    %3010 = vmatprep.subr.mxu0 0.0
    %3011 = vmatpush1.msra.mxu0 %v2464
    %3012 = vmatprep.subr.mxu0 0.0
    %3013 = vmatpush1.msra.mxu0 %v2465
    %3014 = vmatprep.subr.mxu0 0.0
    %3015 = vmatpush1.msra.mxu0 %v2466
    %3016 = vmatprep.subr.mxu0 0.0
    %3017 = vmatpush1.msra.mxu0 %v2467
    %3018 = vmatprep.subr.mxu0 0.0
    %3019 = vmatpush1.msra.mxu0 0.0
    %3020 = vmatprep.subr.mxu0 0.0
    %3021 = vmatpush1.msra.mxu0 0.0
    %3022 = vmatprep.subr.mxu0 0.0
    %3023 = vmatpush1.msra.mxu0 0.0
    %3024 = vmatprep.subr.mxu0 0.0
    %3025 = vmatpush1.msra.mxu0 0.0
    %3026 = vmatprep.subr.mxu0 0.0
    %3027 = vmatpush1.msra.mxu0 0.0
    %3028 = vmatprep.subr.mxu0 0.0
    %3029 = vmatpush1.msra.mxu0 0.0
    %3030 = vmatprep.subr.mxu0 0.0
    %3031 = vmatpush1.msra.mxu0 0.0
    %3032 = vmatprep.subr.mxu0 0.0
    %3033 = vmatpush1.msra.mxu0 0.0
    %3034 = vmatprep.subr.mxu0 0.0
    %3035 = vmatpush1.msra.mxu0 0.0
    %3036 = vmatprep.subr.mxu0 0.0
    %3037 = vmatpush1.msra.mxu0 0.0
    %3038 = vmatprep.subr.mxu0 0.0
    %3039 = vmatpush1.msra.mxu0 0.0
    %3040 = vmatprep.subr.mxu0 0.0
    %3041 = vmatpush1.msra.mxu0 0.0
    %3042 = vmatprep.subr.mxu0 0.0
    %3043 = vmatpush1.msra.mxu0 0.0
    %3044 = vmatprep.subr.mxu0 0.0
    %3045 = vmatpush1.msra.mxu0 0.0
    %3046 = vmatprep.subr.mxu0 0.0
    %3047 = vmatpush1.msra.mxu0 0.0
    %3048 = vmatprep.subr.mxu0 0.0
    %3049 = vmatpush1.msra.mxu0 0.0
    %3050 = vmatprep.subr.mxu0 0.0
    %3051 = vmatpush1.msra.mxu0 0.0
    %3052 = vmatprep.subr.mxu0 0.0
    %3053 = vmatpush1.msra.mxu0 0.0
    %3054 = vmatprep.subr.mxu0 0.0
    %3055 = vmatpush1.msra.mxu0 0.0
    %3056 = vmatprep.subr.mxu0 0.0
    %3057 = vmatpush1.msra.mxu0 0.0
    %3058 = vmatprep.subr.mxu0 0.0
    %3059 = vmatpush1.msra.mxu0 0.0
    %3060 = vmatprep.subr.mxu0 0.0
    %3061 = vmatpush1.msra.mxu0 0.0
    %3062 = vmatprep.subr.mxu0 0.0
    %3063 = vmatpush1.msra.mxu0 0.0
    %3064 = vmatprep.subr.mxu0 0.0
    %3065 = vmatpush1.msra.mxu0 0.0
    %3066 = vmatprep.subr.mxu0 0.0
    %3067 = vmatpush1.msra.mxu0 0.0
    %3068 = vmatprep.subr.mxu0 0.0
    %3069 = vmatpush1.msra.mxu0 0.0
    %3070 = vmatprep.subr.mxu0 0.0
    %3071 = vmatpush1.msra.mxu0 0.0
    %3072 = vmatprep.subr.mxu0 0.0
    %3073 = vmatpush1.msra.mxu0 0.0
    %3074 = vmatprep.mubr.f32.mxu0 0.0
    %3075 = vmatmul.mubr.f32.gmra.mrb[0].mxu0 %v3008
    %v3076 = vpop.f32.mrb[0].mxu0
    %v3077 = vadd.f32 0.0, %v3076
    %v3078 = vpop.f32.mrb[0].mxu0
    %3079 = vdwg.mxu0
    %v3080 = vadd.f32 %v3004, %v3077
    %v3081 = vxor.u32 %v3080, 2147483648
    %v3082 = vmul.f32 %v3081, 1.442695
    %v3083 = vpow.pop %v3082
    %v3084 = vadd.f32 %v3083, 1.0
    %v3085 = vrcp.pop %v3084
    %v3086 = vmul.f32 1.0, %v3085
    %v3087 = vtanh.pop %v3080
    %v3088 = vmul.f32 %v3086, %v3003
    %3090 = vrot.lane.b32.xlu0 %v3087, 32
    %v3091 = vpop.permute.xlu0 %3090
    %v3093 = vmul.f32 %v3086, %v3091
    %3095 = vrot.lane.b32.xlu0 %v3093, 32
    %v3096 = vpop.permute.xlu0 %3095
    %v3098 = vadd.f32 %v3088, %v3096
    %v3099 = vtanh.pop %v3098
    %3101 = vrot.lane.b32.xlu0 %v3099, 32
    %v3102 = vpop.permute.xlu0 %3101
    %v3104 = vmul.f32 %v3086, %v3102
    %v3105 = vsel %vm175, %v3104, 0.0
    %3107 = vrot.lane.b32.xlu0 %v3105, 64
    %v3108 = vpop.permute.xlu0 %3107
    %3110 = vst.msk [vmem:[#allocation3 + $0x28] sm:$0xff] %vm394, %v3108
    %v3111 = vsel %vm175, %v3104, %v3002
    %v3112 = vsel %vm175, %v3098, %v3003
    %v3113 = vld [vmem:[#allocation2 + $0x30] sm:$0xff]
    %3115 = vrot.lane.b32.xlu0 %v3111, 64
    %v3116 = vpop.permute.xlu0 %3115
    %v3117 = vsel %vm394, %v3116, 0
    %3119 = vmatprep.subr.mxu0 0.0
    %3120 = vmatpush1.msra.mxu0 %v2464
    %3121 = vmatprep.subr.mxu0 0.0
    %3122 = vmatpush1.msra.mxu0 %v2465
    %3123 = vmatprep.subr.mxu0 0.0
    %3124 = vmatpush1.msra.mxu0 %v2466
    %3125 = vmatprep.subr.mxu0 0.0
    %3126 = vmatpush1.msra.mxu0 %v2467
    %3127 = vmatprep.subr.mxu0 0.0
    %3128 = vmatpush1.msra.mxu0 0.0
    %3129 = vmatprep.subr.mxu0 0.0
    %3130 = vmatpush1.msra.mxu0 0.0
    %3131 = vmatprep.subr.mxu0 0.0
    %3132 = vmatpush1.msra.mxu0 0.0
    %3133 = vmatprep.subr.mxu0 0.0
    %3134 = vmatpush1.msra.mxu0 0.0
    %3135 = vmatprep.subr.mxu0 0.0
    %3136 = vmatpush1.msra.mxu0 0.0
    %3137 = vmatprep.subr.mxu0 0.0
    %3138 = vmatpush1.msra.mxu0 0.0
    %3139 = vmatprep.subr.mxu0 0.0
    %3140 = vmatpush1.msra.mxu0 0.0
    %3141 = vmatprep.subr.mxu0 0.0
    %3142 = vmatpush1.msra.mxu0 0.0
    %3143 = vmatprep.subr.mxu0 0.0
    %3144 = vmatpush1.msra.mxu0 0.0
    %3145 = vmatprep.subr.mxu0 0.0
    %3146 = vmatpush1.msra.mxu0 0.0
    %3147 = vmatprep.subr.mxu0 0.0
    %3148 = vmatpush1.msra.mxu0 0.0
    %3149 = vmatprep.subr.mxu0 0.0
    %3150 = vmatpush1.msra.mxu0 0.0
    %3151 = vmatprep.subr.mxu0 0.0
    %3152 = vmatpush1.msra.mxu0 0.0
    %3153 = vmatprep.subr.mxu0 0.0
    %3154 = vmatpush1.msra.mxu0 0.0
    %3155 = vmatprep.subr.mxu0 0.0
    %3156 = vmatpush1.msra.mxu0 0.0
    %3157 = vmatprep.subr.mxu0 0.0
    %3158 = vmatpush1.msra.mxu0 0.0
    %3159 = vmatprep.subr.mxu0 0.0
    %3160 = vmatpush1.msra.mxu0 0.0
    %3161 = vmatprep.subr.mxu0 0.0
    %3162 = vmatpush1.msra.mxu0 0.0
    %3163 = vmatprep.subr.mxu0 0.0
    %3164 = vmatpush1.msra.mxu0 0.0
    %3165 = vmatprep.subr.mxu0 0.0
    %3166 = vmatpush1.msra.mxu0 0.0
    %3167 = vmatprep.subr.mxu0 0.0
    %3168 = vmatpush1.msra.mxu0 0.0
    %3169 = vmatprep.subr.mxu0 0.0
    %3170 = vmatpush1.msra.mxu0 0.0
    %3171 = vmatprep.subr.mxu0 0.0
    %3172 = vmatpush1.msra.mxu0 0.0
    %3173 = vmatprep.subr.mxu0 0.0
    %3174 = vmatpush1.msra.mxu0 0.0
    %3175 = vmatprep.subr.mxu0 0.0
    %3176 = vmatpush1.msra.mxu0 0.0
    %3177 = vmatprep.subr.mxu0 0.0
    %3178 = vmatpush1.msra.mxu0 0.0
    %3179 = vmatprep.subr.mxu0 0.0
    %3180 = vmatpush1.msra.mxu0 0.0
    %3181 = vmatprep.subr.mxu0 0.0
    %3182 = vmatpush1.msra.mxu0 0.0
    %3183 = vmatprep.mubr.f32.mxu0 0.0
    %3184 = vmatmul.mubr.f32.gmra.mrb[0].mxu0 %v3117
    %v3185 = vpop.f32.mrb[0].mxu0
    %v3186 = vadd.f32 0.0, %v3185
    %v3187 = vpop.f32.mrb[0].mxu0
    %3188 = vdwg.mxu0
    %v3189 = vadd.f32 %v3113, %v3186
    %v3190 = vxor.u32 %v3189, 2147483648
    %v3191 = vmul.f32 %v3190, 1.442695
    %v3192 = vpow.pop %v3191
    %v3193 = vadd.f32 %v3192, 1.0
    %v3194 = vrcp.pop %v3193
    %v3195 = vmul.f32 1.0, %v3194
    %v3196 = vtanh.pop %v3189
    %v3197 = vmul.f32 %v3195, %v3112
    %3199 = vrot.lane.b32.xlu0 %v3196, 32
    %v3200 = vpop.permute.xlu0 %3199
    %v3202 = vmul.f32 %v3195, %v3200
    %3204 = vrot.lane.b32.xlu0 %v3202, 32
    %v3205 = vpop.permute.xlu0 %3204
    %v3207 = vadd.f32 %v3197, %v3205
    %v3208 = vtanh.pop %v3207
    %3210 = vrot.lane.b32.xlu0 %v3208, 32
    %v3211 = vpop.permute.xlu0 %3210
    %v3213 = vmul.f32 %v3195, %v3211
    %v3214 = vsel %vm176, %v3213, 0.0
    %3216 = vrot.lane.b32.xlu0 %v3214, 64
    %v3217 = vpop.permute.xlu0 %3216
    %3219 = vst.msk [vmem:[#allocation3 + $0x30] sm:$0xff] %vm394, %v3217
    %v3220 = vsel %vm176, %v3213, %v3111
    %v3221 = vsel %vm176, %v3207, %v3112
    %v3222 = vld [vmem:[#allocation2 + $0x38] sm:$0xff]
    %3224 = vrot.lane.b32.xlu0 %v3220, 64
    %v3225 = vpop.permute.xlu0 %3224
    %v3226 = vsel %vm394, %v3225, 0
    %3228 = vmatprep.subr.mxu0 0.0
    %3229 = vmatpush1.msra.mxu0 %v2464
    %3230 = vmatprep.subr.mxu0 0.0
    %3231 = vmatpush1.msra.mxu0 %v2465
    %3232 = vmatprep.subr.mxu0 0.0
    %3233 = vmatpush1.msra.mxu0 %v2466
    %3234 = vmatprep.subr.mxu0 0.0
    %3235 = vmatpush1.msra.mxu0 %v2467
    %3236 = vmatprep.subr.mxu0 0.0
    %3237 = vmatpush1.msra.mxu0 0.0
    %3238 = vmatprep.subr.mxu0 0.0
    %3239 = vmatpush1.msra.mxu0 0.0
    %3240 = vmatprep.subr.mxu0 0.0
    %3241 = vmatpush1.msra.mxu0 0.0
    %3242 = vmatprep.subr.mxu0 0.0
    %3243 = vmatpush1.msra.mxu0 0.0
    %3244 = vmatprep.subr.mxu0 0.0
    %3245 = vmatpush1.msra.mxu0 0.0
    %3246 = vmatprep.subr.mxu0 0.0
    %3247 = vmatpush1.msra.mxu0 0.0
    %3248 = vmatprep.subr.mxu0 0.0
    %3249 = vmatpush1.msra.mxu0 0.0
    %3250 = vmatprep.subr.mxu0 0.0
    %3251 = vmatpush1.msra.mxu0 0.0
    %3252 = vmatprep.subr.mxu0 0.0
    %3253 = vmatpush1.msra.mxu0 0.0
    %3254 = vmatprep.subr.mxu0 0.0
    %3255 = vmatpush1.msra.mxu0 0.0
    %3256 = vmatprep.subr.mxu0 0.0
    %3257 = vmatpush1.msra.mxu0 0.0
    %3258 = vmatprep.subr.mxu0 0.0
    %3259 = vmatpush1.msra.mxu0 0.0
    %3260 = vmatprep.subr.mxu0 0.0
    %3261 = vmatpush1.msra.mxu0 0.0
    %3262 = vmatprep.subr.mxu0 0.0
    %3263 = vmatpush1.msra.mxu0 0.0
    %3264 = vmatprep.subr.mxu0 0.0
    %3265 = vmatpush1.msra.mxu0 0.0
    %3266 = vmatprep.subr.mxu0 0.0
    %3267 = vmatpush1.msra.mxu0 0.0
    %3268 = vmatprep.subr.mxu0 0.0
    %3269 = vmatpush1.msra.mxu0 0.0
    %3270 = vmatprep.subr.mxu0 0.0
    %3271 = vmatpush1.msra.mxu0 0.0
    %3272 = vmatprep.subr.mxu0 0.0
    %3273 = vmatpush1.msra.mxu0 0.0
    %3274 = vmatprep.subr.mxu0 0.0
    %3275 = vmatpush1.msra.mxu0 0.0
    %3276 = vmatprep.subr.mxu0 0.0
    %3277 = vmatpush1.msra.mxu0 0.0
    %3278 = vmatprep.subr.mxu0 0.0
    %3279 = vmatpush1.msra.mxu0 0.0
    %3280 = vmatprep.subr.mxu0 0.0
    %3281 = vmatpush1.msra.mxu0 0.0
    %3282 = vmatprep.subr.mxu0 0.0
    %3283 = vmatpush1.msra.mxu0 0.0
    %3284 = vmatprep.subr.mxu0 0.0
    %3285 = vmatpush1.msra.mxu0 0.0
    %3286 = vmatprep.subr.mxu0 0.0
    %3287 = vmatpush1.msra.mxu0 0.0
    %3288 = vmatprep.subr.mxu0 0.0
    %3289 = vmatpush1.msra.mxu0 0.0
    %3290 = vmatprep.subr.mxu0 0.0
    %3291 = vmatpush1.msra.mxu0 0.0
    %3292 = vmatprep.mubr.f32.mxu0 0.0
    %3293 = vmatmul.mubr.f32.gmra.mrb[0].mxu0 %v3226
    %v3294 = vpop.f32.mrb[0].mxu0
    %v3295 = vadd.f32 0.0, %v3294
    %v3296 = vpop.f32.mrb[0].mxu0
    %3297 = vdwg.mxu0
    %v3298 = vadd.f32 %v3222, %v3295
    %v3299 = vxor.u32 %v3298, 2147483648
    %v3300 = vmul.f32 %v3299, 1.442695
    %v3301 = vpow.pop %v3300
    %v3302 = vadd.f32 %v3301, 1.0
    %v3303 = vrcp.pop %v3302
    %v3304 = vmul.f32 1.0, %v3303
    %v3305 = vtanh.pop %v3298
    %v3306 = vmul.f32 %v3304, %v3221
    %3308 = vrot.lane.b32.xlu0 %v3305, 32
    %v3309 = vpop.permute.xlu0 %3308
    %v3311 = vmul.f32 %v3304, %v3309
    %3313 = vrot.lane.b32.xlu0 %v3311, 32
    %v3314 = vpop.permute.xlu0 %3313
    %v3316 = vadd.f32 %v3306, %v3314
    %v3317 = vtanh.pop %v3316
    %3319 = vrot.lane.b32.xlu0 %v3317, 32
    %v3320 = vpop.permute.xlu0 %3319
    %v3322 = vmul.f32 %v3304, %v3320
    %v3323 = vsel %vm177, %v3322, 0.0
    %3325 = vrot.lane.b32.xlu0 %v3323, 64
    %v3326 = vpop.permute.xlu0 %3325
    %3328 = vst.msk [vmem:[#allocation3 + $0x38] sm:$0xff] %vm394, %v3326
    %v3329 = vld [vmem:[#allocation3] sm:$0xff]
    %v3330 = vld [vmem:[#allocation3 + $0x8] sm:$0xff]
    %v3331 = vld [vmem:[#allocation3 + $0x10] sm:$0xff]
    %v3332 = vld [vmem:[#allocation3 + $0x18] sm:$0xff]
    %v3333 = vld [vmem:[#allocation3 + $0x20] sm:$0xff]
    %v3334 = vld [vmem:[#allocation3 + $0x28] sm:$0xff]
    %v3335 = vld [vmem:[#allocation3 + $0x30] sm:$0xff]
    %v3336 = vld [vmem:[#allocation3 + $0x38] sm:$0xff]
    %v3337 = vld [vmem:[#allocation13] sm:$0xff]
    %v3338 = vld [vmem:[#allocation13 + $0x8] sm:$0xff]
    %v3339 = vld [vmem:[#allocation13 + $0x10] sm:$0xff]
    %v3340 = vld [vmem:[#allocation13 + $0x18] sm:$0xff]
    %v3341 = vld [vmem:[%s14] sm:$0x1]
    %v3343 = vlaneseq
    %v3344 = vshrl.u32 %v3343, 7
    %v3345 = vsub.s32 0, %v3344
    %v3346 = vrot.slane %v3341, %v3345
    %v3349 = vsel %vm394, %v3329, 0
    %v3352 = vsel %vm394, %v3330, 0
    %v3355 = vsel %vm394, %v3331, 0
    %v3358 = vsel %vm394, %v3332, 0
    %v3361 = vsel %vm394, %v3333, 0
    %v3364 = vsel %vm394, %v3334, 0
    %v3367 = vsel %vm394, %v3335, 0
    %v3370 = vsel %vm394, %v3336, 0
    %3372 = vmatprep.subr.mxu0 0.0
    %3373 = vmatpush1.msra.mxu0 %v3337
    %3374 = vmatprep.subr.mxu0 0.0
    %3375 = vmatpush1.msra.mxu0 %v3338
    %3376 = vmatprep.subr.mxu0 0.0
    %3377 = vmatpush1.msra.mxu0 %v3339
    %3378 = vmatprep.subr.mxu0 0.0
    %3379 = vmatpush1.msra.mxu0 %v3340
    %3380 = vmatprep.subr.mxu0 0.0
    %3381 = vmatpush1.msra.mxu0 0.0
    %3382 = vmatprep.subr.mxu0 0.0
    %3383 = vmatpush1.msra.mxu0 0.0
    %3384 = vmatprep.subr.mxu0 0.0
    %3385 = vmatpush1.msra.mxu0 0.0
    %3386 = vmatprep.subr.mxu0 0.0
    %3387 = vmatpush1.msra.mxu0 0.0
    %3388 = vmatprep.subr.mxu0 0.0
    %3389 = vmatpush1.msra.mxu0 0.0
    %3390 = vmatprep.subr.mxu0 0.0
    %3391 = vmatpush1.msra.mxu0 0.0
    %3392 = vmatprep.subr.mxu0 0.0
    %3393 = vmatpush1.msra.mxu0 0.0
    %3394 = vmatprep.subr.mxu0 0.0
    %3395 = vmatpush1.msra.mxu0 0.0
    %3396 = vmatprep.subr.mxu0 0.0
    %3397 = vmatpush1.msra.mxu0 0.0
    %3398 = vmatprep.subr.mxu0 0.0
    %3399 = vmatpush1.msra.mxu0 0.0
    %3400 = vmatprep.subr.mxu0 0.0
    %3401 = vmatpush1.msra.mxu0 0.0
    %3402 = vmatprep.subr.mxu0 0.0
    %3403 = vmatpush1.msra.mxu0 0.0
    %3404 = vmatprep.subr.mxu0 0.0
    %3405 = vmatpush1.msra.mxu0 0.0
    %3406 = vmatprep.subr.mxu0 0.0
    %3407 = vmatpush1.msra.mxu0 0.0
    %3408 = vmatprep.subr.mxu0 0.0
    %3409 = vmatpush1.msra.mxu0 0.0
    %3410 = vmatprep.subr.mxu0 0.0
    %3411 = vmatpush1.msra.mxu0 0.0
    %3412 = vmatprep.subr.mxu0 0.0
    %3413 = vmatpush1.msra.mxu0 0.0
    %3414 = vmatprep.subr.mxu0 0.0
    %3415 = vmatpush1.msra.mxu0 0.0
    %3416 = vmatprep.subr.mxu0 0.0
    %3417 = vmatpush1.msra.mxu0 0.0
    %3418 = vmatprep.subr.mxu0 0.0
    %3419 = vmatpush1.msra.mxu0 0.0
    %3420 = vmatprep.subr.mxu0 0.0
    %3421 = vmatpush1.msra.mxu0 0.0
    %3422 = vmatprep.subr.mxu0 0.0
    %3423 = vmatpush1.msra.mxu0 0.0
    %3424 = vmatprep.subr.mxu0 0.0
    %3425 = vmatpush1.msra.mxu0 0.0
    %3426 = vmatprep.subr.mxu0 0.0
    %3427 = vmatpush1.msra.mxu0 0.0
    %3428 = vmatprep.subr.mxu0 0.0
    %3429 = vmatpush1.msra.mxu0 0.0
    %3430 = vmatprep.subr.mxu0 0.0
    %3431 = vmatpush1.msra.mxu0 0.0
    %3432 = vmatprep.subr.mxu0 0.0
    %3433 = vmatpush1.msra.mxu0 0.0
    %3434 = vmatprep.subr.mxu0 0.0
    %3435 = vmatpush1.msra.mxu0 0.0
    %3436 = vmatprep.mubr.f32.mxu0 0.0
    %3437 = vmatmul.mubr.f32.gmra.mrb[0].mxu0 %v3349
    %v3438 = vpop.f32.mrb[0].mxu0
    %v3439 = vadd.f32 %v3346, %v3438
    %v3440 = vpop.f32.mrb[0].mxu0
    %3441 = vmatprep.mubr.f32.mxu0 0.0
    %3442 = vmatmul.mubr.f32.gmra.mrb[0].mxu0 %v3352
    %v3443 = vpop.f32.mrb[0].mxu0
    %v3444 = vadd.f32 %v3346, %v3443
    %v3445 = vpop.f32.mrb[0].mxu0
    %3446 = vmatprep.mubr.f32.mxu0 0.0
    %3447 = vmatmul.mubr.f32.gmra.mrb[0].mxu0 %v3355
    %v3448 = vpop.f32.mrb[0].mxu0
    %v3449 = vadd.f32 %v3346, %v3448
    %v3450 = vpop.f32.mrb[0].mxu0
    %3451 = vmatprep.mubr.f32.mxu0 0.0
    %3452 = vmatmul.mubr.f32.gmra.mrb[0].mxu0 %v3358
    %v3453 = vpop.f32.mrb[0].mxu0
    %v3454 = vadd.f32 %v3346, %v3453
    %v3455 = vpop.f32.mrb[0].mxu0
    %3456 = vmatprep.mubr.f32.mxu0 0.0
    %3457 = vmatmul.mubr.f32.gmra.mrb[0].mxu0 %v3361
    %v3458 = vpop.f32.mrb[0].mxu0
    %v3459 = vadd.f32 %v3346, %v3458
    %v3460 = vpop.f32.mrb[0].mxu0
    %3461 = vmatprep.mubr.f32.mxu0 0.0
    %3462 = vmatmul.mubr.f32.gmra.mrb[0].mxu0 %v3364
    %v3463 = vpop.f32.mrb[0].mxu0
    %v3464 = vadd.f32 %v3346, %v3463
    %v3465 = vpop.f32.mrb[0].mxu0
    %3466 = vmatprep.mubr.f32.mxu0 0.0
    %3467 = vmatmul.mubr.f32.gmra.mrb[0].mxu0 %v3367
    %v3468 = vpop.f32.mrb[0].mxu0
    %v3469 = vadd.f32 %v3346, %v3468
    %v3470 = vpop.f32.mrb[0].mxu0
    %3471 = vmatprep.mubr.f32.mxu0 0.0
    %3472 = vmatmul.mubr.f32.gmra.mrb[0].mxu0 %v3370
    %v3473 = vpop.f32.mrb[0].mxu0
    %v3474 = vadd.f32 %v3346, %v3473
    %v3475 = vpop.f32.mrb[0].mxu0
    %3476 = vdwg.mxu0
    %3477 = vst [vmem:[#allocation2] sm:$0xff] %v3439
    %3478 = vst [vmem:[#allocation2 + $0x8] sm:$0xff] %v3444
    %3479 = vst [vmem:[#allocation2 + $0x10] sm:$0xff] %v3449
    %3480 = vst [vmem:[#allocation2 + $0x18] sm:$0xff] %v3454
    %3481 = vst [vmem:[#allocation2 + $0x20] sm:$0xff] %v3459
    %3482 = vst [vmem:[#allocation2 + $0x28] sm:$0xff] %v3464
    %3483 = vst [vmem:[#allocation2 + $0x30] sm:$0xff] %v3469
    %3484 = vst [vmem:[#allocation2 + $0x38] sm:$0xff] %v3474
    %v3485 = vld [vmem:[#allocation15] sm:$0xff]
    %v3486 = vld [vmem:[#allocation15 + $0x8] sm:$0xff]
    %v3487 = vld [vmem:[#allocation15 + $0x10] sm:$0xff]
    %v3488 = vld [vmem:[#allocation15 + $0x18] sm:$0xff]
    %v3489 = vld [vmem:[#allocation2] sm:$0xff]
    %3490 = vmatprep.subr.mxu0 0.0
    %3491 = vmatpush1.msra.mxu0 %v3485
    %3492 = vmatprep.subr.mxu0 0.0
    %3493 = vmatpush1.msra.mxu0 %v3486
    %3494 = vmatprep.subr.mxu0 0.0
    %3495 = vmatpush1.msra.mxu0 %v3487
    %3496 = vmatprep.subr.mxu0 0.0
    %3497 = vmatpush1.msra.mxu0 %v3488
    %3498 = vmatprep.subr.mxu0 0.0
    %3499 = vmatpush1.msra.mxu0 0.0
    %3500 = vmatprep.subr.mxu0 0.0
    %3501 = vmatpush1.msra.mxu0 0.0
    %3502 = vmatprep.subr.mxu0 0.0
    %3503 = vmatpush1.msra.mxu0 0.0
    %3504 = vmatprep.subr.mxu0 0.0
    %3505 = vmatpush1.msra.mxu0 0.0
    %3506 = vmatprep.subr.mxu0 0.0
    %3507 = vmatpush1.msra.mxu0 0.0
    %3508 = vmatprep.subr.mxu0 0.0
    %3509 = vmatpush1.msra.mxu0 0.0
    %3510 = vmatprep.subr.mxu0 0.0
    %3511 = vmatpush1.msra.mxu0 0.0
    %3512 = vmatprep.subr.mxu0 0.0
    %3513 = vmatpush1.msra.mxu0 0.0
    %3514 = vmatprep.subr.mxu0 0.0
    %3515 = vmatpush1.msra.mxu0 0.0
    %3516 = vmatprep.subr.mxu0 0.0
    %3517 = vmatpush1.msra.mxu0 0.0
    %3518 = vmatprep.subr.mxu0 0.0
    %3519 = vmatpush1.msra.mxu0 0.0
    %3520 = vmatprep.subr.mxu0 0.0
    %3521 = vmatpush1.msra.mxu0 0.0
    %3522 = vmatprep.subr.mxu0 0.0
    %3523 = vmatpush1.msra.mxu0 0.0
    %3524 = vmatprep.subr.mxu0 0.0
    %3525 = vmatpush1.msra.mxu0 0.0
    %3526 = vmatprep.subr.mxu0 0.0
    %3527 = vmatpush1.msra.mxu0 0.0
    %3528 = vmatprep.subr.mxu0 0.0
    %3529 = vmatpush1.msra.mxu0 0.0
    %3530 = vmatprep.subr.mxu0 0.0
    %3531 = vmatpush1.msra.mxu0 0.0
    %3532 = vmatprep.subr.mxu0 0.0
    %3533 = vmatpush1.msra.mxu0 0.0
    %3534 = vmatprep.subr.mxu0 0.0
    %3535 = vmatpush1.msra.mxu0 0.0
    %3536 = vmatprep.subr.mxu0 0.0
    %3537 = vmatpush1.msra.mxu0 0.0
    %3538 = vmatprep.subr.mxu0 0.0
    %3539 = vmatpush1.msra.mxu0 0.0
    %3540 = vmatprep.subr.mxu0 0.0
    %3541 = vmatpush1.msra.mxu0 0.0
    %3542 = vmatprep.subr.mxu0 0.0
    %3543 = vmatpush1.msra.mxu0 0.0
    %3544 = vmatprep.subr.mxu0 0.0
    %3545 = vmatpush1.msra.mxu0 0.0
    %3546 = vmatprep.subr.mxu0 0.0
    %3547 = vmatpush1.msra.mxu0 0.0
    %3548 = vmatprep.subr.mxu0 0.0
    %3549 = vmatpush1.msra.mxu0 0.0
    %3550 = vmatprep.subr.mxu0 0.0
    %3551 = vmatpush1.msra.mxu0 0.0
    %3552 = vmatprep.subr.mxu0 0.0
    %3553 = vmatpush1.msra.mxu0 0.0
    %3554 = vmatprep.mubr.f32.mxu0 0.0
    %3555 = vmatmul.mubr.f32.gmra.mrb[0].mxu0 %v396
    %v3556 = vpop.f32.mrb[0].mxu0
    %v3557 = vadd.f32 0.0, %v3556
    %v3558 = vpop.f32.mrb[0].mxu0
    %3559 = vdwg.mxu0
    %v3560 = vadd.f32 %v3489, %v3557
    %v3561 = vxor.u32 %v3560, 2147483648
    %v3562 = vmul.f32 %v3561, 1.442695
    %v3563 = vpow.pop %v3562
    %v3564 = vadd.f32 %v3563, 1.0
    %v3565 = vrcp.pop %v3564
    %v3566 = vmul.f32 1.0, %v3565
    %v3567 = vtanh.pop %v3560
    %v3568 = vmul.f32 %v3566, 0.0
    %3570 = vrot.lane.b32.xlu0 %v3567, 32
    %v3571 = vpop.permute.xlu0 %3570
    %v3573 = vmul.f32 %v3566, %v3571
    %3575 = vrot.lane.b32.xlu0 %v3573, 32
    %v3576 = vpop.permute.xlu0 %3575
    %v3578 = vadd.f32 %v3568, %v3576
    %v3579 = vtanh.pop %v3578
    %3581 = vrot.lane.b32.xlu0 %v3579, 32
    %v3582 = vpop.permute.xlu0 %3581
    %v3584 = vmul.f32 %v3566, %v3582
    %v3585 = vsel %vm170, %v3584, 0.0
    %3587 = vrot.lane.b32.xlu0 %v3585, 64
    %v3588 = vpop.permute.xlu0 %3587
    %3590 = vst.msk [vmem:[#allocation3] sm:$0xff] %vm394, %v3588
    %v3591 = vsel %vm170, %v3578, 0.0
    %v3592 = vld [vmem:[#allocation2 + $0x8] sm:$0xff]
    %v3593 = vsel %vm394, %v3588, 0
    %3595 = vmatprep.subr.mxu0 0.0
    %3596 = vmatpush1.msra.mxu0 %v3485
    %3597 = vmatprep.subr.mxu0 0.0
    %3598 = vmatpush1.msra.mxu0 %v3486
    %3599 = vmatprep.subr.mxu0 0.0
    %3600 = vmatpush1.msra.mxu0 %v3487
    %3601 = vmatprep.subr.mxu0 0.0
    %3602 = vmatpush1.msra.mxu0 %v3488
    %3603 = vmatprep.subr.mxu0 0.0
    %3604 = vmatpush1.msra.mxu0 0.0
    %3605 = vmatprep.subr.mxu0 0.0
    %3606 = vmatpush1.msra.mxu0 0.0
    %3607 = vmatprep.subr.mxu0 0.0
    %3608 = vmatpush1.msra.mxu0 0.0
    %3609 = vmatprep.subr.mxu0 0.0
    %3610 = vmatpush1.msra.mxu0 0.0
    %3611 = vmatprep.subr.mxu0 0.0
    %3612 = vmatpush1.msra.mxu0 0.0
    %3613 = vmatprep.subr.mxu0 0.0
    %3614 = vmatpush1.msra.mxu0 0.0
    %3615 = vmatprep.subr.mxu0 0.0
    %3616 = vmatpush1.msra.mxu0 0.0
    %3617 = vmatprep.subr.mxu0 0.0
    %3618 = vmatpush1.msra.mxu0 0.0
    %3619 = vmatprep.subr.mxu0 0.0
    %3620 = vmatpush1.msra.mxu0 0.0
    %3621 = vmatprep.subr.mxu0 0.0
    %3622 = vmatpush1.msra.mxu0 0.0
    %3623 = vmatprep.subr.mxu0 0.0
    %3624 = vmatpush1.msra.mxu0 0.0
    %3625 = vmatprep.subr.mxu0 0.0
    %3626 = vmatpush1.msra.mxu0 0.0
    %3627 = vmatprep.subr.mxu0 0.0
    %3628 = vmatpush1.msra.mxu0 0.0
    %3629 = vmatprep.subr.mxu0 0.0
    %3630 = vmatpush1.msra.mxu0 0.0
    %3631 = vmatprep.subr.mxu0 0.0
    %3632 = vmatpush1.msra.mxu0 0.0
    %3633 = vmatprep.subr.mxu0 0.0
    %3634 = vmatpush1.msra.mxu0 0.0
    %3635 = vmatprep.subr.mxu0 0.0
    %3636 = vmatpush1.msra.mxu0 0.0
    %3637 = vmatprep.subr.mxu0 0.0
    %3638 = vmatpush1.msra.mxu0 0.0
    %3639 = vmatprep.subr.mxu0 0.0
    %3640 = vmatpush1.msra.mxu0 0.0
    %3641 = vmatprep.subr.mxu0 0.0
    %3642 = vmatpush1.msra.mxu0 0.0
    %3643 = vmatprep.subr.mxu0 0.0
    %3644 = vmatpush1.msra.mxu0 0.0
    %3645 = vmatprep.subr.mxu0 0.0
    %3646 = vmatpush1.msra.mxu0 0.0
    %3647 = vmatprep.subr.mxu0 0.0
    %3648 = vmatpush1.msra.mxu0 0.0
    %3649 = vmatprep.subr.mxu0 0.0
    %3650 = vmatpush1.msra.mxu0 0.0
    %3651 = vmatprep.subr.mxu0 0.0
    %3652 = vmatpush1.msra.mxu0 0.0
    %3653 = vmatprep.subr.mxu0 0.0
    %3654 = vmatpush1.msra.mxu0 0.0
    %3655 = vmatprep.subr.mxu0 0.0
    %3656 = vmatpush1.msra.mxu0 0.0
    %3657 = vmatprep.subr.mxu0 0.0
    %3658 = vmatpush1.msra.mxu0 0.0
    %3659 = vmatprep.mubr.f32.mxu0 0.0
    %3660 = vmatmul.mubr.f32.gmra.mrb[0].mxu0 %v3593
    %v3661 = vpop.f32.mrb[0].mxu0
    %v3662 = vadd.f32 0.0, %v3661
    %v3663 = vpop.f32.mrb[0].mxu0
    %3664 = vdwg.mxu0
    %v3665 = vadd.f32 %v3592, %v3662
    %v3666 = vxor.u32 %v3665, 2147483648
    %v3667 = vmul.f32 %v3666, 1.442695
    %v3668 = vpow.pop %v3667
    %v3669 = vadd.f32 %v3668, 1.0
    %v3670 = vrcp.pop %v3669
    %v3671 = vmul.f32 1.0, %v3670
    %v3672 = vtanh.pop %v3665
    %v3673 = vmul.f32 %v3671, %v3591
    %3675 = vrot.lane.b32.xlu0 %v3672, 32
    %v3676 = vpop.permute.xlu0 %3675
    %v3678 = vmul.f32 %v3671, %v3676
    %3680 = vrot.lane.b32.xlu0 %v3678, 32
    %v3681 = vpop.permute.xlu0 %3680
    %v3683 = vadd.f32 %v3673, %v3681
    %v3684 = vtanh.pop %v3683
    %3686 = vrot.lane.b32.xlu0 %v3684, 32
    %v3687 = vpop.permute.xlu0 %3686
    %v3689 = vmul.f32 %v3671, %v3687
    %v3690 = vsel %vm171, %v3689, 0.0
    %3692 = vrot.lane.b32.xlu0 %v3690, 64
    %v3693 = vpop.permute.xlu0 %3692
    %3695 = vst.msk [vmem:[#allocation3 + $0x8] sm:$0xff] %vm394, %v3693
    %v3696 = vsel %vm171, %v3689, %v3585
    %v3697 = vsel %vm171, %v3683, %v3591
    %v3698 = vld [vmem:[#allocation2 + $0x10] sm:$0xff]
    %3700 = vrot.lane.b32.xlu0 %v3696, 64
    %v3701 = vpop.permute.xlu0 %3700
    %v3702 = vsel %vm394, %v3701, 0
    %3704 = vmatprep.subr.mxu0 0.0
    %3705 = vmatpush1.msra.mxu0 %v3485
    %3706 = vmatprep.subr.mxu0 0.0
    %3707 = vmatpush1.msra.mxu0 %v3486
    %3708 = vmatprep.subr.mxu0 0.0
    %3709 = vmatpush1.msra.mxu0 %v3487
    %3710 = vmatprep.subr.mxu0 0.0
    %3711 = vmatpush1.msra.mxu0 %v3488
    %3712 = vmatprep.subr.mxu0 0.0
    %3713 = vmatpush1.msra.mxu0 0.0
    %3714 = vmatprep.subr.mxu0 0.0
    %3715 = vmatpush1.msra.mxu0 0.0
    %3716 = vmatprep.subr.mxu0 0.0
    %3717 = vmatpush1.msra.mxu0 0.0
    %3718 = vmatprep.subr.mxu0 0.0
    %3719 = vmatpush1.msra.mxu0 0.0
    %3720 = vmatprep.subr.mxu0 0.0
    %3721 = vmatpush1.msra.mxu0 0.0
    %3722 = vmatprep.subr.mxu0 0.0
    %3723 = vmatpush1.msra.mxu0 0.0
    %3724 = vmatprep.subr.mxu0 0.0
    %3725 = vmatpush1.msra.mxu0 0.0
    %3726 = vmatprep.subr.mxu0 0.0
    %3727 = vmatpush1.msra.mxu0 0.0
    %3728 = vmatprep.subr.mxu0 0.0
    %3729 = vmatpush1.msra.mxu0 0.0
    %3730 = vmatprep.subr.mxu0 0.0
    %3731 = vmatpush1.msra.mxu0 0.0
    %3732 = vmatprep.subr.mxu0 0.0
    %3733 = vmatpush1.msra.mxu0 0.0
    %3734 = vmatprep.subr.mxu0 0.0
    %3735 = vmatpush1.msra.mxu0 0.0
    %3736 = vmatprep.subr.mxu0 0.0
    %3737 = vmatpush1.msra.mxu0 0.0
    %3738 = vmatprep.subr.mxu0 0.0
    %3739 = vmatpush1.msra.mxu0 0.0
    %3740 = vmatprep.subr.mxu0 0.0
    %3741 = vmatpush1.msra.mxu0 0.0
    %3742 = vmatprep.subr.mxu0 0.0
    %3743 = vmatpush1.msra.mxu0 0.0
    %3744 = vmatprep.subr.mxu0 0.0
    %3745 = vmatpush1.msra.mxu0 0.0
    %3746 = vmatprep.subr.mxu0 0.0
    %3747 = vmatpush1.msra.mxu0 0.0
    %3748 = vmatprep.subr.mxu0 0.0
    %3749 = vmatpush1.msra.mxu0 0.0
    %3750 = vmatprep.subr.mxu0 0.0
    %3751 = vmatpush1.msra.mxu0 0.0
    %3752 = vmatprep.subr.mxu0 0.0
    %3753 = vmatpush1.msra.mxu0 0.0
    %3754 = vmatprep.subr.mxu0 0.0
    %3755 = vmatpush1.msra.mxu0 0.0
    %3756 = vmatprep.subr.mxu0 0.0
    %3757 = vmatpush1.msra.mxu0 0.0
    %3758 = vmatprep.subr.mxu0 0.0
    %3759 = vmatpush1.msra.mxu0 0.0
    %3760 = vmatprep.subr.mxu0 0.0
    %3761 = vmatpush1.msra.mxu0 0.0
    %3762 = vmatprep.subr.mxu0 0.0
    %3763 = vmatpush1.msra.mxu0 0.0
    %3764 = vmatprep.subr.mxu0 0.0
    %3765 = vmatpush1.msra.mxu0 0.0
    %3766 = vmatprep.subr.mxu0 0.0
    %3767 = vmatpush1.msra.mxu0 0.0
    %3768 = vmatprep.mubr.f32.mxu0 0.0
    %3769 = vmatmul.mubr.f32.gmra.mrb[0].mxu0 %v3702
    %v3770 = vpop.f32.mrb[0].mxu0
    %v3771 = vadd.f32 0.0, %v3770
    %v3772 = vpop.f32.mrb[0].mxu0
    %3773 = vdwg.mxu0
    %v3774 = vadd.f32 %v3698, %v3771
    %v3775 = vxor.u32 %v3774, 2147483648
    %v3776 = vmul.f32 %v3775, 1.442695
    %v3777 = vpow.pop %v3776
    %v3778 = vadd.f32 %v3777, 1.0
    %v3779 = vrcp.pop %v3778
    %v3780 = vmul.f32 1.0, %v3779
    %v3781 = vtanh.pop %v3774
    %v3782 = vmul.f32 %v3780, %v3697
    %3784 = vrot.lane.b32.xlu0 %v3781, 32
    %v3785 = vpop.permute.xlu0 %3784
    %v3787 = vmul.f32 %v3780, %v3785
    %3789 = vrot.lane.b32.xlu0 %v3787, 32
    %v3790 = vpop.permute.xlu0 %3789
    %v3792 = vadd.f32 %v3782, %v3790
    %v3793 = vtanh.pop %v3792
    %3795 = vrot.lane.b32.xlu0 %v3793, 32
    %v3796 = vpop.permute.xlu0 %3795
    %v3798 = vmul.f32 %v3780, %v3796
    %v3799 = vsel %vm172, %v3798, 0.0
    %3801 = vrot.lane.b32.xlu0 %v3799, 64
    %v3802 = vpop.permute.xlu0 %3801
    %3804 = vst.msk [vmem:[#allocation3 + $0x10] sm:$0xff] %vm394, %v3802
    %v3805 = vsel %vm172, %v3798, %v3696
    %v3806 = vsel %vm172, %v3792, %v3697
    %v3807 = vld [vmem:[#allocation2 + $0x18] sm:$0xff]
    %3809 = vrot.lane.b32.xlu0 %v3805, 64
    %v3810 = vpop.permute.xlu0 %3809
    %v3811 = vsel %vm394, %v3810, 0
    %3813 = vmatprep.subr.mxu0 0.0
    %3814 = vmatpush1.msra.mxu0 %v3485
    %3815 = vmatprep.subr.mxu0 0.0
    %3816 = vmatpush1.msra.mxu0 %v3486
    %3817 = vmatprep.subr.mxu0 0.0
    %3818 = vmatpush1.msra.mxu0 %v3487
    %3819 = vmatprep.subr.mxu0 0.0
    %3820 = vmatpush1.msra.mxu0 %v3488
    %3821 = vmatprep.subr.mxu0 0.0
    %3822 = vmatpush1.msra.mxu0 0.0
    %3823 = vmatprep.subr.mxu0 0.0
    %3824 = vmatpush1.msra.mxu0 0.0
    %3825 = vmatprep.subr.mxu0 0.0
    %3826 = vmatpush1.msra.mxu0 0.0
    %3827 = vmatprep.subr.mxu0 0.0
    %3828 = vmatpush1.msra.mxu0 0.0
    %3829 = vmatprep.subr.mxu0 0.0
    %3830 = vmatpush1.msra.mxu0 0.0
    %3831 = vmatprep.subr.mxu0 0.0
    %3832 = vmatpush1.msra.mxu0 0.0
    %3833 = vmatprep.subr.mxu0 0.0
    %3834 = vmatpush1.msra.mxu0 0.0
    %3835 = vmatprep.subr.mxu0 0.0
    %3836 = vmatpush1.msra.mxu0 0.0
    %3837 = vmatprep.subr.mxu0 0.0
    %3838 = vmatpush1.msra.mxu0 0.0
    %3839 = vmatprep.subr.mxu0 0.0
    %3840 = vmatpush1.msra.mxu0 0.0
    %3841 = vmatprep.subr.mxu0 0.0
    %3842 = vmatpush1.msra.mxu0 0.0
    %3843 = vmatprep.subr.mxu0 0.0
    %3844 = vmatpush1.msra.mxu0 0.0
    %3845 = vmatprep.subr.mxu0 0.0
    %3846 = vmatpush1.msra.mxu0 0.0
    %3847 = vmatprep.subr.mxu0 0.0
    %3848 = vmatpush1.msra.mxu0 0.0
    %3849 = vmatprep.subr.mxu0 0.0
    %3850 = vmatpush1.msra.mxu0 0.0
    %3851 = vmatprep.subr.mxu0 0.0
    %3852 = vmatpush1.msra.mxu0 0.0
    %3853 = vmatprep.subr.mxu0 0.0
    %3854 = vmatpush1.msra.mxu0 0.0
    %3855 = vmatprep.subr.mxu0 0.0
    %3856 = vmatpush1.msra.mxu0 0.0
    %3857 = vmatprep.subr.mxu0 0.0
    %3858 = vmatpush1.msra.mxu0 0.0
    %3859 = vmatprep.subr.mxu0 0.0
    %3860 = vmatpush1.msra.mxu0 0.0
    %3861 = vmatprep.subr.mxu0 0.0
    %3862 = vmatpush1.msra.mxu0 0.0
    %3863 = vmatprep.subr.mxu0 0.0
    %3864 = vmatpush1.msra.mxu0 0.0
    %3865 = vmatprep.subr.mxu0 0.0
    %3866 = vmatpush1.msra.mxu0 0.0
    %3867 = vmatprep.subr.mxu0 0.0
    %3868 = vmatpush1.msra.mxu0 0.0
    %3869 = vmatprep.subr.mxu0 0.0
    %3870 = vmatpush1.msra.mxu0 0.0
    %3871 = vmatprep.subr.mxu0 0.0
    %3872 = vmatpush1.msra.mxu0 0.0
    %3873 = vmatprep.subr.mxu0 0.0
    %3874 = vmatpush1.msra.mxu0 0.0
    %3875 = vmatprep.subr.mxu0 0.0
    %3876 = vmatpush1.msra.mxu0 0.0
    %3877 = vmatprep.mubr.f32.mxu0 0.0
    %3878 = vmatmul.mubr.f32.gmra.mrb[0].mxu0 %v3811
    %v3879 = vpop.f32.mrb[0].mxu0
    %v3880 = vadd.f32 0.0, %v3879
    %v3881 = vpop.f32.mrb[0].mxu0
    %3882 = vdwg.mxu0
    %v3883 = vadd.f32 %v3807, %v3880
    %v3884 = vxor.u32 %v3883, 2147483648
    %v3885 = vmul.f32 %v3884, 1.442695
    %v3886 = vpow.pop %v3885
    %v3887 = vadd.f32 %v3886, 1.0
    %v3888 = vrcp.pop %v3887
    %v3889 = vmul.f32 1.0, %v3888
    %v3890 = vtanh.pop %v3883
    %v3891 = vmul.f32 %v3889, %v3806
    %3893 = vrot.lane.b32.xlu0 %v3890, 32
    %v3894 = vpop.permute.xlu0 %3893
    %v3896 = vmul.f32 %v3889, %v3894
    %3898 = vrot.lane.b32.xlu0 %v3896, 32
    %v3899 = vpop.permute.xlu0 %3898
    %v3901 = vadd.f32 %v3891, %v3899
    %v3902 = vtanh.pop %v3901
    %3904 = vrot.lane.b32.xlu0 %v3902, 32
    %v3905 = vpop.permute.xlu0 %3904
    %v3907 = vmul.f32 %v3889, %v3905
    %v3908 = vsel %vm173, %v3907, 0.0
    %3910 = vrot.lane.b32.xlu0 %v3908, 64
    %v3911 = vpop.permute.xlu0 %3910
    %3913 = vst.msk [vmem:[#allocation3 + $0x18] sm:$0xff] %vm394, %v3911
    %v3914 = vsel %vm173, %v3907, %v3805
    %v3915 = vsel %vm173, %v3901, %v3806
    %v3916 = vld [vmem:[#allocation2 + $0x20] sm:$0xff]
    %3918 = vrot.lane.b32.xlu0 %v3914, 64
    %v3919 = vpop.permute.xlu0 %3918
    %v3920 = vsel %vm394, %v3919, 0
    %3922 = vmatprep.subr.mxu0 0.0
    %3923 = vmatpush1.msra.mxu0 %v3485
    %3924 = vmatprep.subr.mxu0 0.0
    %3925 = vmatpush1.msra.mxu0 %v3486
    %3926 = vmatprep.subr.mxu0 0.0
    %3927 = vmatpush1.msra.mxu0 %v3487
    %3928 = vmatprep.subr.mxu0 0.0
    %3929 = vmatpush1.msra.mxu0 %v3488
    %3930 = vmatprep.subr.mxu0 0.0
    %3931 = vmatpush1.msra.mxu0 0.0
    %3932 = vmatprep.subr.mxu0 0.0
    %3933 = vmatpush1.msra.mxu0 0.0
    %3934 = vmatprep.subr.mxu0 0.0
    %3935 = vmatpush1.msra.mxu0 0.0
    %3936 = vmatprep.subr.mxu0 0.0
    %3937 = vmatpush1.msra.mxu0 0.0
    %3938 = vmatprep.subr.mxu0 0.0
    %3939 = vmatpush1.msra.mxu0 0.0
    %3940 = vmatprep.subr.mxu0 0.0
    %3941 = vmatpush1.msra.mxu0 0.0
    %3942 = vmatprep.subr.mxu0 0.0
    %3943 = vmatpush1.msra.mxu0 0.0
    %3944 = vmatprep.subr.mxu0 0.0
    %3945 = vmatpush1.msra.mxu0 0.0
    %3946 = vmatprep.subr.mxu0 0.0
    %3947 = vmatpush1.msra.mxu0 0.0
    %3948 = vmatprep.subr.mxu0 0.0
    %3949 = vmatpush1.msra.mxu0 0.0
    %3950 = vmatprep.subr.mxu0 0.0
    %3951 = vmatpush1.msra.mxu0 0.0
    %3952 = vmatprep.subr.mxu0 0.0
    %3953 = vmatpush1.msra.mxu0 0.0
    %3954 = vmatprep.subr.mxu0 0.0
    %3955 = vmatpush1.msra.mxu0 0.0
    %3956 = vmatprep.subr.mxu0 0.0
    %3957 = vmatpush1.msra.mxu0 0.0
    %3958 = vmatprep.subr.mxu0 0.0
    %3959 = vmatpush1.msra.mxu0 0.0
    %3960 = vmatprep.subr.mxu0 0.0
    %3961 = vmatpush1.msra.mxu0 0.0
    %3962 = vmatprep.subr.mxu0 0.0
    %3963 = vmatpush1.msra.mxu0 0.0
    %3964 = vmatprep.subr.mxu0 0.0
    %3965 = vmatpush1.msra.mxu0 0.0
    %3966 = vmatprep.subr.mxu0 0.0
    %3967 = vmatpush1.msra.mxu0 0.0
    %3968 = vmatprep.subr.mxu0 0.0
    %3969 = vmatpush1.msra.mxu0 0.0
    %3970 = vmatprep.subr.mxu0 0.0
    %3971 = vmatpush1.msra.mxu0 0.0
    %3972 = vmatprep.subr.mxu0 0.0
    %3973 = vmatpush1.msra.mxu0 0.0
    %3974 = vmatprep.subr.mxu0 0.0
    %3975 = vmatpush1.msra.mxu0 0.0
    %3976 = vmatprep.subr.mxu0 0.0
    %3977 = vmatpush1.msra.mxu0 0.0
    %3978 = vmatprep.subr.mxu0 0.0
    %3979 = vmatpush1.msra.mxu0 0.0
    %3980 = vmatprep.subr.mxu0 0.0
    %3981 = vmatpush1.msra.mxu0 0.0
    %3982 = vmatprep.subr.mxu0 0.0
    %3983 = vmatpush1.msra.mxu0 0.0
    %3984 = vmatprep.subr.mxu0 0.0
    %3985 = vmatpush1.msra.mxu0 0.0
    %3986 = vmatprep.mubr.f32.mxu0 0.0
    %3987 = vmatmul.mubr.f32.gmra.mrb[0].mxu0 %v3920
    %v3988 = vpop.f32.mrb[0].mxu0
    %v3989 = vadd.f32 0.0, %v3988
    %v3990 = vpop.f32.mrb[0].mxu0
    %3991 = vdwg.mxu0
    %v3992 = vadd.f32 %v3916, %v3989
    %v3993 = vxor.u32 %v3992, 2147483648
    %v3994 = vmul.f32 %v3993, 1.442695
    %v3995 = vpow.pop %v3994
    %v3996 = vadd.f32 %v3995, 1.0
    %v3997 = vrcp.pop %v3996
    %v3998 = vmul.f32 1.0, %v3997
    %v3999 = vtanh.pop %v3992
    %v4000 = vmul.f32 %v3998, %v3915
    %4002 = vrot.lane.b32.xlu0 %v3999, 32
    %v4003 = vpop.permute.xlu0 %4002
    %v4005 = vmul.f32 %v3998, %v4003
    %4007 = vrot.lane.b32.xlu0 %v4005, 32
    %v4008 = vpop.permute.xlu0 %4007
    %v4010 = vadd.f32 %v4000, %v4008
    %v4011 = vtanh.pop %v4010
    %4013 = vrot.lane.b32.xlu0 %v4011, 32
    %v4014 = vpop.permute.xlu0 %4013
    %v4016 = vmul.f32 %v3998, %v4014
    %v4017 = vsel %vm174, %v4016, 0.0
    %4019 = vrot.lane.b32.xlu0 %v4017, 64
    %v4020 = vpop.permute.xlu0 %4019
    %4022 = vst.msk [vmem:[#allocation3 + $0x20] sm:$0xff] %vm394, %v4020
    %v4023 = vsel %vm174, %v4016, %v3914
    %v4024 = vsel %vm174, %v4010, %v3915
    %v4025 = vld [vmem:[#allocation2 + $0x28] sm:$0xff]
    %4027 = vrot.lane.b32.xlu0 %v4023, 64
    %v4028 = vpop.permute.xlu0 %4027
    %v4029 = vsel %vm394, %v4028, 0
    %4031 = vmatprep.subr.mxu0 0.0
    %4032 = vmatpush1.msra.mxu0 %v3485
    %4033 = vmatprep.subr.mxu0 0.0
    %4034 = vmatpush1.msra.mxu0 %v3486
    %4035 = vmatprep.subr.mxu0 0.0
    %4036 = vmatpush1.msra.mxu0 %v3487
    %4037 = vmatprep.subr.mxu0 0.0
    %4038 = vmatpush1.msra.mxu0 %v3488
    %4039 = vmatprep.subr.mxu0 0.0
    %4040 = vmatpush1.msra.mxu0 0.0
    %4041 = vmatprep.subr.mxu0 0.0
    %4042 = vmatpush1.msra.mxu0 0.0
    %4043 = vmatprep.subr.mxu0 0.0
    %4044 = vmatpush1.msra.mxu0 0.0
    %4045 = vmatprep.subr.mxu0 0.0
    %4046 = vmatpush1.msra.mxu0 0.0
    %4047 = vmatprep.subr.mxu0 0.0
    %4048 = vmatpush1.msra.mxu0 0.0
    %4049 = vmatprep.subr.mxu0 0.0
    %4050 = vmatpush1.msra.mxu0 0.0
    %4051 = vmatprep.subr.mxu0 0.0
    %4052 = vmatpush1.msra.mxu0 0.0
    %4053 = vmatprep.subr.mxu0 0.0
    %4054 = vmatpush1.msra.mxu0 0.0
    %4055 = vmatprep.subr.mxu0 0.0
    %4056 = vmatpush1.msra.mxu0 0.0
    %4057 = vmatprep.subr.mxu0 0.0
    %4058 = vmatpush1.msra.mxu0 0.0
    %4059 = vmatprep.subr.mxu0 0.0
    %4060 = vmatpush1.msra.mxu0 0.0
    %4061 = vmatprep.subr.mxu0 0.0
    %4062 = vmatpush1.msra.mxu0 0.0
    %4063 = vmatprep.subr.mxu0 0.0
    %4064 = vmatpush1.msra.mxu0 0.0
    %4065 = vmatprep.subr.mxu0 0.0
    %4066 = vmatpush1.msra.mxu0 0.0
    %4067 = vmatprep.subr.mxu0 0.0
    %4068 = vmatpush1.msra.mxu0 0.0
    %4069 = vmatprep.subr.mxu0 0.0
    %4070 = vmatpush1.msra.mxu0 0.0
    %4071 = vmatprep.subr.mxu0 0.0
    %4072 = vmatpush1.msra.mxu0 0.0
    %4073 = vmatprep.subr.mxu0 0.0
    %4074 = vmatpush1.msra.mxu0 0.0
    %4075 = vmatprep.subr.mxu0 0.0
    %4076 = vmatpush1.msra.mxu0 0.0
    %4077 = vmatprep.subr.mxu0 0.0
    %4078 = vmatpush1.msra.mxu0 0.0
    %4079 = vmatprep.subr.mxu0 0.0
    %4080 = vmatpush1.msra.mxu0 0.0
    %4081 = vmatprep.subr.mxu0 0.0
    %4082 = vmatpush1.msra.mxu0 0.0
    %4083 = vmatprep.subr.mxu0 0.0
    %4084 = vmatpush1.msra.mxu0 0.0
    %4085 = vmatprep.subr.mxu0 0.0
    %4086 = vmatpush1.msra.mxu0 0.0
    %4087 = vmatprep.subr.mxu0 0.0
    %4088 = vmatpush1.msra.mxu0 0.0
    %4089 = vmatprep.subr.mxu0 0.0
    %4090 = vmatpush1.msra.mxu0 0.0
    %4091 = vmatprep.subr.mxu0 0.0
    %4092 = vmatpush1.msra.mxu0 0.0
    %4093 = vmatprep.subr.mxu0 0.0
    %4094 = vmatpush1.msra.mxu0 0.0
    %4095 = vmatprep.mubr.f32.mxu0 0.0
    %4096 = vmatmul.mubr.f32.gmra.mrb[0].mxu0 %v4029
    %v4097 = vpop.f32.mrb[0].mxu0
    %v4098 = vadd.f32 0.0, %v4097
    %v4099 = vpop.f32.mrb[0].mxu0
    %4100 = vdwg.mxu0
    %v4101 = vadd.f32 %v4025, %v4098
    %v4102 = vxor.u32 %v4101, 2147483648
    %v4103 = vmul.f32 %v4102, 1.442695
    %v4104 = vpow.pop %v4103
    %v4105 = vadd.f32 %v4104, 1.0
    %v4106 = vrcp.pop %v4105
    %v4107 = vmul.f32 1.0, %v4106
    %v4108 = vtanh.pop %v4101
    %v4109 = vmul.f32 %v4107, %v4024
    %4111 = vrot.lane.b32.xlu0 %v4108, 32
    %v4112 = vpop.permute.xlu0 %4111
    %v4114 = vmul.f32 %v4107, %v4112
    %4116 = vrot.lane.b32.xlu0 %v4114, 32
    %v4117 = vpop.permute.xlu0 %4116
    %v4119 = vadd.f32 %v4109, %v4117
    %v4120 = vtanh.pop %v4119
    %4122 = vrot.lane.b32.xlu0 %v4120, 32
    %v4123 = vpop.permute.xlu0 %4122
    %v4125 = vmul.f32 %v4107, %v4123
    %v4126 = vsel %vm175, %v4125, 0.0
    %4128 = vrot.lane.b32.xlu0 %v4126, 64
    %v4129 = vpop.permute.xlu0 %4128
    %4131 = vst.msk [vmem:[#allocation3 + $0x28] sm:$0xff] %vm394, %v4129
    %v4132 = vsel %vm175, %v4125, %v4023
    %v4133 = vsel %vm175, %v4119, %v4024
    %v4134 = vld [vmem:[#allocation2 + $0x30] sm:$0xff]
    %4136 = vrot.lane.b32.xlu0 %v4132, 64
    %v4137 = vpop.permute.xlu0 %4136
    %v4138 = vsel %vm394, %v4137, 0
    %4140 = vmatprep.subr.mxu0 0.0
    %4141 = vmatpush1.msra.mxu0 %v3485
    %4142 = vmatprep.subr.mxu0 0.0
    %4143 = vmatpush1.msra.mxu0 %v3486
    %4144 = vmatprep.subr.mxu0 0.0
    %4145 = vmatpush1.msra.mxu0 %v3487
    %4146 = vmatprep.subr.mxu0 0.0
    %4147 = vmatpush1.msra.mxu0 %v3488
    %4148 = vmatprep.subr.mxu0 0.0
    %4149 = vmatpush1.msra.mxu0 0.0
    %4150 = vmatprep.subr.mxu0 0.0
    %4151 = vmatpush1.msra.mxu0 0.0
    %4152 = vmatprep.subr.mxu0 0.0
    %4153 = vmatpush1.msra.mxu0 0.0
    %4154 = vmatprep.subr.mxu0 0.0
    %4155 = vmatpush1.msra.mxu0 0.0
    %4156 = vmatprep.subr.mxu0 0.0
    %4157 = vmatpush1.msra.mxu0 0.0
    %4158 = vmatprep.subr.mxu0 0.0
    %4159 = vmatpush1.msra.mxu0 0.0
    %4160 = vmatprep.subr.mxu0 0.0
    %4161 = vmatpush1.msra.mxu0 0.0
    %4162 = vmatprep.subr.mxu0 0.0
    %4163 = vmatpush1.msra.mxu0 0.0
    %4164 = vmatprep.subr.mxu0 0.0
    %4165 = vmatpush1.msra.mxu0 0.0
    %4166 = vmatprep.subr.mxu0 0.0
    %4167 = vmatpush1.msra.mxu0 0.0
    %4168 = vmatprep.subr.mxu0 0.0
    %4169 = vmatpush1.msra.mxu0 0.0
    %4170 = vmatprep.subr.mxu0 0.0
    %4171 = vmatpush1.msra.mxu0 0.0
    %4172 = vmatprep.subr.mxu0 0.0
    %4173 = vmatpush1.msra.mxu0 0.0
    %4174 = vmatprep.subr.mxu0 0.0
    %4175 = vmatpush1.msra.mxu0 0.0
    %4176 = vmatprep.subr.mxu0 0.0
    %4177 = vmatpush1.msra.mxu0 0.0
    %4178 = vmatprep.subr.mxu0 0.0
    %4179 = vmatpush1.msra.mxu0 0.0
    %4180 = vmatprep.subr.mxu0 0.0
    %4181 = vmatpush1.msra.mxu0 0.0
    %4182 = vmatprep.subr.mxu0 0.0
    %4183 = vmatpush1.msra.mxu0 0.0
    %4184 = vmatprep.subr.mxu0 0.0
    %4185 = vmatpush1.msra.mxu0 0.0
    %4186 = vmatprep.subr.mxu0 0.0
    %4187 = vmatpush1.msra.mxu0 0.0
    %4188 = vmatprep.subr.mxu0 0.0
    %4189 = vmatpush1.msra.mxu0 0.0
    %4190 = vmatprep.subr.mxu0 0.0
    %4191 = vmatpush1.msra.mxu0 0.0
    %4192 = vmatprep.subr.mxu0 0.0
    %4193 = vmatpush1.msra.mxu0 0.0
    %4194 = vmatprep.subr.mxu0 0.0
    %4195 = vmatpush1.msra.mxu0 0.0
    %4196 = vmatprep.subr.mxu0 0.0
    %4197 = vmatpush1.msra.mxu0 0.0
    %4198 = vmatprep.subr.mxu0 0.0
    %4199 = vmatpush1.msra.mxu0 0.0
    %4200 = vmatprep.subr.mxu0 0.0
    %4201 = vmatpush1.msra.mxu0 0.0
    %4202 = vmatprep.subr.mxu0 0.0
    %4203 = vmatpush1.msra.mxu0 0.0
    %4204 = vmatprep.mubr.f32.mxu0 0.0
    %4205 = vmatmul.mubr.f32.gmra.mrb[0].mxu0 %v4138
    %v4206 = vpop.f32.mrb[0].mxu0
    %v4207 = vadd.f32 0.0, %v4206
    %v4208 = vpop.f32.mrb[0].mxu0
    %4209 = vdwg.mxu0
    %v4210 = vadd.f32 %v4134, %v4207
    %v4211 = vxor.u32 %v4210, 2147483648
    %v4212 = vmul.f32 %v4211, 1.442695
    %v4213 = vpow.pop %v4212
    %v4214 = vadd.f32 %v4213, 1.0
    %v4215 = vrcp.pop %v4214
    %v4216 = vmul.f32 1.0, %v4215
    %v4217 = vtanh.pop %v4210
    %v4218 = vmul.f32 %v4216, %v4133
    %4220 = vrot.lane.b32.xlu0 %v4217, 32
    %v4221 = vpop.permute.xlu0 %4220
    %v4223 = vmul.f32 %v4216, %v4221
    %4225 = vrot.lane.b32.xlu0 %v4223, 32
    %v4226 = vpop.permute.xlu0 %4225
    %v4228 = vadd.f32 %v4218, %v4226
    %v4229 = vtanh.pop %v4228
    %4231 = vrot.lane.b32.xlu0 %v4229, 32
    %v4232 = vpop.permute.xlu0 %4231
    %v4234 = vmul.f32 %v4216, %v4232
    %v4235 = vsel %vm176, %v4234, 0.0
    %4237 = vrot.lane.b32.xlu0 %v4235, 64
    %v4238 = vpop.permute.xlu0 %4237
    %4240 = vst.msk [vmem:[#allocation3 + $0x30] sm:$0xff] %vm394, %v4238
    %v4241 = vsel %vm176, %v4234, %v4132
    %v4242 = vsel %vm176, %v4228, %v4133
    %v4243 = vld [vmem:[#allocation2 + $0x38] sm:$0xff]
    %4245 = vrot.lane.b32.xlu0 %v4241, 64
    %v4246 = vpop.permute.xlu0 %4245
    %v4247 = vsel %vm394, %v4246, 0
    %4249 = vmatprep.subr.mxu0 0.0
    %4250 = vmatpush1.msra.mxu0 %v3485
    %4251 = vmatprep.subr.mxu0 0.0
    %4252 = vmatpush1.msra.mxu0 %v3486
    %4253 = vmatprep.subr.mxu0 0.0
    %4254 = vmatpush1.msra.mxu0 %v3487
    %4255 = vmatprep.subr.mxu0 0.0
    %4256 = vmatpush1.msra.mxu0 %v3488
    %4257 = vmatprep.subr.mxu0 0.0
    %4258 = vmatpush1.msra.mxu0 0.0
    %4259 = vmatprep.subr.mxu0 0.0
    %4260 = vmatpush1.msra.mxu0 0.0
    %4261 = vmatprep.subr.mxu0 0.0
    %4262 = vmatpush1.msra.mxu0 0.0
    %4263 = vmatprep.subr.mxu0 0.0
    %4264 = vmatpush1.msra.mxu0 0.0
    %4265 = vmatprep.subr.mxu0 0.0
    %4266 = vmatpush1.msra.mxu0 0.0
    %4267 = vmatprep.subr.mxu0 0.0
    %4268 = vmatpush1.msra.mxu0 0.0
    %4269 = vmatprep.subr.mxu0 0.0
    %4270 = vmatpush1.msra.mxu0 0.0
    %4271 = vmatprep.subr.mxu0 0.0
    %4272 = vmatpush1.msra.mxu0 0.0
    %4273 = vmatprep.subr.mxu0 0.0
    %4274 = vmatpush1.msra.mxu0 0.0
    %4275 = vmatprep.subr.mxu0 0.0
    %4276 = vmatpush1.msra.mxu0 0.0
    %4277 = vmatprep.subr.mxu0 0.0
    %4278 = vmatpush1.msra.mxu0 0.0
    %4279 = vmatprep.subr.mxu0 0.0
    %4280 = vmatpush1.msra.mxu0 0.0
    %4281 = vmatprep.subr.mxu0 0.0
    %4282 = vmatpush1.msra.mxu0 0.0
    %4283 = vmatprep.subr.mxu0 0.0
    %4284 = vmatpush1.msra.mxu0 0.0
    %4285 = vmatprep.subr.mxu0 0.0
    %4286 = vmatpush1.msra.mxu0 0.0
    %4287 = vmatprep.subr.mxu0 0.0
    %4288 = vmatpush1.msra.mxu0 0.0
    %4289 = vmatprep.subr.mxu0 0.0
    %4290 = vmatpush1.msra.mxu0 0.0
    %4291 = vmatprep.subr.mxu0 0.0
    %4292 = vmatpush1.msra.mxu0 0.0
    %4293 = vmatprep.subr.mxu0 0.0
    %4294 = vmatpush1.msra.mxu0 0.0
    %4295 = vmatprep.subr.mxu0 0.0
    %4296 = vmatpush1.msra.mxu0 0.0
    %4297 = vmatprep.subr.mxu0 0.0
    %4298 = vmatpush1.msra.mxu0 0.0
    %4299 = vmatprep.subr.mxu0 0.0
    %4300 = vmatpush1.msra.mxu0 0.0
    %4301 = vmatprep.subr.mxu0 0.0
    %4302 = vmatpush1.msra.mxu0 0.0
    %4303 = vmatprep.subr.mxu0 0.0
    %4304 = vmatpush1.msra.mxu0 0.0
    %4305 = vmatprep.subr.mxu0 0.0
    %4306 = vmatpush1.msra.mxu0 0.0
    %4307 = vmatprep.subr.mxu0 0.0
    %4308 = vmatpush1.msra.mxu0 0.0
    %4309 = vmatprep.subr.mxu0 0.0
    %4310 = vmatpush1.msra.mxu0 0.0
    %4311 = vmatprep.subr.mxu0 0.0
    %4312 = vmatpush1.msra.mxu0 0.0
    %4313 = vmatprep.mubr.f32.mxu0 0.0
    %4314 = vmatmul.mubr.f32.gmra.mrb[0].mxu0 %v4247
    %v4315 = vpop.f32.mrb[0].mxu0
    %v4316 = vadd.f32 0.0, %v4315
    %v4317 = vpop.f32.mrb[0].mxu0
    %4318 = vdwg.mxu0
    %v4319 = vadd.f32 %v4243, %v4316
    %v4320 = vxor.u32 %v4319, 2147483648
    %v4321 = vmul.f32 %v4320, 1.442695
    %v4322 = vpow.pop %v4321
    %v4323 = vadd.f32 %v4322, 1.0
    %v4324 = vrcp.pop %v4323
    %v4325 = vmul.f32 1.0, %v4324
    %v4326 = vtanh.pop %v4319
    %v4327 = vmul.f32 %v4325, %v4242
    %4329 = vrot.lane.b32.xlu0 %v4326, 32
    %v4330 = vpop.permute.xlu0 %4329
    %v4332 = vmul.f32 %v4325, %v4330
    %4334 = vrot.lane.b32.xlu0 %v4332, 32
    %v4335 = vpop.permute.xlu0 %4334
    %v4337 = vadd.f32 %v4327, %v4335
    %v4338 = vtanh.pop %v4337
    %4340 = vrot.lane.b32.xlu0 %v4338, 32
    %v4341 = vpop.permute.xlu0 %4340
    %v4343 = vmul.f32 %v4325, %v4341
    %v4344 = vsel %vm177, %v4343, 0.0
    %4346 = vrot.lane.b32.xlu0 %v4344, 64
    %v4347 = vpop.permute.xlu0 %4346
    %4349 = vst.msk [vmem:[#allocation3 + $0x38] sm:$0xff] %vm394, %v4347
    %v4350 = vld [vmem:[#allocation3] sm:$0xff]
    %v4351 = vld [vmem:[#allocation3 + $0x8] sm:$0xff]
    %v4352 = vld [vmem:[#allocation3 + $0x10] sm:$0xff]
    %v4353 = vld [vmem:[#allocation3 + $0x18] sm:$0xff]
    %v4354 = vld [vmem:[#allocation3 + $0x20] sm:$0xff]
    %v4355 = vld [vmem:[#allocation3 + $0x28] sm:$0xff]
    %v4356 = vld [vmem:[#allocation3 + $0x30] sm:$0xff]
    %v4357 = vld [vmem:[#allocation3 + $0x38] sm:$0xff]
    %v4358 = vld [vmem:[#allocation16] sm:$0xff]
    %v4359 = vld [vmem:[#allocation16 + $0x8] sm:$0xff]
    %v4360 = vld [vmem:[#allocation16 + $0x10] sm:$0xff]
    %v4361 = vld [vmem:[#allocation16 + $0x18] sm:$0xff]
    %v4362 = vld [vmem:[%s16] sm:$0x1]
    %v4364 = vlaneseq
    %v4365 = vshrl.u32 %v4364, 7
    %v4366 = vsub.s32 0, %v4365
    %v4367 = vrot.slane %v4362, %v4366
    %v4370 = vsel %vm394, %v4350, 0
    %v4373 = vsel %vm394, %v4351, 0
    %v4376 = vsel %vm394, %v4352, 0
    %v4379 = vsel %vm394, %v4353, 0
    %v4382 = vsel %vm394, %v4354, 0
    %v4385 = vsel %vm394, %v4355, 0
    %v4388 = vsel %vm394, %v4356, 0
    %v4391 = vsel %vm394, %v4357, 0
    %4393 = vmatprep.subr.mxu0 0.0
    %4394 = vmatpush1.msra.mxu0 %v4358
    %4395 = vmatprep.subr.mxu0 0.0
    %4396 = vmatpush1.msra.mxu0 %v4359
    %4397 = vmatprep.subr.mxu0 0.0
    %4398 = vmatpush1.msra.mxu0 %v4360
    %4399 = vmatprep.subr.mxu0 0.0
    %4400 = vmatpush1.msra.mxu0 %v4361
    %4401 = vmatprep.subr.mxu0 0.0
    %4402 = vmatpush1.msra.mxu0 0.0
    %4403 = vmatprep.subr.mxu0 0.0
    %4404 = vmatpush1.msra.mxu0 0.0
    %4405 = vmatprep.subr.mxu0 0.0
    %4406 = vmatpush1.msra.mxu0 0.0
    %4407 = vmatprep.subr.mxu0 0.0
    %4408 = vmatpush1.msra.mxu0 0.0
    %4409 = vmatprep.subr.mxu0 0.0
    %4410 = vmatpush1.msra.mxu0 0.0
    %4411 = vmatprep.subr.mxu0 0.0
    %4412 = vmatpush1.msra.mxu0 0.0
    %4413 = vmatprep.subr.mxu0 0.0
    %4414 = vmatpush1.msra.mxu0 0.0
    %4415 = vmatprep.subr.mxu0 0.0
    %4416 = vmatpush1.msra.mxu0 0.0
    %4417 = vmatprep.subr.mxu0 0.0
    %4418 = vmatpush1.msra.mxu0 0.0
    %4419 = vmatprep.subr.mxu0 0.0
    %4420 = vmatpush1.msra.mxu0 0.0
    %4421 = vmatprep.subr.mxu0 0.0
    %4422 = vmatpush1.msra.mxu0 0.0
    %4423 = vmatprep.subr.mxu0 0.0
    %4424 = vmatpush1.msra.mxu0 0.0
    %4425 = vmatprep.subr.mxu0 0.0
    %4426 = vmatpush1.msra.mxu0 0.0
    %4427 = vmatprep.subr.mxu0 0.0
    %4428 = vmatpush1.msra.mxu0 0.0
    %4429 = vmatprep.subr.mxu0 0.0
    %4430 = vmatpush1.msra.mxu0 0.0
    %4431 = vmatprep.subr.mxu0 0.0
    %4432 = vmatpush1.msra.mxu0 0.0
    %4433 = vmatprep.subr.mxu0 0.0
    %4434 = vmatpush1.msra.mxu0 0.0
    %4435 = vmatprep.subr.mxu0 0.0
    %4436 = vmatpush1.msra.mxu0 0.0
    %4437 = vmatprep.subr.mxu0 0.0
    %4438 = vmatpush1.msra.mxu0 0.0
    %4439 = vmatprep.subr.mxu0 0.0
    %4440 = vmatpush1.msra.mxu0 0.0
    %4441 = vmatprep.subr.mxu0 0.0
    %4442 = vmatpush1.msra.mxu0 0.0
    %4443 = vmatprep.subr.mxu0 0.0
    %4444 = vmatpush1.msra.mxu0 0.0
    %4445 = vmatprep.subr.mxu0 0.0
    %4446 = vmatpush1.msra.mxu0 0.0
    %4447 = vmatprep.subr.mxu0 0.0
    %4448 = vmatpush1.msra.mxu0 0.0
    %4449 = vmatprep.subr.mxu0 0.0
    %4450 = vmatpush1.msra.mxu0 0.0
    %4451 = vmatprep.subr.mxu0 0.0
    %4452 = vmatpush1.msra.mxu0 0.0
    %4453 = vmatprep.subr.mxu0 0.0
    %4454 = vmatpush1.msra.mxu0 0.0
    %4455 = vmatprep.subr.mxu0 0.0
    %4456 = vmatpush1.msra.mxu0 0.0
    %4457 = vmatprep.mubr.f32.mxu0 0.0
    %4458 = vmatmul.mubr.f32.gmra.mrb[0].mxu0 %v4370
    %v4459 = vpop.f32.mrb[0].mxu0
    %v4460 = vadd.f32 %v4367, %v4459
    %v4461 = vpop.f32.mrb[0].mxu0
    %4462 = vmatprep.mubr.f32.mxu0 0.0
    %4463 = vmatmul.mubr.f32.gmra.mrb[0].mxu0 %v4373
    %v4464 = vpop.f32.mrb[0].mxu0
    %v4465 = vadd.f32 %v4367, %v4464
    %v4466 = vpop.f32.mrb[0].mxu0
    %4467 = vmatprep.mubr.f32.mxu0 0.0
    %4468 = vmatmul.mubr.f32.gmra.mrb[0].mxu0 %v4376
    %v4469 = vpop.f32.mrb[0].mxu0
    %v4470 = vadd.f32 %v4367, %v4469
    %v4471 = vpop.f32.mrb[0].mxu0
    %4472 = vmatprep.mubr.f32.mxu0 0.0
    %4473 = vmatmul.mubr.f32.gmra.mrb[0].mxu0 %v4379
    %v4474 = vpop.f32.mrb[0].mxu0
    %v4475 = vadd.f32 %v4367, %v4474
    %v4476 = vpop.f32.mrb[0].mxu0
    %4477 = vmatprep.mubr.f32.mxu0 0.0
    %4478 = vmatmul.mubr.f32.gmra.mrb[0].mxu0 %v4382
    %v4479 = vpop.f32.mrb[0].mxu0
    %v4480 = vadd.f32 %v4367, %v4479
    %v4481 = vpop.f32.mrb[0].mxu0
    %4482 = vmatprep.mubr.f32.mxu0 0.0
    %4483 = vmatmul.mubr.f32.gmra.mrb[0].mxu0 %v4385
    %v4484 = vpop.f32.mrb[0].mxu0
    %v4485 = vadd.f32 %v4367, %v4484
    %v4486 = vpop.f32.mrb[0].mxu0
    %4487 = vmatprep.mubr.f32.mxu0 0.0
    %4488 = vmatmul.mubr.f32.gmra.mrb[0].mxu0 %v4388
    %v4489 = vpop.f32.mrb[0].mxu0
    %v4490 = vadd.f32 %v4367, %v4489
    %v4491 = vpop.f32.mrb[0].mxu0
    %4492 = vmatprep.mubr.f32.mxu0 0.0
    %4493 = vmatmul.mubr.f32.gmra.mrb[0].mxu0 %v4391
    %v4494 = vpop.f32.mrb[0].mxu0
    %v4495 = vadd.f32 %v4367, %v4494
    %v4496 = vpop.f32.mrb[0].mxu0
    %4497 = vdwg.mxu0
    %4498 = vst [vmem:[%s17] sm:$0xff] %v4460
    %4499 = vst [vmem:[%s17 + $0x8] sm:$0xff] %v4465
    %4500 = vst [vmem:[%s17 + $0x10] sm:$0xff] %v4470
    %4501 = vst [vmem:[%s17 + $0x18] sm:$0xff] %v4475
    %4502 = vst [vmem:[%s17 + $0x20] sm:$0xff] %v4480
    %4503 = vst [vmem:[%s17 + $0x28] sm:$0xff] %v4485
    %4504 = vst [vmem:[%s17 + $0x30] sm:$0xff] %v4490
    %4505 = vst [vmem:[%s17 + $0x38] sm:$0xff] %v4495
    // Predicated region
    $region102: #{lstm_aae_forward.1} parent=1 // pred_check
      _
    $region103: #{lstm_aae_forward.1} parent=1 // pred_check_branch
      %4507 = sbr.rel (0) target = $region105
    $region104: #{lstm_aae_forward.1} parent=1 // pred_region
      _
    $region105: #{lstm_aae_forward.1} parent=1 // pred_fallthru
      _
    // Predicated region
    $region106: #{lstm_aae_forward.1} parent=1 // pred_check
      _
    $region107: #{lstm_aae_forward.1} parent=1 // pred_check_branch
      %4509 = sbr.rel (0) target = $region109
    $region108: #{lstm_aae_forward.1} parent=1 // pred_region
      %s4511 = ssub.s32 128, 128
      %4512 = vsyncadd [#allocation6], %s4511
      %s4514 = sshll.u32 [#allocation18], 4
      %s4515 = int_to_ptr.vmem [resolvable:$true] %s4514
      %4517 = dma.vmem_to_hbm [thread:$0]  %s4515, 128, %s18, [#allocation6]
    $region109: #{lstm_aae_forward.1} parent=1 // pred_fallthru
      _
    // Predicated region
    $region110: #{lstm_aae_forward.1} parent=1 // pred_check
      _
    $region111: #{lstm_aae_forward.1} parent=1 // pred_check_branch
      %4519 = sbr.rel (0) target = $region113
    $region112: #{lstm_aae_forward.1} parent=1 // pred_region
      _
    $region113: #{lstm_aae_forward.1} parent=1 // pred_fallthru
      _
    // Predicated region
    $region114: #{lstm_aae_forward.1} parent=1 // pred_check
      _
    $region115: #{lstm_aae_forward.1} parent=1 // pred_check_branch
      %4521 = sbr.rel (0) target = $region117
    $region116: #{lstm_aae_forward.1} parent=1 // pred_region
      %4522 = dma.done [#allocation6], 128
    $region117: #{lstm_aae_forward.1} parent=1 // pred_fallthru
      _
    %4523 = vsyncpa [#allocation5], 1
    %4524 = vsyncpa [#allocation8], 1
    %4525 = vsyncpa [#allocation11], 1
    %4526 = vsyncpa [#allocation14], 1
    %4527 = vsyncpa [#allocation17], 1
    %4528 = vsyncpa [#allocation6], 1

</llo_original>
